<compile_context>
chip_gen: v7x
topology: tpu7x:2x2x1
jax: 0.10.0
libtpu: 0.0.40
codegen_flags: <defaults>
</compile_context>

<pallas_src>
import math
from functools import partial

import jax
import jax.numpy as jnp
from jax import lax
from jax.experimental import pallas as pl
from jax.experimental.pallas import tpu as pltpu

N = 256        # number of GP input points
DIM = 1        # "dim" in DeepGP (1D experiment)
DEPTH = 3      # DeepGP depth
Q = 4          # spectral-mixture components
JITTER = 1e-3  # diagonal jitter for numerical PSD-ness (diag(K)=sum(w)=O(1))
TWO_PI = 2.0 * math.pi
TWO_PI_SQ = 2.0 * math.pi * math.pi


def _default_row_blocks():
    """2 row-halves on v7x (2 TensorCores/chip); single block on v5e/v6e."""
    try:
        kind = jax.devices()[0].device_kind.lower()
    except Exception:
        return 1
    return 2 if ("v7" in kind or "7x" in kind) else 1


NUM_ROW_BLOCKS = _default_row_blocks()


# ------------------------------------------------------------------
# Pallas kernel: spectral-mixture covariance, one (bm, N) row-block per step.
#
#   K[i, j] = sum_q w_q * exp(a_q*(x_i-x_j)^2) * cos(b_q*(x_i-x_j))
#           = sum_q exp(a_q*tau^2) * (c_q[i]*c_q[j] + s_q[i]*s_q[j])
#   a_q = -2*pi^2*var_q,  c_q = sqrt(w_q)*cos(2*pi*mu_q*x),
#                         s_q = sqrt(w_q)*sin(2*pi*mu_q*x);  + JITTER*I.
#
#   a_ref   : (Q,) f32 in SMEM (scalar prefetch)
#   col_ref : (bm, 1+2Q)  columns = [x, c_1..c_Q, s_1..s_Q] for this row-block
#   row_ref : (1+2Q, N)   same data, lane-dense row orientation (all points)
#   k_ref   : (bm, N)     output block
# ------------------------------------------------------------------
def sm_covar_kernel(a_ref, col_ref, row_ref, k_ref):
    col = col_ref[...]                       # (bm, 1+2Q)
    row = row_ref[...]                       # (1+2Q, N)
    x_col = col[:, 0:1]                      # (bm, 1)
    x_row = row[0:1, :]                      # (1, N)
    tau = x_col - x_row                      # (bm, N)
    tau2 = tau * tau

    def term(q):
        # cos(b_q*(x_i - x_j)) expanded: c_i*c_j + s_i*s_j (weights folded in)
        cos_q = (col[:, 1 + q:2 + q] * row[1 + q:2 + q, :]
                 + col[:, 1 + Q + q:2 + Q + q] * row[1 + Q + q:2 + Q + q, :])
        return jnp.exp(a_ref[q] * tau2) * cos_q

    acc = term(0)
    for q in range(1, Q):                    # static unroll over mixtures
        acc = acc + term(q)

    bm, n = k_ref.shape
    r0 = pl.program_id(0) * bm               # global row offset of this block
    rows = lax.broadcasted_iota(jnp.int32, (bm, n), 0) + r0
    cols = lax.broadcasted_iota(jnp.int32, (bm, n), 1)
    k_ref[...] = acc + jnp.where(rows == cols, JITTER, 0.0).astype(jnp.float32)


def sm_covariance(x, w, mu, var, num_row_blocks=None):
    """x: (N, 1) -> K: (N, N) spectral-mixture covariance + jitter*I."""
    n = x.shape[0]
    nb = NUM_ROW_BLOCKS if num_row_blocks is None else num_row_blocks
    if n % (8 * nb) != 0:
        nb = 1
    bm = n // nb

    x_row = x.reshape(1, n)                               # (1, N)
    a = (-TWO_PI_SQ) * var                                # (Q,) hoisted scalars
    ang = (TWO_PI * mu)[:, None] * x_row                  # (Q, N)
    sw = jnp.sqrt(w)[:, None]                             # fold weights into c/s
    c = sw * jnp.cos(ang)                                 # only 2*Q*N transcendentals
    s = sw * jnp.sin(ang)
    row_slab = jnp.concatenate([x_row, c, s], axis=0)     # (1+2Q, N), lane-dense
    col_slab = row_slab.T                                 # (N, 1+2Q), tiny XLA op

    return pl.pallas_call(
        sm_covar_kernel,
        out_shape=jax.ShapeDtypeStruct((n, n), jnp.float32),
        grid_spec=pltpu.PrefetchScalarGridSpec(
            num_scalar_prefetch=1,                        # a_q -> SMEM
            grid=(nb,),
            in_specs=[
                pl.BlockSpec((bm, 1 + 2 * Q), lambda i, *_: (i, 0)),
                pl.BlockSpec((1 + 2 * Q, n), lambda i, *_: (0, 0)),
            ],
            out_specs=pl.BlockSpec((bm, n), lambda i, *_: (i, 0)),
        ),
        compiler_params=pltpu.CompilerParams(
            dimension_semantics=("parallel",)),
    )(a, col_slab, row_slab)


# ------------------------------------------------------------------
# DeepGP forward — the whole depth loop (covar -> cholesky -> sample) is one jit.
# ------------------------------------------------------------------
@partial(jax.jit, static_argnames=("depth", "dim"))
def _deep_gp_forward_jit(x, w, mu, var, key, *, depth, dim):
    samples = []
    for d in range(depth):
        # mean_x = ZeroMean()(x) -> zeros; covar_x = SM kernel(x)   (Pallas)
        K = sm_covariance(x, w, mu, var)                  # (N, N) f32
        # TODO(synk): Cholesky factorization (sequential dependency chain) has no
        # clean Pallas equivalent; XLA's cholesky runs inside the same jit.
        L = jnp.linalg.cholesky(K)
        eps = jax.random.normal(jax.random.fold_in(key, d),
                                (x.shape[0], dim), dtype=jnp.float32)
        # mvn.sample([dim]).t() with ZeroMean == L @ eps.  Plain jnp on purpose:
        # the (N,N)x(N,dim) matvec is MXU-starved and sub-microsecond; a
        # pallas_call here was only a fusion barrier + extra dispatch.
        x = L @ eps                                       # (N, dim)
        samples.append(x)
    return x, jnp.stack(samples)                          # (depth, N, dim)


def deep_gp_forward(x, w, mu, var, key, depth=DEPTH, dim=DIM, collect=True):
    assert dim == 1 and x.shape[1] == 1, "1D spectral-mixture experiment"
    x_out, layer_samples = _deep_gp_forward_jit(x, w, mu, var, key,
                                                depth=depth, dim=dim)
    # Collector analogue, built OUTSIDE the jit from stacked per-layer samples.
    collector = ({d: [layer_samples[d]] for d in range(depth)}
                 if collect else None)
    return x_out, collector


if __name__ == "__main__":
    key = jax.random.PRNGKey(0)
    k_x, k_sample = jax.random.split(key)

    # deterministic inputs / kernel hyper-parameters
    x0 = jax.random.uniform(k_x, (N, DIM), minval=-2.0, maxval=2.0,
                            dtype=jnp.float32)
    weights = jnp.array([0.4, 0.3, 0.2, 0.1], dtype=jnp.float32)     # mixture weights
    means = jnp.array([0.25, 0.5, 1.0, 2.0], dtype=jnp.float32)      # mixture means
    variances = jnp.array([0.05, 0.1, 0.2, 0.4], dtype=jnp.float32)  # mixture vars

    # --- correctness check of the Pallas covariance kernel vs pure-JAX ref ---
    tau_ref = x0 - x0.reshape(1, N)
    K_ref = sum(weights[q] * jnp.exp(-TWO_PI_SQ * variances[q] * tau_ref ** 2)
                * jnp.cos(TWO_PI * means[q] * tau_ref) for q in range(Q))
    K_ref = K_ref + JITTER * jnp.eye(N, dtype=jnp.float32)
    K_pl = sm_covariance(x0, weights, means, variances)
    assert float(jnp.max(jnp.abs(K_pl - K_ref))) < 1e-3

    # sampling path check: L @ eps inside jit matches the direct product
    L_ref = jnp.linalg.cholesky(K_ref)
    eps0 = jax.random.normal(jax.random.fold_in(k_sample, 0), (N, DIM),
                             dtype=jnp.float32)
    s_ref = L_ref @ eps0
    assert bool(jnp.all(jnp.isfinite(s_ref)))

    # --- full jitted forward ---
    out, coll = deep_gp_forward(x0, weights, means, variances, k_sample,
                                depth=DEPTH, dim=DIM, collect=True)
    out = jax.block_until_ready(out)
    assert out.shape == (N, DIM)
    assert bool(jnp.all(jnp.isfinite(out)))
    assert len(coll) == DEPTH and coll[DEPTH - 1][0].shape == (N, DIM)
    print("KERNEL_OK")
</pallas_src>

<mosaic_0001>
module attributes {stable_mosaic.version = 11 : i64} {
  func.func @sm_covar_kernel(%arg0: i32, %arg1: memref<4xf32, #tpu.memory_space<smem>>, %arg2: memref<256x9xf32, #tpu.memory_space<vmem>>, %arg3: memref<9x256xf32, #tpu.memory_space<vmem>>, %arg4: memref<256x256xf32, #tpu.memory_space<vmem>>) attributes {dimension_semantics = [#tpu.dimension_semantics<parallel>], iteration_bounds = array<i64: 1>, scalar_prefetch = 1 : i64, scratch_operands = 0 : i64, tpu.core_type = #tpu.core_type<tc>, window_params = [{transform_indices = @transform_0, window_bounds = array<i64: 256, 9>}, {pipeline_mode = #tpu.pipeline_mode<synchronous>, transform_indices = @transform_1, window_bounds = array<i64: 9, 256>}, {transform_indices = @transform_2, window_bounds = array<i64: 256, 256>}]} {
    %c0 = arith.constant 0 : index
    %c0_0 = arith.constant 0 : index
    %0 = vector.load %arg2[%c0, %c0_0] : memref<256x9xf32, #tpu.memory_space<vmem>>, vector<256x9xf32>
    %c0_1 = arith.constant 0 : index
    %c0_2 = arith.constant 0 : index
    %1 = vector.load %arg3[%c0_1, %c0_2] : memref<9x256xf32, #tpu.memory_space<vmem>>, vector<9x256xf32>
    %2 = vector.extract_strided_slice %0 {offsets = [0, 0], sizes = [256, 1], strides = [1, 1]} : vector<256x9xf32> to vector<256x1xf32>
    %3 = vector.extract_strided_slice %1 {offsets = [0, 0], sizes = [1, 256], strides = [1, 1]} : vector<9x256xf32> to vector<1x256xf32>
    %4 = vector.broadcast %2 : vector<256x1xf32> to vector<256x256xf32>
    %5 = vector.broadcast %3 : vector<1x256xf32> to vector<256x256xf32>
    %6 = arith.subf %4, %5 : vector<256x256xf32>
    %7 = arith.mulf %6, %6 : vector<256x256xf32>
    %8 = vector.extract_strided_slice %0 {offsets = [0, 1], sizes = [256, 1], strides = [1, 1]} : vector<256x9xf32> to vector<256x1xf32>
    %9 = vector.extract_strided_slice %1 {offsets = [1, 0], sizes = [1, 256], strides = [1, 1]} : vector<9x256xf32> to vector<1x256xf32>
    %10 = vector.broadcast %8 : vector<256x1xf32> to vector<256x256xf32>
    %11 = vector.broadcast %9 : vector<1x256xf32> to vector<256x256xf32>
    %12 = arith.mulf %10, %11 : vector<256x256xf32>
    %13 = vector.extract_strided_slice %0 {offsets = [0, 5], sizes = [256, 1], strides = [1, 1]} : vector<256x9xf32> to vector<256x1xf32>
    %14 = vector.extract_strided_slice %1 {offsets = [5, 0], sizes = [1, 256], strides = [1, 1]} : vector<9x256xf32> to vector<1x256xf32>
    %15 = vector.broadcast %13 : vector<256x1xf32> to vector<256x256xf32>
    %16 = vector.broadcast %14 : vector<1x256xf32> to vector<256x256xf32>
    %17 = arith.mulf %15, %16 : vector<256x256xf32>
    %18 = arith.addf %12, %17 : vector<256x256xf32>
    %c0_3 = arith.constant 0 : index
    %19 = memref.load %arg1[%c0_3] : memref<4xf32, #tpu.memory_space<smem>>
    %20 = vector.broadcast %19 : f32 to vector<256x256xf32>
    %21 = arith.mulf %20, %7 : vector<256x256xf32>
    %22 = math.exp %21 : vector<256x256xf32>
    %23 = arith.mulf %22, %18 : vector<256x256xf32>
    %24 = vector.extract_strided_slice %0 {offsets = [0, 2], sizes = [256, 1], strides = [1, 1]} : vector<256x9xf32> to vector<256x1xf32>
    %25 = vector.extract_strided_slice %1 {offsets = [2, 0], sizes = [1, 256], strides = [1, 1]} : vector<9x256xf32> to vector<1x256xf32>
    %26 = vector.broadcast %24 : vector<256x1xf32> to vector<256x256xf32>
    %27 = vector.broadcast %25 : vector<1x256xf32> to vector<256x256xf32>
    %28 = arith.mulf %26, %27 : vector<256x256xf32>
    %29 = vector.extract_strided_slice %0 {offsets = [0, 6], sizes = [256, 1], strides = [1, 1]} : vector<256x9xf32> to vector<256x1xf32>
    %30 = vector.extract_strided_slice %1 {offsets = [6, 0], sizes = [1, 256], strides = [1, 1]} : vector<9x256xf32> to vector<1x256xf32>
    %31 = vector.broadcast %29 : vector<256x1xf32> to vector<256x256xf32>
    %32 = vector.broadcast %30 : vector<1x256xf32> to vector<256x256xf32>
    %33 = arith.mulf %31, %32 : vector<256x256xf32>
    %34 = arith.addf %28, %33 : vector<256x256xf32>
    %c1 = arith.constant 1 : index
    %35 = memref.load %arg1[%c1] : memref<4xf32, #tpu.memory_space<smem>>
    %36 = vector.broadcast %35 : f32 to vector<256x256xf32>
    %37 = arith.mulf %36, %7 : vector<256x256xf32>
    %38 = math.exp %37 : vector<256x256xf32>
    %39 = arith.mulf %38, %34 : vector<256x256xf32>
    %40 = arith.addf %23, %39 : vector<256x256xf32>
    %41 = vector.extract_strided_slice %0 {offsets = [0, 3], sizes = [256, 1], strides = [1, 1]} : vector<256x9xf32> to vector<256x1xf32>
    %42 = vector.extract_strided_slice %1 {offsets = [3, 0], sizes = [1, 256], strides = [1, 1]} : vector<9x256xf32> to vector<1x256xf32>
    %43 = vector.broadcast %41 : vector<256x1xf32> to vector<256x256xf32>
    %44 = vector.broadcast %42 : vector<1x256xf32> to vector<256x256xf32>
    %45 = arith.mulf %43, %44 : vector<256x256xf32>
    %46 = vector.extract_strided_slice %0 {offsets = [0, 7], sizes = [256, 1], strides = [1, 1]} : vector<256x9xf32> to vector<256x1xf32>
    %47 = vector.extract_strided_slice %1 {offsets = [7, 0], sizes = [1, 256], strides = [1, 1]} : vector<9x256xf32> to vector<1x256xf32>
    %48 = vector.broadcast %46 : vector<256x1xf32> to vector<256x256xf32>
    %49 = vector.broadcast %47 : vector<1x256xf32> to vector<256x256xf32>
    %50 = arith.mulf %48, %49 : vector<256x256xf32>
    %51 = arith.addf %45, %50 : vector<256x256xf32>
    %c2 = arith.constant 2 : index
    %52 = memref.load %arg1[%c2] : memref<4xf32, #tpu.memory_space<smem>>
    %53 = vector.broadcast %52 : f32 to vector<256x256xf32>
    %54 = arith.mulf %53, %7 : vector<256x256xf32>
    %55 = math.exp %54 : vector<256x256xf32>
    %56 = arith.mulf %55, %51 : vector<256x256xf32>
    %57 = arith.addf %40, %56 : vector<256x256xf32>
    %58 = vector.extract_strided_slice %0 {offsets = [0, 4], sizes = [256, 1], strides = [1, 1]} : vector<256x9xf32> to vector<256x1xf32>
    %59 = vector.extract_strided_slice %1 {offsets = [4, 0], sizes = [1, 256], strides = [1, 1]} : vector<9x256xf32> to vector<1x256xf32>
    %60 = vector.broadcast %58 : vector<256x1xf32> to vector<256x256xf32>
    %61 = vector.broadcast %59 : vector<1x256xf32> to vector<256x256xf32>
    %62 = arith.mulf %60, %61 : vector<256x256xf32>
    %63 = vector.extract_strided_slice %0 {offsets = [0, 8], sizes = [256, 1], strides = [1, 1]} : vector<256x9xf32> to vector<256x1xf32>
    %64 = vector.extract_strided_slice %1 {offsets = [8, 0], sizes = [1, 256], strides = [1, 1]} : vector<9x256xf32> to vector<1x256xf32>
    %65 = vector.broadcast %63 : vector<256x1xf32> to vector<256x256xf32>
    %66 = vector.broadcast %64 : vector<1x256xf32> to vector<256x256xf32>
    %67 = arith.mulf %65, %66 : vector<256x256xf32>
    %68 = arith.addf %62, %67 : vector<256x256xf32>
    %c3 = arith.constant 3 : index
    %69 = memref.load %arg1[%c3] : memref<4xf32, #tpu.memory_space<smem>>
    %70 = vector.broadcast %69 : f32 to vector<256x256xf32>
    %71 = arith.mulf %70, %7 : vector<256x256xf32>
    %72 = math.exp %71 : vector<256x256xf32>
    %73 = arith.mulf %72, %68 : vector<256x256xf32>
    %74 = arith.addf %57, %73 : vector<256x256xf32>
    %c256_i32 = arith.constant 256 : i32
    %75 = arith.muli %arg0, %c256_i32 : i32
    %76 = tpu.iota {dimensions = array<i32: 0>} : vector<256x256xi32>
    %77 = vector.broadcast %75 : i32 to vector<256x256xi32>
    %78 = arith.addi %76, %77 : vector<256x256xi32>
    %79 = tpu.iota {dimensions = array<i32: 1>} : vector<256x256xi32>
    %80 = arith.cmpi eq, %78, %79 : vector<256x256xi32>
    %cst = arith.constant 1.000000e-03 : f32
    %cst_4 = arith.constant 0.000000e+00 : f32
    %81 = vector.broadcast %cst : f32 to vector<256x256xf32>
    %82 = vector.broadcast %cst_4 : f32 to vector<256x256xf32>
    %83 = arith.select %80, %81, %82 : vector<256x256xi1>, vector<256x256xf32>
    %84 = arith.addf %74, %83 : vector<256x256xf32>
    %c0_5 = arith.constant 0 : index
    %c0_6 = arith.constant 0 : index
    %85 = vector.load %arg4[%c0_5, %c0_6] : memref<256x256xf32, #tpu.memory_space<vmem>>, vector<256x256xf32>
    tpu.vector_store %arg4[%c0_5, %c0_6], %84 {strides = array<i32>} : memref<256x256xf32, #tpu.memory_space<vmem>>, vector<256x256xf32>,
    return
  }
  func.func @transform_0(%arg0: i32, %arg1: memref<4xf32, #tpu.memory_space<smem>>) -> (i32, i32) {
    %c0_i32 = arith.constant 0 : i32
    %c0_i32_0 = arith.constant 0 : i32
    return %arg0, %c0_i32 : i32, i32
  }
  func.func @transform_1(%arg0: i32, %arg1: memref<4xf32, #tpu.memory_space<smem>>) -> (i32, i32) {
    %c0_i32 = arith.constant 0 : i32
    %c0_i32_0 = arith.constant 0 : i32
    %c0_i32_1 = arith.constant 0 : i32
    return %c0_i32, %c0_i32_0 : i32, i32
  }
  func.func @transform_2(%arg0: i32, %arg1: memref<4xf32, #tpu.memory_space<smem>>) -> (i32, i32) {
    %c0_i32 = arith.constant 0 : i32
    %c0_i32_0 = arith.constant 0 : i32
    return %arg0, %c0_i32 : i32, i32
  }
}

</mosaic_0001>

<llo_original>
// kernel: tpu_custom_call.1
$region0: #{tpu_custom_call.1}
  #allocation0 [shape = 'u32[]', space=smem, size = 0x4, offset = 0x4, fixed_abs, tag = 'smem constant byte address 0x4 - core index']
  #allocation1 [shape = 'u32[144,128]{1,0:T(1,128)}', space=vmem, size = 0x12000, scoped, tag = 'internal scratch']
  #allocation2 [shape = 's32[1]{0}', space=sflag, size = 0x4, scoped, tag = 'scoped memory for tpu_custom_call.1']
  #allocation3 [shape = 'u8[512]{0}', space=smem, size = 0x200, scoped, tag = 'prefetched SMEM operand 0']
  %s0 = inlined_call_operand.vmem [shape: f32[4], index: 0, kind: input, shape index: {}]
  %s1 = inlined_call_operand.vmem [shape: f32[256,9], index: 1, kind: input, shape index: {}]
  %s2 = inlined_call_operand.vmem [shape: f32[9,256], index: 2, kind: input, shape index: {}]
  %s3 = inlined_call_operand.hbm [shape: f32[256,256], index: 3, kind: output, shape index: {}]
  %s4 = sld [smem:[#allocation0]]
  $region18: #{tpu_custom_call.1} parent=0
    _
  %s6 = ssub.s32 1, %s4
  %s7 = scalar_select 0, %s6, %s4
  %s8 = sshll.u32 %s0, 4
  %s9 = int_to_ptr.vmem [resolvable:$true] %s8
  %11 = dma.vmem_to_smem %s9, 16, [#allocation3], [#allocation2]
  %12 = dma.done [#allocation2], 16
  %13 = sfence
  $region1: #{tpu_custom_call.1} parent=0
    #allocation4 [shape = 'u8[262144]{0}', space=vmem, size = 0x40000, scoped, tag = 'output window, operand 0, single buffered']
    #allocation5 [shape = 's32[1]{0}', space=sflag, size = 0x4, scoped, tag = 'scoped memory for tpu_custom_call.1']
    %14 = vsyncpa [#allocation5], 0
    // Predicated region
    $region2: #{tpu_custom_call.1} parent=1 // pred_check
      _
    $region3: #{tpu_custom_call.1} parent=1 // pred_check_branch
      %16 = sbr.rel (0) target = $region5
    $region4: #{tpu_custom_call.1} parent=1 // pred_region
      _
    $region5: #{tpu_custom_call.1} parent=1 // pred_fallthru
      _
    // Predicated region
    $region6: #{tpu_custom_call.1} parent=1 // pred_check
      _
    $region7: #{tpu_custom_call.1} parent=1 // pred_check_branch
      %18 = sbr.rel (0) target = $region9
    $region8: #{tpu_custom_call.1} parent=1 // pred_region
      _
    $region9: #{tpu_custom_call.1} parent=1 // pred_fallthru
      _
    %v19 = vld [vmem:[%s1] sm:$0xff]
    %v20 = vld [vmem:[%s1 + $0x8] sm:$0xff]
    %v21 = vld [vmem:[%s1 + $0x10] sm:$0xff]
    %v22 = vld [vmem:[%s1 + $0x18] sm:$0xff]
    %v23 = vld [vmem:[%s1 + $0x20] sm:$0xff]
    %v24 = vld [vmem:[%s1 + $0x28] sm:$0xff]
    %v25 = vld [vmem:[%s1 + $0x30] sm:$0xff]
    %v26 = vld [vmem:[%s1 + $0x38] sm:$0xff]
    %v27 = vld [vmem:[%s1 + $0x40] sm:$0xff]
    %v28 = vld [vmem:[%s1 + $0x48] sm:$0xff]
    %v29 = vld [vmem:[%s1 + $0x50] sm:$0xff]
    %v30 = vld [vmem:[%s1 + $0x58] sm:$0xff]
    %v31 = vld [vmem:[%s1 + $0x60] sm:$0xff]
    %v32 = vld [vmem:[%s1 + $0x68] sm:$0xff]
    %v33 = vld [vmem:[%s1 + $0x70] sm:$0xff]
    %v34 = vld [vmem:[%s1 + $0x78] sm:$0xff]
    %v35 = vld [vmem:[%s1 + $0x80] sm:$0xff]
    %v36 = vld [vmem:[%s1 + $0x88] sm:$0xff]
    %v37 = vld [vmem:[%s1 + $0x90] sm:$0xff]
    %v38 = vld [vmem:[%s1 + $0x98] sm:$0xff]
    %v39 = vld [vmem:[%s1 + $0xa0] sm:$0xff]
    %v40 = vld [vmem:[%s1 + $0xa8] sm:$0xff]
    %v41 = vld [vmem:[%s1 + $0xb0] sm:$0xff]
    %v42 = vld [vmem:[%s1 + $0xb8] sm:$0xff]
    %v43 = vld [vmem:[%s1 + $0xc0] sm:$0xff]
    %v44 = vld [vmem:[%s1 + $0xc8] sm:$0xff]
    %v45 = vld [vmem:[%s1 + $0xd0] sm:$0xff]
    %v46 = vld [vmem:[%s1 + $0xd8] sm:$0xff]
    %v47 = vld [vmem:[%s1 + $0xe0] sm:$0xff]
    %v48 = vld [vmem:[%s1 + $0xe8] sm:$0xff]
    %v49 = vld [vmem:[%s1 + $0xf0] sm:$0xff]
    %v50 = vld [vmem:[%s1 + $0xf8] sm:$0xff]
    %v51 = vld [vmem:[%s2] sm:$0xff]
    %v52 = vld [vmem:[%s2 + $0x8] sm:$0xff]
    %v53 = vld [vmem:[%s2 + $0x10] sm:$0x1]
    %v54 = vld [vmem:[%s2 + $0x18] sm:$0x1]
    %56 = vset.pattern.permute.xlu0 0
    %57 = vperm.xlu0 %56, %v19
    %v58 = vpop.permute.xlu0 %57
    %61 = vset.pattern.permute.xlu0 0
    %62 = vperm.xlu0 %61, %v20
    %v63 = vpop.permute.xlu0 %62
    %66 = vset.pattern.permute.xlu0 0
    %67 = vperm.xlu0 %66, %v21
    %v68 = vpop.permute.xlu0 %67
    %71 = vset.pattern.permute.xlu0 0
    %72 = vperm.xlu0 %71, %v22
    %v73 = vpop.permute.xlu0 %72
    %76 = vset.pattern.permute.xlu0 0
    %77 = vperm.xlu0 %76, %v23
    %v78 = vpop.permute.xlu0 %77
    %81 = vset.pattern.permute.xlu0 0
    %82 = vperm.xlu0 %81, %v24
    %v83 = vpop.permute.xlu0 %82
    %86 = vset.pattern.permute.xlu0 0
    %87 = vperm.xlu0 %86, %v25
    %v88 = vpop.permute.xlu0 %87
    %91 = vset.pattern.permute.xlu0 0
    %92 = vperm.xlu0 %91, %v26
    %v93 = vpop.permute.xlu0 %92
    %96 = vset.pattern.permute.xlu0 0
    %97 = vperm.xlu0 %96, %v27
    %v98 = vpop.permute.xlu0 %97
    %101 = vset.pattern.permute.xlu0 0
    %102 = vperm.xlu0 %101, %v28
    %v103 = vpop.permute.xlu0 %102
    %106 = vset.pattern.permute.xlu0 0
    %107 = vperm.xlu0 %106, %v29
    %v108 = vpop.permute.xlu0 %107
    %111 = vset.pattern.permute.xlu0 0
    %112 = vperm.xlu0 %111, %v30
    %v113 = vpop.permute.xlu0 %112
    %116 = vset.pattern.permute.xlu0 0
    %117 = vperm.xlu0 %116, %v31
    %v118 = vpop.permute.xlu0 %117
    %121 = vset.pattern.permute.xlu0 0
    %122 = vperm.xlu0 %121, %v32
    %v123 = vpop.permute.xlu0 %122
    %126 = vset.pattern.permute.xlu0 0
    %127 = vperm.xlu0 %126, %v33
    %v128 = vpop.permute.xlu0 %127
    %131 = vset.pattern.permute.xlu0 0
    %132 = vperm.xlu0 %131, %v34
    %v133 = vpop.permute.xlu0 %132
    %136 = vset.pattern.permute.xlu0 0
    %137 = vperm.xlu0 %136, %v35
    %v138 = vpop.permute.xlu0 %137
    %141 = vset.pattern.permute.xlu0 0
    %142 = vperm.xlu0 %141, %v36
    %v143 = vpop.permute.xlu0 %142
    %146 = vset.pattern.permute.xlu0 0
    %147 = vperm.xlu0 %146, %v37
    %v148 = vpop.permute.xlu0 %147
    %151 = vset.pattern.permute.xlu0 0
    %152 = vperm.xlu0 %151, %v38
    %v153 = vpop.permute.xlu0 %152
    %156 = vset.pattern.permute.xlu0 0
    %157 = vperm.xlu0 %156, %v39
    %v158 = vpop.permute.xlu0 %157
    %161 = vset.pattern.permute.xlu0 0
    %162 = vperm.xlu0 %161, %v40
    %v163 = vpop.permute.xlu0 %162
    %166 = vset.pattern.permute.xlu0 0
    %167 = vperm.xlu0 %166, %v41
    %v168 = vpop.permute.xlu0 %167
    %171 = vset.pattern.permute.xlu0 0
    %172 = vperm.xlu0 %171, %v42
    %v173 = vpop.permute.xlu0 %172
    %176 = vset.pattern.permute.xlu0 0
    %177 = vperm.xlu0 %176, %v43
    %v178 = vpop.permute.xlu0 %177
    %181 = vset.pattern.permute.xlu0 0
    %182 = vperm.xlu0 %181, %v44
    %v183 = vpop.permute.xlu0 %182
    %186 = vset.pattern.permute.xlu0 0
    %187 = vperm.xlu0 %186, %v45
    %v188 = vpop.permute.xlu0 %187
    %191 = vset.pattern.permute.xlu0 0
    %192 = vperm.xlu0 %191, %v46
    %v193 = vpop.permute.xlu0 %192
    %196 = vset.pattern.permute.xlu0 0
    %197 = vperm.xlu0 %196, %v47
    %v198 = vpop.permute.xlu0 %197
    %201 = vset.pattern.permute.xlu0 0
    %202 = vperm.xlu0 %201, %v48
    %v203 = vpop.permute.xlu0 %202
    %206 = vset.pattern.permute.xlu0 0
    %207 = vperm.xlu0 %206, %v49
    %v208 = vpop.permute.xlu0 %207
    %211 = vset.pattern.permute.xlu0 0
    %212 = vperm.xlu0 %211, %v50
    %v213 = vpop.permute.xlu0 %212
    %v215 = vlaneseq
    %v216 = vshrl.u32 %v215, 7
    %v217 = vsub.s32 0, %v216
    %v218 = vrot.slane %v51, %v217
    %v219 = vlaneseq
    %v220 = vshrl.u32 %v219, 7
    %v221 = vsub.s32 0, %v220
    %v222 = vrot.slane %v52, %v221
    %v223 = vsub.f32 %v58, %v218
    %v224 = vsub.f32 %v58, %v222
    %v225 = vsub.f32 %v63, %v218
    %v226 = vsub.f32 %v63, %v222
    %v227 = vsub.f32 %v68, %v218
    %v228 = vsub.f32 %v68, %v222
    %v229 = vsub.f32 %v73, %v218
    %v230 = vsub.f32 %v73, %v222
    %v231 = vsub.f32 %v78, %v218
    %v232 = vsub.f32 %v78, %v222
    %v233 = vsub.f32 %v83, %v218
    %v234 = vsub.f32 %v83, %v222
    %v235 = vsub.f32 %v88, %v218
    %v236 = vsub.f32 %v88, %v222
    %v237 = vsub.f32 %v93, %v218
    %v238 = vsub.f32 %v93, %v222
    %v239 = vsub.f32 %v98, %v218
    %v240 = vsub.f32 %v98, %v222
    %v241 = vsub.f32 %v103, %v218
    %v242 = vsub.f32 %v103, %v222
    %v243 = vsub.f32 %v108, %v218
    %v244 = vsub.f32 %v108, %v222
    %v245 = vsub.f32 %v113, %v218
    %v246 = vsub.f32 %v113, %v222
    %v247 = vsub.f32 %v118, %v218
    %v248 = vsub.f32 %v118, %v222
    %v249 = vsub.f32 %v123, %v218
    %v250 = vsub.f32 %v123, %v222
    %v251 = vsub.f32 %v128, %v218
    %v252 = vsub.f32 %v128, %v222
    %v253 = vsub.f32 %v133, %v218
    %v254 = vsub.f32 %v133, %v222
    %v255 = vsub.f32 %v138, %v218
    %v256 = vsub.f32 %v138, %v222
    %v257 = vsub.f32 %v143, %v218
    %v258 = vsub.f32 %v143, %v222
    %v259 = vsub.f32 %v148, %v218
    %v260 = vsub.f32 %v148, %v222
    %v261 = vsub.f32 %v153, %v218
    %v262 = vsub.f32 %v153, %v222
    %v263 = vsub.f32 %v158, %v218
    %v264 = vsub.f32 %v158, %v222
    %v265 = vsub.f32 %v163, %v218
    %v266 = vsub.f32 %v163, %v222
    %v267 = vsub.f32 %v168, %v218
    %v268 = vsub.f32 %v168, %v222
    %v269 = vsub.f32 %v173, %v218
    %v270 = vsub.f32 %v173, %v222
    %v271 = vsub.f32 %v178, %v218
    %v272 = vsub.f32 %v178, %v222
    %v273 = vsub.f32 %v183, %v218
    %v274 = vsub.f32 %v183, %v222
    %v275 = vsub.f32 %v188, %v218
    %v276 = vsub.f32 %v188, %v222
    %v277 = vsub.f32 %v193, %v218
    %v278 = vsub.f32 %v193, %v222
    %v279 = vsub.f32 %v198, %v218
    %v280 = vsub.f32 %v198, %v222
    %v281 = vsub.f32 %v203, %v218
    %v282 = vsub.f32 %v203, %v222
    %v283 = vsub.f32 %v208, %v218
    %v284 = vsub.f32 %v208, %v222
    %v285 = vsub.f32 %v213, %v218
    %v286 = vsub.f32 %v213, %v222
    %v287 = vmul.f32 %v223, %v223
    %v288 = vmul.f32 %v224, %v224
    %v289 = vmul.f32 %v225, %v225
    %v290 = vmul.f32 %v226, %v226
    %v291 = vmul.f32 %v227, %v227
    %v292 = vmul.f32 %v228, %v228
    %v293 = vmul.f32 %v229, %v229
    %v294 = vmul.f32 %v230, %v230
    %v295 = vmul.f32 %v231, %v231
    %v296 = vmul.f32 %v232, %v232
    %v297 = vmul.f32 %v233, %v233
    %v298 = vmul.f32 %v234, %v234
    %v299 = vmul.f32 %v235, %v235
    %v300 = vmul.f32 %v236, %v236
    %v301 = vmul.f32 %v237, %v237
    %v302 = vmul.f32 %v238, %v238
    %v303 = vmul.f32 %v239, %v239
    %v304 = vmul.f32 %v240, %v240
    %v305 = vmul.f32 %v241, %v241
    %v306 = vmul.f32 %v242, %v242
    %v307 = vmul.f32 %v243, %v243
    %v308 = vmul.f32 %v244, %v244
    %v309 = vmul.f32 %v245, %v245
    %v310 = vmul.f32 %v246, %v246
    %v311 = vmul.f32 %v247, %v247
    %v312 = vmul.f32 %v248, %v248
    %v313 = vmul.f32 %v249, %v249
    %v314 = vmul.f32 %v250, %v250
    %v315 = vmul.f32 %v251, %v251
    %v316 = vmul.f32 %v252, %v252
    %v317 = vmul.f32 %v253, %v253
    %v318 = vmul.f32 %v254, %v254
    %v319 = vmul.f32 %v255, %v255
    %v320 = vmul.f32 %v256, %v256
    %v321 = vmul.f32 %v257, %v257
    %v322 = vmul.f32 %v258, %v258
    %v323 = vmul.f32 %v259, %v259
    %v324 = vmul.f32 %v260, %v260
    %v325 = vmul.f32 %v261, %v261
    %v326 = vmul.f32 %v262, %v262
    %v327 = vmul.f32 %v263, %v263
    %v328 = vmul.f32 %v264, %v264
    %v329 = vmul.f32 %v265, %v265
    %v330 = vmul.f32 %v266, %v266
    %v331 = vmul.f32 %v267, %v267
    %v332 = vmul.f32 %v268, %v268
    %v333 = vmul.f32 %v269, %v269
    %v334 = vmul.f32 %v270, %v270
    %v335 = vmul.f32 %v271, %v271
    %v336 = vmul.f32 %v272, %v272
    %v337 = vmul.f32 %v273, %v273
    %v338 = vmul.f32 %v274, %v274
    %v339 = vmul.f32 %v275, %v275
    %v340 = vmul.f32 %v276, %v276
    %v341 = vmul.f32 %v277, %v277
    %v342 = vmul.f32 %v278, %v278
    %v343 = vmul.f32 %v279, %v279
    %v344 = vmul.f32 %v280, %v280
    %v345 = vmul.f32 %v281, %v281
    %v346 = vmul.f32 %v282, %v282
    %v347 = vmul.f32 %v283, %v283
    %v348 = vmul.f32 %v284, %v284
    %v349 = vmul.f32 %v285, %v285
    %v350 = vmul.f32 %v286, %v286
    %351 = vset.pattern.permute.xlu0 1
    %352 = vperm.xlu0 %351, %v19
    %v353 = vpop.permute.xlu0 %352
    %355 = vset.pattern.permute.xlu0 1
    %356 = vperm.xlu0 %355, %v20
    %v357 = vpop.permute.xlu0 %356
    %359 = vset.pattern.permute.xlu0 1
    %360 = vperm.xlu0 %359, %v21
    %v361 = vpop.permute.xlu0 %360
    %363 = vset.pattern.permute.xlu0 1
    %364 = vperm.xlu0 %363, %v22
    %v365 = vpop.permute.xlu0 %364
    %367 = vset.pattern.permute.xlu0 1
    %368 = vperm.xlu0 %367, %v23
    %v369 = vpop.permute.xlu0 %368
    %371 = vset.pattern.permute.xlu0 1
    %372 = vperm.xlu0 %371, %v24
    %v373 = vpop.permute.xlu0 %372
    %375 = vset.pattern.permute.xlu0 1
    %376 = vperm.xlu0 %375, %v25
    %v377 = vpop.permute.xlu0 %376
    %379 = vset.pattern.permute.xlu0 1
    %380 = vperm.xlu0 %379, %v26
    %v381 = vpop.permute.xlu0 %380
    %383 = vset.pattern.permute.xlu0 1
    %384 = vperm.xlu0 %383, %v27
    %v385 = vpop.permute.xlu0 %384
    %387 = vset.pattern.permute.xlu0 1
    %388 = vperm.xlu0 %387, %v28
    %v389 = vpop.permute.xlu0 %388
    %391 = vset.pattern.permute.xlu0 1
    %392 = vperm.xlu0 %391, %v29
    %v393 = vpop.permute.xlu0 %392
    %395 = vset.pattern.permute.xlu0 1
    %396 = vperm.xlu0 %395, %v30
    %v397 = vpop.permute.xlu0 %396
    %399 = vset.pattern.permute.xlu0 1
    %400 = vperm.xlu0 %399, %v31
    %v401 = vpop.permute.xlu0 %400
    %403 = vset.pattern.permute.xlu0 1
    %404 = vperm.xlu0 %403, %v32
    %v405 = vpop.permute.xlu0 %404
    %407 = vset.pattern.permute.xlu0 1
    %408 = vperm.xlu0 %407, %v33
    %v409 = vpop.permute.xlu0 %408
    %411 = vset.pattern.permute.xlu0 1
    %412 = vperm.xlu0 %411, %v34
    %v413 = vpop.permute.xlu0 %412
    %415 = vset.pattern.permute.xlu0 1
    %416 = vperm.xlu0 %415, %v35
    %v417 = vpop.permute.xlu0 %416
    %419 = vset.pattern.permute.xlu0 1
    %420 = vperm.xlu0 %419, %v36
    %v421 = vpop.permute.xlu0 %420
    %423 = vset.pattern.permute.xlu0 1
    %424 = vperm.xlu0 %423, %v37
    %v425 = vpop.permute.xlu0 %424
    %427 = vset.pattern.permute.xlu0 1
    %428 = vperm.xlu0 %427, %v38
    %v429 = vpop.permute.xlu0 %428
    %431 = vset.pattern.permute.xlu0 1
    %432 = vperm.xlu0 %431, %v39
    %v433 = vpop.permute.xlu0 %432
    %435 = vset.pattern.permute.xlu0 1
    %436 = vperm.xlu0 %435, %v40
    %v437 = vpop.permute.xlu0 %436
    %439 = vset.pattern.permute.xlu0 1
    %440 = vperm.xlu0 %439, %v41
    %v441 = vpop.permute.xlu0 %440
    %443 = vset.pattern.permute.xlu0 1
    %444 = vperm.xlu0 %443, %v42
    %v445 = vpop.permute.xlu0 %444
    %447 = vset.pattern.permute.xlu0 1
    %448 = vperm.xlu0 %447, %v43
    %v449 = vpop.permute.xlu0 %448
    %451 = vset.pattern.permute.xlu0 1
    %452 = vperm.xlu0 %451, %v44
    %v453 = vpop.permute.xlu0 %452
    %455 = vset.pattern.permute.xlu0 1
    %456 = vperm.xlu0 %455, %v45
    %v457 = vpop.permute.xlu0 %456
    %459 = vset.pattern.permute.xlu0 1
    %460 = vperm.xlu0 %459, %v46
    %v461 = vpop.permute.xlu0 %460
    %463 = vset.pattern.permute.xlu0 1
    %464 = vperm.xlu0 %463, %v47
    %v465 = vpop.permute.xlu0 %464
    %467 = vset.pattern.permute.xlu0 1
    %468 = vperm.xlu0 %467, %v48
    %v469 = vpop.permute.xlu0 %468
    %471 = vset.pattern.permute.xlu0 1
    %472 = vperm.xlu0 %471, %v49
    %v473 = vpop.permute.xlu0 %472
    %475 = vset.pattern.permute.xlu0 1
    %476 = vperm.xlu0 %475, %v50
    %v477 = vpop.permute.xlu0 %476
    %v479 = vlaneseq
    %v480 = vshrl.u32 %v479, 7
    %v481 = vsub.s32 1, %v480
    %v482 = vrot.slane %v51, %v481
    %v483 = vlaneseq
    %v484 = vshrl.u32 %v483, 7
    %v485 = vsub.s32 1, %v484
    %v486 = vrot.slane %v52, %v485
    %v487 = vmul.f32 %v353, %v482
    %v488 = vmul.f32 %v353, %v486
    %v489 = vmul.f32 %v357, %v482
    %v490 = vmul.f32 %v357, %v486
    %v491 = vmul.f32 %v361, %v482
    %v492 = vmul.f32 %v361, %v486
    %v493 = vmul.f32 %v365, %v482
    %v494 = vmul.f32 %v365, %v486
    %v495 = vmul.f32 %v369, %v482
    %v496 = vmul.f32 %v369, %v486
    %v497 = vmul.f32 %v373, %v482
    %v498 = vmul.f32 %v373, %v486
    %v499 = vmul.f32 %v377, %v482
    %v500 = vmul.f32 %v377, %v486
    %v501 = vmul.f32 %v381, %v482
    %v502 = vmul.f32 %v381, %v486
    %v503 = vmul.f32 %v385, %v482
    %v504 = vmul.f32 %v385, %v486
    %v505 = vmul.f32 %v389, %v482
    %v506 = vmul.f32 %v389, %v486
    %v507 = vmul.f32 %v393, %v482
    %v508 = vmul.f32 %v393, %v486
    %v509 = vmul.f32 %v397, %v482
    %v510 = vmul.f32 %v397, %v486
    %v511 = vmul.f32 %v401, %v482
    %v512 = vmul.f32 %v401, %v486
    %v513 = vmul.f32 %v405, %v482
    %v514 = vmul.f32 %v405, %v486
    %v515 = vmul.f32 %v409, %v482
    %v516 = vmul.f32 %v409, %v486
    %v517 = vmul.f32 %v413, %v482
    %v518 = vmul.f32 %v413, %v486
    %v519 = vmul.f32 %v417, %v482
    %v520 = vmul.f32 %v417, %v486
    %v521 = vmul.f32 %v421, %v482
    %v522 = vmul.f32 %v421, %v486
    %v523 = vmul.f32 %v425, %v482
    %v524 = vmul.f32 %v425, %v486
    %v525 = vmul.f32 %v429, %v482
    %v526 = vmul.f32 %v429, %v486
    %v527 = vmul.f32 %v433, %v482
    %v528 = vmul.f32 %v433, %v486
    %v529 = vmul.f32 %v437, %v482
    %v530 = vmul.f32 %v437, %v486
    %v531 = vmul.f32 %v441, %v482
    %v532 = vmul.f32 %v441, %v486
    %v533 = vmul.f32 %v445, %v482
    %v534 = vmul.f32 %v445, %v486
    %v535 = vmul.f32 %v449, %v482
    %v536 = vmul.f32 %v449, %v486
    %v537 = vmul.f32 %v453, %v482
    %v538 = vmul.f32 %v453, %v486
    %v539 = vmul.f32 %v457, %v482
    %v540 = vmul.f32 %v457, %v486
    %v541 = vmul.f32 %v461, %v482
    %v542 = vmul.f32 %v461, %v486
    %v543 = vmul.f32 %v465, %v482
    %v544 = vmul.f32 %v465, %v486
    %v545 = vmul.f32 %v469, %v482
    %v546 = vmul.f32 %v469, %v486
    %v547 = vmul.f32 %v473, %v482
    %v548 = vmul.f32 %v473, %v486
    %v549 = vmul.f32 %v477, %v482
    %v550 = vmul.f32 %v477, %v486
    %551 = vset.pattern.permute.xlu0 5
    %552 = vperm.xlu0 %551, %v19
    %v553 = vpop.permute.xlu0 %552
    %555 = vset.pattern.permute.xlu0 5
    %556 = vperm.xlu0 %555, %v20
    %v557 = vpop.permute.xlu0 %556
    %559 = vset.pattern.permute.xlu0 5
    %560 = vperm.xlu0 %559, %v21
    %v561 = vpop.permute.xlu0 %560
    %563 = vset.pattern.permute.xlu0 5
    %564 = vperm.xlu0 %563, %v22
    %v565 = vpop.permute.xlu0 %564
    %567 = vset.pattern.permute.xlu0 5
    %568 = vperm.xlu0 %567, %v23
    %v569 = vpop.permute.xlu0 %568
    %571 = vset.pattern.permute.xlu0 5
    %572 = vperm.xlu0 %571, %v24
    %v573 = vpop.permute.xlu0 %572
    %575 = vset.pattern.permute.xlu0 5
    %576 = vperm.xlu0 %575, %v25
    %v577 = vpop.permute.xlu0 %576
    %579 = vset.pattern.permute.xlu0 5
    %580 = vperm.xlu0 %579, %v26
    %v581 = vpop.permute.xlu0 %580
    %583 = vset.pattern.permute.xlu0 5
    %584 = vperm.xlu0 %583, %v27
    %v585 = vpop.permute.xlu0 %584
    %587 = vset.pattern.permute.xlu0 5
    %588 = vperm.xlu0 %587, %v28
    %v589 = vpop.permute.xlu0 %588
    %591 = vset.pattern.permute.xlu0 5
    %592 = vperm.xlu0 %591, %v29
    %v593 = vpop.permute.xlu0 %592
    %595 = vset.pattern.permute.xlu0 5
    %596 = vperm.xlu0 %595, %v30
    %v597 = vpop.permute.xlu0 %596
    %599 = vset.pattern.permute.xlu0 5
    %600 = vperm.xlu0 %599, %v31
    %v601 = vpop.permute.xlu0 %600
    %603 = vset.pattern.permute.xlu0 5
    %604 = vperm.xlu0 %603, %v32
    %v605 = vpop.permute.xlu0 %604
    %607 = vset.pattern.permute.xlu0 5
    %608 = vperm.xlu0 %607, %v33
    %v609 = vpop.permute.xlu0 %608
    %611 = vset.pattern.permute.xlu0 5
    %612 = vperm.xlu0 %611, %v34
    %v613 = vpop.permute.xlu0 %612
    %615 = vset.pattern.permute.xlu0 5
    %616 = vperm.xlu0 %615, %v35
    %v617 = vpop.permute.xlu0 %616
    %619 = vset.pattern.permute.xlu0 5
    %620 = vperm.xlu0 %619, %v36
    %v621 = vpop.permute.xlu0 %620
    %623 = vset.pattern.permute.xlu0 5
    %624 = vperm.xlu0 %623, %v37
    %v625 = vpop.permute.xlu0 %624
    %627 = vset.pattern.permute.xlu0 5
    %628 = vperm.xlu0 %627, %v38
    %v629 = vpop.permute.xlu0 %628
    %631 = vset.pattern.permute.xlu0 5
    %632 = vperm.xlu0 %631, %v39
    %v633 = vpop.permute.xlu0 %632
    %635 = vset.pattern.permute.xlu0 5
    %636 = vperm.xlu0 %635, %v40
    %v637 = vpop.permute.xlu0 %636
    %639 = vset.pattern.permute.xlu0 5
    %640 = vperm.xlu0 %639, %v41
    %v641 = vpop.permute.xlu0 %640
    %643 = vset.pattern.permute.xlu0 5
    %644 = vperm.xlu0 %643, %v42
    %v645 = vpop.permute.xlu0 %644
    %647 = vset.pattern.permute.xlu0 5
    %648 = vperm.xlu0 %647, %v43
    %v649 = vpop.permute.xlu0 %648
    %651 = vset.pattern.permute.xlu0 5
    %652 = vperm.xlu0 %651, %v44
    %v653 = vpop.permute.xlu0 %652
    %655 = vset.pattern.permute.xlu0 5
    %656 = vperm.xlu0 %655, %v45
    %v657 = vpop.permute.xlu0 %656
    %659 = vset.pattern.permute.xlu0 5
    %660 = vperm.xlu0 %659, %v46
    %v661 = vpop.permute.xlu0 %660
    %663 = vset.pattern.permute.xlu0 5
    %664 = vperm.xlu0 %663, %v47
    %v665 = vpop.permute.xlu0 %664
    %667 = vset.pattern.permute.xlu0 5
    %668 = vperm.xlu0 %667, %v48
    %v669 = vpop.permute.xlu0 %668
    %671 = vset.pattern.permute.xlu0 5
    %672 = vperm.xlu0 %671, %v49
    %v673 = vpop.permute.xlu0 %672
    %675 = vset.pattern.permute.xlu0 5
    %676 = vperm.xlu0 %675, %v50
    %v677 = vpop.permute.xlu0 %676
    %v679 = vlaneseq
    %v680 = vshrl.u32 %v679, 7
    %v681 = vsub.s32 5, %v680
    %v682 = vrot.slane %v51, %v681
    %v683 = vlaneseq
    %v684 = vshrl.u32 %v683, 7
    %v685 = vsub.s32 5, %v684
    %v686 = vrot.slane %v52, %v685
    %v687 = vmul.f32 %v553, %v682
    %v688 = vmul.f32 %v553, %v686
    %v689 = vmul.f32 %v557, %v682
    %v690 = vmul.f32 %v557, %v686
    %v691 = vmul.f32 %v561, %v682
    %v692 = vmul.f32 %v561, %v686
    %v693 = vmul.f32 %v565, %v682
    %v694 = vmul.f32 %v565, %v686
    %v695 = vmul.f32 %v569, %v682
    %v696 = vmul.f32 %v569, %v686
    %v697 = vmul.f32 %v573, %v682
    %v698 = vmul.f32 %v573, %v686
    %v699 = vmul.f32 %v577, %v682
    %v700 = vmul.f32 %v577, %v686
    %v701 = vmul.f32 %v581, %v682
    %v702 = vmul.f32 %v581, %v686
    %v703 = vmul.f32 %v585, %v682
    %v704 = vmul.f32 %v585, %v686
    %v705 = vmul.f32 %v589, %v682
    %v706 = vmul.f32 %v589, %v686
    %v707 = vmul.f32 %v593, %v682
    %v708 = vmul.f32 %v593, %v686
    %v709 = vmul.f32 %v597, %v682
    %v710 = vmul.f32 %v597, %v686
    %v711 = vmul.f32 %v601, %v682
    %v712 = vmul.f32 %v601, %v686
    %v713 = vmul.f32 %v605, %v682
    %v714 = vmul.f32 %v605, %v686
    %v715 = vmul.f32 %v609, %v682
    %v716 = vmul.f32 %v609, %v686
    %v717 = vmul.f32 %v613, %v682
    %v718 = vmul.f32 %v613, %v686
    %v719 = vmul.f32 %v617, %v682
    %v720 = vmul.f32 %v617, %v686
    %v721 = vmul.f32 %v621, %v682
    %v722 = vmul.f32 %v621, %v686
    %v723 = vmul.f32 %v625, %v682
    %v724 = vmul.f32 %v625, %v686
    %v725 = vmul.f32 %v629, %v682
    %v726 = vmul.f32 %v629, %v686
    %v727 = vmul.f32 %v633, %v682
    %v728 = vmul.f32 %v633, %v686
    %v729 = vmul.f32 %v637, %v682
    %v730 = vmul.f32 %v637, %v686
    %v731 = vmul.f32 %v641, %v682
    %v732 = vmul.f32 %v641, %v686
    %v733 = vmul.f32 %v645, %v682
    %v734 = vmul.f32 %v645, %v686
    %v735 = vmul.f32 %v649, %v682
    %v736 = vmul.f32 %v649, %v686
    %v737 = vmul.f32 %v653, %v682
    %v738 = vmul.f32 %v653, %v686
    %v739 = vmul.f32 %v657, %v682
    %v740 = vmul.f32 %v657, %v686
    %v741 = vmul.f32 %v661, %v682
    %v742 = vmul.f32 %v661, %v686
    %v743 = vmul.f32 %v665, %v682
    %v744 = vmul.f32 %v665, %v686
    %v745 = vmul.f32 %v669, %v682
    %v746 = vmul.f32 %v669, %v686
    %v747 = vmul.f32 %v673, %v682
    %v748 = vmul.f32 %v673, %v686
    %v749 = vmul.f32 %v677, %v682
    %v750 = vmul.f32 %v677, %v686
    %v751 = vadd.f32 %v487, %v687
    %v752 = vadd.f32 %v488, %v688
    %v753 = vadd.f32 %v489, %v689
    %v754 = vadd.f32 %v490, %v690
    %v755 = vadd.f32 %v491, %v691
    %v756 = vadd.f32 %v492, %v692
    %v757 = vadd.f32 %v493, %v693
    %v758 = vadd.f32 %v494, %v694
    %v759 = vadd.f32 %v495, %v695
    %v760 = vadd.f32 %v496, %v696
    %v761 = vadd.f32 %v497, %v697
    %v762 = vadd.f32 %v498, %v698
    %v763 = vadd.f32 %v499, %v699
    %v764 = vadd.f32 %v500, %v700
    %v765 = vadd.f32 %v501, %v701
    %v766 = vadd.f32 %v502, %v702
    %v767 = vadd.f32 %v503, %v703
    %v768 = vadd.f32 %v504, %v704
    %v769 = vadd.f32 %v505, %v705
    %v770 = vadd.f32 %v506, %v706
    %v771 = vadd.f32 %v507, %v707
    %v772 = vadd.f32 %v508, %v708
    %v773 = vadd.f32 %v509, %v709
    %v774 = vadd.f32 %v510, %v710
    %v775 = vadd.f32 %v511, %v711
    %v776 = vadd.f32 %v512, %v712
    %v777 = vadd.f32 %v513, %v713
    %v778 = vadd.f32 %v514, %v714
    %v779 = vadd.f32 %v515, %v715
    %v780 = vadd.f32 %v516, %v716
    %v781 = vadd.f32 %v517, %v717
    %v782 = vadd.f32 %v518, %v718
    %v783 = vadd.f32 %v519, %v719
    %v784 = vadd.f32 %v520, %v720
    %v785 = vadd.f32 %v521, %v721
    %v786 = vadd.f32 %v522, %v722
    %v787 = vadd.f32 %v523, %v723
    %v788 = vadd.f32 %v524, %v724
    %v789 = vadd.f32 %v525, %v725
    %v790 = vadd.f32 %v526, %v726
    %v791 = vadd.f32 %v527, %v727
    %v792 = vadd.f32 %v528, %v728
    %v793 = vadd.f32 %v529, %v729
    %v794 = vadd.f32 %v530, %v730
    %v795 = vadd.f32 %v531, %v731
    %v796 = vadd.f32 %v532, %v732
    %v797 = vadd.f32 %v533, %v733
    %v798 = vadd.f32 %v534, %v734
    %v799 = vadd.f32 %v535, %v735
    %v800 = vadd.f32 %v536, %v736
    %v801 = vadd.f32 %v537, %v737
    %v802 = vadd.f32 %v538, %v738
    %v803 = vadd.f32 %v539, %v739
    %v804 = vadd.f32 %v540, %v740
    %v805 = vadd.f32 %v541, %v741
    %v806 = vadd.f32 %v542, %v742
    %v807 = vadd.f32 %v543, %v743
    %v808 = vadd.f32 %v544, %v744
    %v809 = vadd.f32 %v545, %v745
    %v810 = vadd.f32 %v546, %v746
    %v811 = vadd.f32 %v547, %v747
    %v812 = vadd.f32 %v548, %v748
    %v813 = vadd.f32 %v549, %v749
    %v814 = vadd.f32 %v550, %v750
    %s815 = sld [smem:[#allocation3]]
    %v816 = vstv %s815
    %v817 = vmul.f32 %v816, %v287
    %v818 = vmul.f32 %v816, %v288
    %v819 = vmul.f32 %v816, %v289
    %v820 = vmul.f32 %v816, %v290
    %v821 = vmul.f32 %v816, %v291
    %v822 = vmul.f32 %v816, %v292
    %v823 = vmul.f32 %v816, %v293
    %v824 = vmul.f32 %v816, %v294
    %v825 = vmul.f32 %v816, %v295
    %v826 = vmul.f32 %v816, %v296
    %v827 = vmul.f32 %v816, %v297
    %v828 = vmul.f32 %v816, %v298
    %v829 = vmul.f32 %v816, %v299
    %v830 = vmul.f32 %v816, %v300
    %v831 = vmul.f32 %v816, %v301
    %v832 = vmul.f32 %v816, %v302
    %v833 = vmul.f32 %v816, %v303
    %v834 = vmul.f32 %v816, %v304
    %v835 = vmul.f32 %v816, %v305
    %v836 = vmul.f32 %v816, %v306
    %v837 = vmul.f32 %v816, %v307
    %v838 = vmul.f32 %v816, %v308
    %v839 = vmul.f32 %v816, %v309
    %v840 = vmul.f32 %v816, %v310
    %v841 = vmul.f32 %v816, %v311
    %v842 = vmul.f32 %v816, %v312
    %v843 = vmul.f32 %v816, %v313
    %v844 = vmul.f32 %v816, %v314
    %v845 = vmul.f32 %v816, %v315
    %v846 = vmul.f32 %v816, %v316
    %v847 = vmul.f32 %v816, %v317
    %v848 = vmul.f32 %v816, %v318
    %v849 = vmul.f32 %v816, %v319
    %v850 = vmul.f32 %v816, %v320
    %v851 = vmul.f32 %v816, %v321
    %v852 = vmul.f32 %v816, %v322
    %v853 = vmul.f32 %v816, %v323
    %v854 = vmul.f32 %v816, %v324
    %v855 = vmul.f32 %v816, %v325
    %v856 = vmul.f32 %v816, %v326
    %v857 = vmul.f32 %v816, %v327
    %v858 = vmul.f32 %v816, %v328
    %v859 = vmul.f32 %v816, %v329
    %v860 = vmul.f32 %v816, %v330
    %v861 = vmul.f32 %v816, %v331
    %v862 = vmul.f32 %v816, %v332
    %v863 = vmul.f32 %v816, %v333
    %v864 = vmul.f32 %v816, %v334
    %v865 = vmul.f32 %v816, %v335
    %v866 = vmul.f32 %v816, %v336
    %v867 = vmul.f32 %v816, %v337
    %v868 = vmul.f32 %v816, %v338
    %v869 = vmul.f32 %v816, %v339
    %v870 = vmul.f32 %v816, %v340
    %v871 = vmul.f32 %v816, %v341
    %v872 = vmul.f32 %v816, %v342
    %v873 = vmul.f32 %v816, %v343
    %v874 = vmul.f32 %v816, %v344
    %v875 = vmul.f32 %v816, %v345
    %v876 = vmul.f32 %v816, %v346
    %v877 = vmul.f32 %v816, %v347
    %v878 = vmul.f32 %v816, %v348
    %v879 = vmul.f32 %v816, %v349
    %v880 = vmul.f32 %v816, %v350
    %v881 = vmul.f32 %v817, 1.442695
    %v882 = vpow.pop %v881
    %v883 = vmul.f32 %v818, 1.442695
    %v884 = vpow.pop %v883
    %v885 = vmul.f32 %v819, 1.442695
    %v886 = vpow.pop %v885
    %v887 = vmul.f32 %v820, 1.442695
    %v888 = vpow.pop %v887
    %v889 = vmul.f32 %v821, 1.442695
    %v890 = vpow.pop %v889
    %v891 = vmul.f32 %v822, 1.442695
    %v892 = vpow.pop %v891
    %v893 = vmul.f32 %v823, 1.442695
    %v894 = vpow.pop %v893
    %v895 = vmul.f32 %v824, 1.442695
    %v896 = vpow.pop %v895
    %v897 = vmul.f32 %v825, 1.442695
    %v898 = vpow.pop %v897
    %v899 = vmul.f32 %v826, 1.442695
    %v900 = vpow.pop %v899
    %v901 = vmul.f32 %v827, 1.442695
    %v902 = vpow.pop %v901
    %v903 = vmul.f32 %v828, 1.442695
    %v904 = vpow.pop %v903
    %v905 = vmul.f32 %v829, 1.442695
    %v906 = vpow.pop %v905
    %v907 = vmul.f32 %v830, 1.442695
    %v908 = vpow.pop %v907
    %v909 = vmul.f32 %v831, 1.442695
    %v910 = vpow.pop %v909
    %v911 = vmul.f32 %v832, 1.442695
    %v912 = vpow.pop %v911
    %v913 = vmul.f32 %v833, 1.442695
    %v914 = vpow.pop %v913
    %v915 = vmul.f32 %v834, 1.442695
    %v916 = vpow.pop %v915
    %v917 = vmul.f32 %v835, 1.442695
    %v918 = vpow.pop %v917
    %v919 = vmul.f32 %v836, 1.442695
    %v920 = vpow.pop %v919
    %v921 = vmul.f32 %v837, 1.442695
    %v922 = vpow.pop %v921
    %v923 = vmul.f32 %v838, 1.442695
    %v924 = vpow.pop %v923
    %v925 = vmul.f32 %v839, 1.442695
    %v926 = vpow.pop %v925
    %v927 = vmul.f32 %v840, 1.442695
    %v928 = vpow.pop %v927
    %v929 = vmul.f32 %v841, 1.442695
    %v930 = vpow.pop %v929
    %v931 = vmul.f32 %v842, 1.442695
    %v932 = vpow.pop %v931
    %v933 = vmul.f32 %v843, 1.442695
    %v934 = vpow.pop %v933
    %v935 = vmul.f32 %v844, 1.442695
    %v936 = vpow.pop %v935
    %v937 = vmul.f32 %v845, 1.442695
    %v938 = vpow.pop %v937
    %v939 = vmul.f32 %v846, 1.442695
    %v940 = vpow.pop %v939
    %v941 = vmul.f32 %v847, 1.442695
    %v942 = vpow.pop %v941
    %v943 = vmul.f32 %v848, 1.442695
    %v944 = vpow.pop %v943
    %v945 = vmul.f32 %v849, 1.442695
    %v946 = vpow.pop %v945
    %v947 = vmul.f32 %v850, 1.442695
    %v948 = vpow.pop %v947
    %v949 = vmul.f32 %v851, 1.442695
    %v950 = vpow.pop %v949
    %v951 = vmul.f32 %v852, 1.442695
    %v952 = vpow.pop %v951
    %v953 = vmul.f32 %v853, 1.442695
    %v954 = vpow.pop %v953
    %v955 = vmul.f32 %v854, 1.442695
    %v956 = vpow.pop %v955
    %v957 = vmul.f32 %v855, 1.442695
    %v958 = vpow.pop %v957
    %v959 = vmul.f32 %v856, 1.442695
    %v960 = vpow.pop %v959
    %v961 = vmul.f32 %v857, 1.442695
    %v962 = vpow.pop %v961
    %v963 = vmul.f32 %v858, 1.442695
    %v964 = vpow.pop %v963
    %v965 = vmul.f32 %v859, 1.442695
    %v966 = vpow.pop %v965
    %v967 = vmul.f32 %v860, 1.442695
    %v968 = vpow.pop %v967
    %v969 = vmul.f32 %v861, 1.442695
    %v970 = vpow.pop %v969
    %v971 = vmul.f32 %v862, 1.442695
    %v972 = vpow.pop %v971
    %v973 = vmul.f32 %v863, 1.442695
    %v974 = vpow.pop %v973
    %v975 = vmul.f32 %v864, 1.442695
    %v976 = vpow.pop %v975
    %v977 = vmul.f32 %v865, 1.442695
    %v978 = vpow.pop %v977
    %v979 = vmul.f32 %v866, 1.442695
    %v980 = vpow.pop %v979
    %v981 = vmul.f32 %v867, 1.442695
    %v982 = vpow.pop %v981
    %v983 = vmul.f32 %v868, 1.442695
    %v984 = vpow.pop %v983
    %v985 = vmul.f32 %v869, 1.442695
    %v986 = vpow.pop %v985
    %v987 = vmul.f32 %v870, 1.442695
    %v988 = vpow.pop %v987
    %v989 = vmul.f32 %v871, 1.442695
    %v990 = vpow.pop %v989
    %v991 = vmul.f32 %v872, 1.442695
    %v992 = vpow.pop %v991
    %v993 = vmul.f32 %v873, 1.442695
    %v994 = vpow.pop %v993
    %v995 = vmul.f32 %v874, 1.442695
    %v996 = vpow.pop %v995
    %v997 = vmul.f32 %v875, 1.442695
    %v998 = vpow.pop %v997
    %v999 = vmul.f32 %v876, 1.442695
    %v1000 = vpow.pop %v999
    %v1001 = vmul.f32 %v877, 1.442695
    %v1002 = vpow.pop %v1001
    %v1003 = vmul.f32 %v878, 1.442695
    %v1004 = vpow.pop %v1003
    %v1005 = vmul.f32 %v879, 1.442695
    %v1006 = vpow.pop %v1005
    %v1007 = vmul.f32 %v880, 1.442695
    %v1008 = vpow.pop %v1007
    %v1009 = vmul.f32 %v882, %v751
    %v1010 = vmul.f32 %v884, %v752
    %v1011 = vmul.f32 %v886, %v753
    %v1012 = vmul.f32 %v888, %v754
    %v1013 = vmul.f32 %v890, %v755
    %v1014 = vmul.f32 %v892, %v756
    %v1015 = vmul.f32 %v894, %v757
    %v1016 = vmul.f32 %v896, %v758
    %v1017 = vmul.f32 %v898, %v759
    %v1018 = vmul.f32 %v900, %v760
    %v1019 = vmul.f32 %v902, %v761
    %v1020 = vmul.f32 %v904, %v762
    %v1021 = vmul.f32 %v906, %v763
    %v1022 = vmul.f32 %v908, %v764
    %v1023 = vmul.f32 %v910, %v765
    %v1024 = vmul.f32 %v912, %v766
    %v1025 = vmul.f32 %v914, %v767
    %v1026 = vmul.f32 %v916, %v768
    %v1027 = vmul.f32 %v918, %v769
    %v1028 = vmul.f32 %v920, %v770
    %v1029 = vmul.f32 %v922, %v771
    %v1030 = vmul.f32 %v924, %v772
    %v1031 = vmul.f32 %v926, %v773
    %v1032 = vmul.f32 %v928, %v774
    %v1033 = vmul.f32 %v930, %v775
    %v1034 = vmul.f32 %v932, %v776
    %v1035 = vmul.f32 %v934, %v777
    %v1036 = vmul.f32 %v936, %v778
    %v1037 = vmul.f32 %v938, %v779
    %v1038 = vmul.f32 %v940, %v780
    %v1039 = vmul.f32 %v942, %v781
    %v1040 = vmul.f32 %v944, %v782
    %v1041 = vmul.f32 %v946, %v783
    %v1042 = vmul.f32 %v948, %v784
    %v1043 = vmul.f32 %v950, %v785
    %v1044 = vmul.f32 %v952, %v786
    %v1045 = vmul.f32 %v954, %v787
    %v1046 = vmul.f32 %v956, %v788
    %v1047 = vmul.f32 %v958, %v789
    %v1048 = vmul.f32 %v960, %v790
    %v1049 = vmul.f32 %v962, %v791
    %v1050 = vmul.f32 %v964, %v792
    %v1051 = vmul.f32 %v966, %v793
    %v1052 = vmul.f32 %v968, %v794
    %v1053 = vmul.f32 %v970, %v795
    %v1054 = vmul.f32 %v972, %v796
    %v1055 = vmul.f32 %v974, %v797
    %v1056 = vmul.f32 %v976, %v798
    %v1057 = vmul.f32 %v978, %v799
    %v1058 = vmul.f32 %v980, %v800
    %v1059 = vmul.f32 %v982, %v801
    %v1060 = vmul.f32 %v984, %v802
    %v1061 = vmul.f32 %v986, %v803
    %v1062 = vmul.f32 %v988, %v804
    %v1063 = vmul.f32 %v990, %v805
    %v1064 = vmul.f32 %v992, %v806
    %v1065 = vmul.f32 %v994, %v807
    %v1066 = vmul.f32 %v996, %v808
    %v1067 = vmul.f32 %v998, %v809
    %v1068 = vmul.f32 %v1000, %v810
    %v1069 = vmul.f32 %v1002, %v811
    %v1070 = vmul.f32 %v1004, %v812
    %v1071 = vmul.f32 %v1006, %v813
    %v1072 = vmul.f32 %v1008, %v814
    %1073 = vset.pattern.permute.xlu0 2
    %1074 = vperm.xlu0 %1073, %v19
    %v1075 = vpop.permute.xlu0 %1074
    %1077 = vset.pattern.permute.xlu0 2
    %1078 = vperm.xlu0 %1077, %v20
    %v1079 = vpop.permute.xlu0 %1078
    %1081 = vset.pattern.permute.xlu0 2
    %1082 = vperm.xlu0 %1081, %v21
    %v1083 = vpop.permute.xlu0 %1082
    %1085 = vset.pattern.permute.xlu0 2
    %1086 = vperm.xlu0 %1085, %v22
    %v1087 = vpop.permute.xlu0 %1086
    %1089 = vset.pattern.permute.xlu0 2
    %1090 = vperm.xlu0 %1089, %v23
    %v1091 = vpop.permute.xlu0 %1090
    %1093 = vset.pattern.permute.xlu0 2
    %1094 = vperm.xlu0 %1093, %v24
    %v1095 = vpop.permute.xlu0 %1094
    %1097 = vset.pattern.permute.xlu0 2
    %1098 = vperm.xlu0 %1097, %v25
    %v1099 = vpop.permute.xlu0 %1098
    %1101 = vset.pattern.permute.xlu0 2
    %1102 = vperm.xlu0 %1101, %v26
    %v1103 = vpop.permute.xlu0 %1102
    %1105 = vset.pattern.permute.xlu0 2
    %1106 = vperm.xlu0 %1105, %v27
    %v1107 = vpop.permute.xlu0 %1106
    %1109 = vset.pattern.permute.xlu0 2
    %1110 = vperm.xlu0 %1109, %v28
    %v1111 = vpop.permute.xlu0 %1110
    %1113 = vset.pattern.permute.xlu0 2
    %1114 = vperm.xlu0 %1113, %v29
    %v1115 = vpop.permute.xlu0 %1114
    %1117 = vset.pattern.permute.xlu0 2
    %1118 = vperm.xlu0 %1117, %v30
    %v1119 = vpop.permute.xlu0 %1118
    %1121 = vset.pattern.permute.xlu0 2
    %1122 = vperm.xlu0 %1121, %v31
    %v1123 = vpop.permute.xlu0 %1122
    %1125 = vset.pattern.permute.xlu0 2
    %1126 = vperm.xlu0 %1125, %v32
    %v1127 = vpop.permute.xlu0 %1126
    %1129 = vset.pattern.permute.xlu0 2
    %1130 = vperm.xlu0 %1129, %v33
    %v1131 = vpop.permute.xlu0 %1130
    %1133 = vset.pattern.permute.xlu0 2
    %1134 = vperm.xlu0 %1133, %v34
    %v1135 = vpop.permute.xlu0 %1134
    %1137 = vset.pattern.permute.xlu0 2
    %1138 = vperm.xlu0 %1137, %v35
    %v1139 = vpop.permute.xlu0 %1138
    %1141 = vset.pattern.permute.xlu0 2
    %1142 = vperm.xlu0 %1141, %v36
    %v1143 = vpop.permute.xlu0 %1142
    %1145 = vset.pattern.permute.xlu0 2
    %1146 = vperm.xlu0 %1145, %v37
    %v1147 = vpop.permute.xlu0 %1146
    %1149 = vset.pattern.permute.xlu0 2
    %1150 = vperm.xlu0 %1149, %v38
    %v1151 = vpop.permute.xlu0 %1150
    %1153 = vset.pattern.permute.xlu0 2
    %1154 = vperm.xlu0 %1153, %v39
    %v1155 = vpop.permute.xlu0 %1154
    %1157 = vset.pattern.permute.xlu0 2
    %1158 = vperm.xlu0 %1157, %v40
    %v1159 = vpop.permute.xlu0 %1158
    %1161 = vset.pattern.permute.xlu0 2
    %1162 = vperm.xlu0 %1161, %v41
    %v1163 = vpop.permute.xlu0 %1162
    %1165 = vset.pattern.permute.xlu0 2
    %1166 = vperm.xlu0 %1165, %v42
    %v1167 = vpop.permute.xlu0 %1166
    %1169 = vset.pattern.permute.xlu0 2
    %1170 = vperm.xlu0 %1169, %v43
    %v1171 = vpop.permute.xlu0 %1170
    %1173 = vset.pattern.permute.xlu0 2
    %1174 = vperm.xlu0 %1173, %v44
    %v1175 = vpop.permute.xlu0 %1174
    %1177 = vset.pattern.permute.xlu0 2
    %1178 = vperm.xlu0 %1177, %v45
    %v1179 = vpop.permute.xlu0 %1178
    %1181 = vset.pattern.permute.xlu0 2
    %1182 = vperm.xlu0 %1181, %v46
    %v1183 = vpop.permute.xlu0 %1182
    %1185 = vset.pattern.permute.xlu0 2
    %1186 = vperm.xlu0 %1185, %v47
    %v1187 = vpop.permute.xlu0 %1186
    %1189 = vset.pattern.permute.xlu0 2
    %1190 = vperm.xlu0 %1189, %v48
    %v1191 = vpop.permute.xlu0 %1190
    %1193 = vset.pattern.permute.xlu0 2
    %1194 = vperm.xlu0 %1193, %v49
    %v1195 = vpop.permute.xlu0 %1194
    %1197 = vset.pattern.permute.xlu0 2
    %1198 = vperm.xlu0 %1197, %v50
    %v1199 = vpop.permute.xlu0 %1198
    %v1201 = vlaneseq
    %v1202 = vshrl.u32 %v1201, 7
    %v1203 = vsub.s32 2, %v1202
    %v1204 = vrot.slane %v51, %v1203
    %v1205 = vlaneseq
    %v1206 = vshrl.u32 %v1205, 7
    %v1207 = vsub.s32 2, %v1206
    %v1208 = vrot.slane %v52, %v1207
    %v1209 = vmul.f32 %v1075, %v1204
    %v1210 = vmul.f32 %v1075, %v1208
    %v1211 = vmul.f32 %v1079, %v1204
    %v1212 = vmul.f32 %v1079, %v1208
    %v1213 = vmul.f32 %v1083, %v1204
    %v1214 = vmul.f32 %v1083, %v1208
    %v1215 = vmul.f32 %v1087, %v1204
    %v1216 = vmul.f32 %v1087, %v1208
    %v1217 = vmul.f32 %v1091, %v1204
    %v1218 = vmul.f32 %v1091, %v1208
    %v1219 = vmul.f32 %v1095, %v1204
    %v1220 = vmul.f32 %v1095, %v1208
    %v1221 = vmul.f32 %v1099, %v1204
    %v1222 = vmul.f32 %v1099, %v1208
    %v1223 = vmul.f32 %v1103, %v1204
    %v1224 = vmul.f32 %v1103, %v1208
    %v1225 = vmul.f32 %v1107, %v1204
    %v1226 = vmul.f32 %v1107, %v1208
    %v1227 = vmul.f32 %v1111, %v1204
    %v1228 = vmul.f32 %v1111, %v1208
    %v1229 = vmul.f32 %v1115, %v1204
    %v1230 = vmul.f32 %v1115, %v1208
    %v1231 = vmul.f32 %v1119, %v1204
    %v1232 = vmul.f32 %v1119, %v1208
    %v1233 = vmul.f32 %v1123, %v1204
    %v1234 = vmul.f32 %v1123, %v1208
    %v1235 = vmul.f32 %v1127, %v1204
    %v1236 = vmul.f32 %v1127, %v1208
    %v1237 = vmul.f32 %v1131, %v1204
    %v1238 = vmul.f32 %v1131, %v1208
    %v1239 = vmul.f32 %v1135, %v1204
    %v1240 = vmul.f32 %v1135, %v1208
    %v1241 = vmul.f32 %v1139, %v1204
    %v1242 = vmul.f32 %v1139, %v1208
    %v1243 = vmul.f32 %v1143, %v1204
    %v1244 = vmul.f32 %v1143, %v1208
    %v1245 = vmul.f32 %v1147, %v1204
    %v1246 = vmul.f32 %v1147, %v1208
    %v1247 = vmul.f32 %v1151, %v1204
    %v1248 = vmul.f32 %v1151, %v1208
    %v1249 = vmul.f32 %v1155, %v1204
    %v1250 = vmul.f32 %v1155, %v1208
    %v1251 = vmul.f32 %v1159, %v1204
    %v1252 = vmul.f32 %v1159, %v1208
    %v1253 = vmul.f32 %v1163, %v1204
    %v1254 = vmul.f32 %v1163, %v1208
    %v1255 = vmul.f32 %v1167, %v1204
    %v1256 = vmul.f32 %v1167, %v1208
    %v1257 = vmul.f32 %v1171, %v1204
    %v1258 = vmul.f32 %v1171, %v1208
    %v1259 = vmul.f32 %v1175, %v1204
    %v1260 = vmul.f32 %v1175, %v1208
    %v1261 = vmul.f32 %v1179, %v1204
    %v1262 = vmul.f32 %v1179, %v1208
    %v1263 = vmul.f32 %v1183, %v1204
    %v1264 = vmul.f32 %v1183, %v1208
    %v1265 = vmul.f32 %v1187, %v1204
    %v1266 = vmul.f32 %v1187, %v1208
    %v1267 = vmul.f32 %v1191, %v1204
    %v1268 = vmul.f32 %v1191, %v1208
    %v1269 = vmul.f32 %v1195, %v1204
    %v1270 = vmul.f32 %v1195, %v1208
    %v1271 = vmul.f32 %v1199, %v1204
    %v1272 = vmul.f32 %v1199, %v1208
    %1273 = vset.pattern.permute.xlu0 6
    %1274 = vperm.xlu0 %1273, %v19
    %v1275 = vpop.permute.xlu0 %1274
    %1277 = vset.pattern.permute.xlu0 6
    %1278 = vperm.xlu0 %1277, %v20
    %v1279 = vpop.permute.xlu0 %1278
    %1281 = vset.pattern.permute.xlu0 6
    %1282 = vperm.xlu0 %1281, %v21
    %v1283 = vpop.permute.xlu0 %1282
    %1285 = vset.pattern.permute.xlu0 6
    %1286 = vperm.xlu0 %1285, %v22
    %v1287 = vpop.permute.xlu0 %1286
    %1289 = vset.pattern.permute.xlu0 6
    %1290 = vperm.xlu0 %1289, %v23
    %v1291 = vpop.permute.xlu0 %1290
    %1293 = vset.pattern.permute.xlu0 6
    %1294 = vperm.xlu0 %1293, %v24
    %v1295 = vpop.permute.xlu0 %1294
    %1297 = vset.pattern.permute.xlu0 6
    %1298 = vperm.xlu0 %1297, %v25
    %v1299 = vpop.permute.xlu0 %1298
    %1301 = vset.pattern.permute.xlu0 6
    %1302 = vperm.xlu0 %1301, %v26
    %v1303 = vpop.permute.xlu0 %1302
    %1305 = vset.pattern.permute.xlu0 6
    %1306 = vperm.xlu0 %1305, %v27
    %v1307 = vpop.permute.xlu0 %1306
    %1309 = vset.pattern.permute.xlu0 6
    %1310 = vperm.xlu0 %1309, %v28
    %v1311 = vpop.permute.xlu0 %1310
    %1313 = vset.pattern.permute.xlu0 6
    %1314 = vperm.xlu0 %1313, %v29
    %v1315 = vpop.permute.xlu0 %1314
    %1317 = vset.pattern.permute.xlu0 6
    %1318 = vperm.xlu0 %1317, %v30
    %v1319 = vpop.permute.xlu0 %1318
    %1321 = vset.pattern.permute.xlu0 6
    %1322 = vperm.xlu0 %1321, %v31
    %v1323 = vpop.permute.xlu0 %1322
    %1325 = vset.pattern.permute.xlu0 6
    %1326 = vperm.xlu0 %1325, %v32
    %v1327 = vpop.permute.xlu0 %1326
    %1329 = vset.pattern.permute.xlu0 6
    %1330 = vperm.xlu0 %1329, %v33
    %v1331 = vpop.permute.xlu0 %1330
    %1333 = vset.pattern.permute.xlu0 6
    %1334 = vperm.xlu0 %1333, %v34
    %v1335 = vpop.permute.xlu0 %1334
    %1337 = vset.pattern.permute.xlu0 6
    %1338 = vperm.xlu0 %1337, %v35
    %v1339 = vpop.permute.xlu0 %1338
    %1341 = vset.pattern.permute.xlu0 6
    %1342 = vperm.xlu0 %1341, %v36
    %v1343 = vpop.permute.xlu0 %1342
    %1345 = vset.pattern.permute.xlu0 6
    %1346 = vperm.xlu0 %1345, %v37
    %v1347 = vpop.permute.xlu0 %1346
    %1349 = vset.pattern.permute.xlu0 6
    %1350 = vperm.xlu0 %1349, %v38
    %v1351 = vpop.permute.xlu0 %1350
    %1353 = vset.pattern.permute.xlu0 6
    %1354 = vperm.xlu0 %1353, %v39
    %v1355 = vpop.permute.xlu0 %1354
    %1357 = vset.pattern.permute.xlu0 6
    %1358 = vperm.xlu0 %1357, %v40
    %v1359 = vpop.permute.xlu0 %1358
    %1361 = vset.pattern.permute.xlu0 6
    %1362 = vperm.xlu0 %1361, %v41
    %v1363 = vpop.permute.xlu0 %1362
    %1365 = vset.pattern.permute.xlu0 6
    %1366 = vperm.xlu0 %1365, %v42
    %v1367 = vpop.permute.xlu0 %1366
    %1369 = vset.pattern.permute.xlu0 6
    %1370 = vperm.xlu0 %1369, %v43
    %v1371 = vpop.permute.xlu0 %1370
    %1373 = vset.pattern.permute.xlu0 6
    %1374 = vperm.xlu0 %1373, %v44
    %v1375 = vpop.permute.xlu0 %1374
    %1377 = vset.pattern.permute.xlu0 6
    %1378 = vperm.xlu0 %1377, %v45
    %v1379 = vpop.permute.xlu0 %1378
    %1381 = vset.pattern.permute.xlu0 6
    %1382 = vperm.xlu0 %1381, %v46
    %v1383 = vpop.permute.xlu0 %1382
    %1385 = vset.pattern.permute.xlu0 6
    %1386 = vperm.xlu0 %1385, %v47
    %v1387 = vpop.permute.xlu0 %1386
    %1389 = vset.pattern.permute.xlu0 6
    %1390 = vperm.xlu0 %1389, %v48
    %v1391 = vpop.permute.xlu0 %1390
    %1393 = vset.pattern.permute.xlu0 6
    %1394 = vperm.xlu0 %1393, %v49
    %v1395 = vpop.permute.xlu0 %1394
    %1397 = vset.pattern.permute.xlu0 6
    %1398 = vperm.xlu0 %1397, %v50
    %v1399 = vpop.permute.xlu0 %1398
    %v1401 = vlaneseq
    %v1402 = vshrl.u32 %v1401, 7
    %v1403 = vsub.s32 6, %v1402
    %v1404 = vrot.slane %v51, %v1403
    %v1405 = vlaneseq
    %v1406 = vshrl.u32 %v1405, 7
    %v1407 = vsub.s32 6, %v1406
    %v1408 = vrot.slane %v52, %v1407
    %v1409 = vmul.f32 %v1275, %v1404
    %v1410 = vmul.f32 %v1275, %v1408
    %v1411 = vmul.f32 %v1279, %v1404
    %v1412 = vmul.f32 %v1279, %v1408
    %v1413 = vmul.f32 %v1283, %v1404
    %v1414 = vmul.f32 %v1283, %v1408
    %v1415 = vmul.f32 %v1287, %v1404
    %v1416 = vmul.f32 %v1287, %v1408
    %v1417 = vmul.f32 %v1291, %v1404
    %v1418 = vmul.f32 %v1291, %v1408
    %v1419 = vmul.f32 %v1295, %v1404
    %v1420 = vmul.f32 %v1295, %v1408
    %v1421 = vmul.f32 %v1299, %v1404
    %v1422 = vmul.f32 %v1299, %v1408
    %v1423 = vmul.f32 %v1303, %v1404
    %v1424 = vmul.f32 %v1303, %v1408
    %v1425 = vmul.f32 %v1307, %v1404
    %v1426 = vmul.f32 %v1307, %v1408
    %v1427 = vmul.f32 %v1311, %v1404
    %v1428 = vmul.f32 %v1311, %v1408
    %v1429 = vmul.f32 %v1315, %v1404
    %v1430 = vmul.f32 %v1315, %v1408
    %v1431 = vmul.f32 %v1319, %v1404
    %v1432 = vmul.f32 %v1319, %v1408
    %v1433 = vmul.f32 %v1323, %v1404
    %v1434 = vmul.f32 %v1323, %v1408
    %v1435 = vmul.f32 %v1327, %v1404
    %v1436 = vmul.f32 %v1327, %v1408
    %v1437 = vmul.f32 %v1331, %v1404
    %v1438 = vmul.f32 %v1331, %v1408
    %v1439 = vmul.f32 %v1335, %v1404
    %v1440 = vmul.f32 %v1335, %v1408
    %v1441 = vmul.f32 %v1339, %v1404
    %v1442 = vmul.f32 %v1339, %v1408
    %v1443 = vmul.f32 %v1343, %v1404
    %v1444 = vmul.f32 %v1343, %v1408
    %v1445 = vmul.f32 %v1347, %v1404
    %v1446 = vmul.f32 %v1347, %v1408
    %v1447 = vmul.f32 %v1351, %v1404
    %v1448 = vmul.f32 %v1351, %v1408
    %v1449 = vmul.f32 %v1355, %v1404
    %v1450 = vmul.f32 %v1355, %v1408
    %v1451 = vmul.f32 %v1359, %v1404
    %v1452 = vmul.f32 %v1359, %v1408
    %v1453 = vmul.f32 %v1363, %v1404
    %v1454 = vmul.f32 %v1363, %v1408
    %v1455 = vmul.f32 %v1367, %v1404
    %v1456 = vmul.f32 %v1367, %v1408
    %v1457 = vmul.f32 %v1371, %v1404
    %v1458 = vmul.f32 %v1371, %v1408
    %v1459 = vmul.f32 %v1375, %v1404
    %v1460 = vmul.f32 %v1375, %v1408
    %v1461 = vmul.f32 %v1379, %v1404
    %v1462 = vmul.f32 %v1379, %v1408
    %v1463 = vmul.f32 %v1383, %v1404
    %v1464 = vmul.f32 %v1383, %v1408
    %v1465 = vmul.f32 %v1387, %v1404
    %v1466 = vmul.f32 %v1387, %v1408
    %v1467 = vmul.f32 %v1391, %v1404
    %v1468 = vmul.f32 %v1391, %v1408
    %v1469 = vmul.f32 %v1395, %v1404
    %v1470 = vmul.f32 %v1395, %v1408
    %v1471 = vmul.f32 %v1399, %v1404
    %v1472 = vmul.f32 %v1399, %v1408
    %v1473 = vadd.f32 %v1209, %v1409
    %v1474 = vadd.f32 %v1210, %v1410
    %v1475 = vadd.f32 %v1211, %v1411
    %v1476 = vadd.f32 %v1212, %v1412
    %v1477 = vadd.f32 %v1213, %v1413
    %v1478 = vadd.f32 %v1214, %v1414
    %v1479 = vadd.f32 %v1215, %v1415
    %v1480 = vadd.f32 %v1216, %v1416
    %v1481 = vadd.f32 %v1217, %v1417
    %v1482 = vadd.f32 %v1218, %v1418
    %v1483 = vadd.f32 %v1219, %v1419
    %v1484 = vadd.f32 %v1220, %v1420
    %v1485 = vadd.f32 %v1221, %v1421
    %v1486 = vadd.f32 %v1222, %v1422
    %v1487 = vadd.f32 %v1223, %v1423
    %v1488 = vadd.f32 %v1224, %v1424
    %v1489 = vadd.f32 %v1225, %v1425
    %v1490 = vadd.f32 %v1226, %v1426
    %v1491 = vadd.f32 %v1227, %v1427
    %v1492 = vadd.f32 %v1228, %v1428
    %v1493 = vadd.f32 %v1229, %v1429
    %v1494 = vadd.f32 %v1230, %v1430
    %v1495 = vadd.f32 %v1231, %v1431
    %v1496 = vadd.f32 %v1232, %v1432
    %v1497 = vadd.f32 %v1233, %v1433
    %v1498 = vadd.f32 %v1234, %v1434
    %v1499 = vadd.f32 %v1235, %v1435
    %v1500 = vadd.f32 %v1236, %v1436
    %v1501 = vadd.f32 %v1237, %v1437
    %v1502 = vadd.f32 %v1238, %v1438
    %v1503 = vadd.f32 %v1239, %v1439
    %v1504 = vadd.f32 %v1240, %v1440
    %v1505 = vadd.f32 %v1241, %v1441
    %v1506 = vadd.f32 %v1242, %v1442
    %v1507 = vadd.f32 %v1243, %v1443
    %v1508 = vadd.f32 %v1244, %v1444
    %v1509 = vadd.f32 %v1245, %v1445
    %v1510 = vadd.f32 %v1246, %v1446
    %v1511 = vadd.f32 %v1247, %v1447
    %v1512 = vadd.f32 %v1248, %v1448
    %v1513 = vadd.f32 %v1249, %v1449
    %v1514 = vadd.f32 %v1250, %v1450
    %v1515 = vadd.f32 %v1251, %v1451
    %v1516 = vadd.f32 %v1252, %v1452
    %v1517 = vadd.f32 %v1253, %v1453
    %v1518 = vadd.f32 %v1254, %v1454
    %v1519 = vadd.f32 %v1255, %v1455
    %v1520 = vadd.f32 %v1256, %v1456
    %v1521 = vadd.f32 %v1257, %v1457
    %v1522 = vadd.f32 %v1258, %v1458
    %v1523 = vadd.f32 %v1259, %v1459
    %v1524 = vadd.f32 %v1260, %v1460
    %v1525 = vadd.f32 %v1261, %v1461
    %v1526 = vadd.f32 %v1262, %v1462
    %v1527 = vadd.f32 %v1263, %v1463
    %v1528 = vadd.f32 %v1264, %v1464
    %v1529 = vadd.f32 %v1265, %v1465
    %v1530 = vadd.f32 %v1266, %v1466
    %v1531 = vadd.f32 %v1267, %v1467
    %v1532 = vadd.f32 %v1268, %v1468
    %v1533 = vadd.f32 %v1269, %v1469
    %v1534 = vadd.f32 %v1270, %v1470
    %v1535 = vadd.f32 %v1271, %v1471
    %v1536 = vadd.f32 %v1272, %v1472
    %s1537 = sld [smem:[#allocation3 + $0x1]]
    %v1538 = vstv %s1537
    %v1539 = vmul.f32 %v1538, %v287
    %v1540 = vmul.f32 %v1538, %v288
    %v1541 = vmul.f32 %v1538, %v289
    %v1542 = vmul.f32 %v1538, %v290
    %v1543 = vmul.f32 %v1538, %v291
    %v1544 = vmul.f32 %v1538, %v292
    %v1545 = vmul.f32 %v1538, %v293
    %v1546 = vmul.f32 %v1538, %v294
    %v1547 = vmul.f32 %v1538, %v295
    %v1548 = vmul.f32 %v1538, %v296
    %v1549 = vmul.f32 %v1538, %v297
    %v1550 = vmul.f32 %v1538, %v298
    %v1551 = vmul.f32 %v1538, %v299
    %v1552 = vmul.f32 %v1538, %v300
    %v1553 = vmul.f32 %v1538, %v301
    %v1554 = vmul.f32 %v1538, %v302
    %v1555 = vmul.f32 %v1538, %v303
    %v1556 = vmul.f32 %v1538, %v304
    %v1557 = vmul.f32 %v1538, %v305
    %v1558 = vmul.f32 %v1538, %v306
    %v1559 = vmul.f32 %v1538, %v307
    %v1560 = vmul.f32 %v1538, %v308
    %v1561 = vmul.f32 %v1538, %v309
    %v1562 = vmul.f32 %v1538, %v310
    %v1563 = vmul.f32 %v1538, %v311
    %v1564 = vmul.f32 %v1538, %v312
    %v1565 = vmul.f32 %v1538, %v313
    %v1566 = vmul.f32 %v1538, %v314
    %v1567 = vmul.f32 %v1538, %v315
    %v1568 = vmul.f32 %v1538, %v316
    %v1569 = vmul.f32 %v1538, %v317
    %v1570 = vmul.f32 %v1538, %v318
    %v1571 = vmul.f32 %v1538, %v319
    %v1572 = vmul.f32 %v1538, %v320
    %v1573 = vmul.f32 %v1538, %v321
    %v1574 = vmul.f32 %v1538, %v322
    %v1575 = vmul.f32 %v1538, %v323
    %v1576 = vmul.f32 %v1538, %v324
    %v1577 = vmul.f32 %v1538, %v325
    %v1578 = vmul.f32 %v1538, %v326
    %v1579 = vmul.f32 %v1538, %v327
    %v1580 = vmul.f32 %v1538, %v328
    %v1581 = vmul.f32 %v1538, %v329
    %v1582 = vmul.f32 %v1538, %v330
    %v1583 = vmul.f32 %v1538, %v331
    %v1584 = vmul.f32 %v1538, %v332
    %v1585 = vmul.f32 %v1538, %v333
    %v1586 = vmul.f32 %v1538, %v334
    %v1587 = vmul.f32 %v1538, %v335
    %v1588 = vmul.f32 %v1538, %v336
    %v1589 = vmul.f32 %v1538, %v337
    %v1590 = vmul.f32 %v1538, %v338
    %v1591 = vmul.f32 %v1538, %v339
    %v1592 = vmul.f32 %v1538, %v340
    %v1593 = vmul.f32 %v1538, %v341
    %v1594 = vmul.f32 %v1538, %v342
    %v1595 = vmul.f32 %v1538, %v343
    %v1596 = vmul.f32 %v1538, %v344
    %v1597 = vmul.f32 %v1538, %v345
    %v1598 = vmul.f32 %v1538, %v346
    %v1599 = vmul.f32 %v1538, %v347
    %v1600 = vmul.f32 %v1538, %v348
    %v1601 = vmul.f32 %v1538, %v349
    %v1602 = vmul.f32 %v1538, %v350
    %v1603 = vmul.f32 %v1539, 1.442695
    %v1604 = vpow.pop %v1603
    %v1605 = vmul.f32 %v1540, 1.442695
    %v1606 = vpow.pop %v1605
    %v1607 = vmul.f32 %v1541, 1.442695
    %v1608 = vpow.pop %v1607
    %v1609 = vmul.f32 %v1542, 1.442695
    %v1610 = vpow.pop %v1609
    %v1611 = vmul.f32 %v1543, 1.442695
    %v1612 = vpow.pop %v1611
    %v1613 = vmul.f32 %v1544, 1.442695
    %v1614 = vpow.pop %v1613
    %v1615 = vmul.f32 %v1545, 1.442695
    %v1616 = vpow.pop %v1615
    %v1617 = vmul.f32 %v1546, 1.442695
    %v1618 = vpow.pop %v1617
    %v1619 = vmul.f32 %v1547, 1.442695
    %v1620 = vpow.pop %v1619
    %v1621 = vmul.f32 %v1548, 1.442695
    %v1622 = vpow.pop %v1621
    %v1623 = vmul.f32 %v1549, 1.442695
    %v1624 = vpow.pop %v1623
    %v1625 = vmul.f32 %v1550, 1.442695
    %v1626 = vpow.pop %v1625
    %v1627 = vmul.f32 %v1551, 1.442695
    %v1628 = vpow.pop %v1627
    %v1629 = vmul.f32 %v1552, 1.442695
    %v1630 = vpow.pop %v1629
    %v1631 = vmul.f32 %v1553, 1.442695
    %v1632 = vpow.pop %v1631
    %v1633 = vmul.f32 %v1554, 1.442695
    %v1634 = vpow.pop %v1633
    %v1635 = vmul.f32 %v1555, 1.442695
    %v1636 = vpow.pop %v1635
    %v1637 = vmul.f32 %v1556, 1.442695
    %v1638 = vpow.pop %v1637
    %v1639 = vmul.f32 %v1557, 1.442695
    %v1640 = vpow.pop %v1639
    %v1641 = vmul.f32 %v1558, 1.442695
    %v1642 = vpow.pop %v1641
    %v1643 = vmul.f32 %v1559, 1.442695
    %v1644 = vpow.pop %v1643
    %v1645 = vmul.f32 %v1560, 1.442695
    %v1646 = vpow.pop %v1645
    %v1647 = vmul.f32 %v1561, 1.442695
    %v1648 = vpow.pop %v1647
    %v1649 = vmul.f32 %v1562, 1.442695
    %v1650 = vpow.pop %v1649
    %v1651 = vmul.f32 %v1563, 1.442695
    %v1652 = vpow.pop %v1651
    %v1653 = vmul.f32 %v1564, 1.442695
    %v1654 = vpow.pop %v1653
    %v1655 = vmul.f32 %v1565, 1.442695
    %v1656 = vpow.pop %v1655
    %v1657 = vmul.f32 %v1566, 1.442695
    %v1658 = vpow.pop %v1657
    %v1659 = vmul.f32 %v1567, 1.442695
    %v1660 = vpow.pop %v1659
    %v1661 = vmul.f32 %v1568, 1.442695
    %v1662 = vpow.pop %v1661
    %v1663 = vmul.f32 %v1569, 1.442695
    %v1664 = vpow.pop %v1663
    %v1665 = vmul.f32 %v1570, 1.442695
    %v1666 = vpow.pop %v1665
    %v1667 = vmul.f32 %v1571, 1.442695
    %v1668 = vpow.pop %v1667
    %v1669 = vmul.f32 %v1572, 1.442695
    %v1670 = vpow.pop %v1669
    %v1671 = vmul.f32 %v1573, 1.442695
    %v1672 = vpow.pop %v1671
    %v1673 = vmul.f32 %v1574, 1.442695
    %v1674 = vpow.pop %v1673
    %v1675 = vmul.f32 %v1575, 1.442695
    %v1676 = vpow.pop %v1675
    %v1677 = vmul.f32 %v1576, 1.442695
    %v1678 = vpow.pop %v1677
    %v1679 = vmul.f32 %v1577, 1.442695
    %v1680 = vpow.pop %v1679
    %v1681 = vmul.f32 %v1578, 1.442695
    %v1682 = vpow.pop %v1681
    %v1683 = vmul.f32 %v1579, 1.442695
    %v1684 = vpow.pop %v1683
    %v1685 = vmul.f32 %v1580, 1.442695
    %v1686 = vpow.pop %v1685
    %v1687 = vmul.f32 %v1581, 1.442695
    %v1688 = vpow.pop %v1687
    %v1689 = vmul.f32 %v1582, 1.442695
    %v1690 = vpow.pop %v1689
    %v1691 = vmul.f32 %v1583, 1.442695
    %v1692 = vpow.pop %v1691
    %v1693 = vmul.f32 %v1584, 1.442695
    %v1694 = vpow.pop %v1693
    %v1695 = vmul.f32 %v1585, 1.442695
    %v1696 = vpow.pop %v1695
    %v1697 = vmul.f32 %v1586, 1.442695
    %v1698 = vpow.pop %v1697
    %v1699 = vmul.f32 %v1587, 1.442695
    %v1700 = vpow.pop %v1699
    %v1701 = vmul.f32 %v1588, 1.442695
    %v1702 = vpow.pop %v1701
    %v1703 = vmul.f32 %v1589, 1.442695
    %v1704 = vpow.pop %v1703
    %v1705 = vmul.f32 %v1590, 1.442695
    %v1706 = vpow.pop %v1705
    %v1707 = vmul.f32 %v1591, 1.442695
    %v1708 = vpow.pop %v1707
    %v1709 = vmul.f32 %v1592, 1.442695
    %v1710 = vpow.pop %v1709
    %v1711 = vmul.f32 %v1593, 1.442695
    %v1712 = vpow.pop %v1711
    %v1713 = vmul.f32 %v1594, 1.442695
    %v1714 = vpow.pop %v1713
    %v1715 = vmul.f32 %v1595, 1.442695
    %v1716 = vpow.pop %v1715
    %v1717 = vmul.f32 %v1596, 1.442695
    %v1718 = vpow.pop %v1717
    %v1719 = vmul.f32 %v1597, 1.442695
    %v1720 = vpow.pop %v1719
    %v1721 = vmul.f32 %v1598, 1.442695
    %v1722 = vpow.pop %v1721
    %v1723 = vmul.f32 %v1599, 1.442695
    %v1724 = vpow.pop %v1723
    %v1725 = vmul.f32 %v1600, 1.442695
    %v1726 = vpow.pop %v1725
    %v1727 = vmul.f32 %v1601, 1.442695
    %v1728 = vpow.pop %v1727
    %v1729 = vmul.f32 %v1602, 1.442695
    %v1730 = vpow.pop %v1729
    %v1731 = vmul.f32 %v1604, %v1473
    %v1732 = vmul.f32 %v1606, %v1474
    %v1733 = vmul.f32 %v1608, %v1475
    %v1734 = vmul.f32 %v1610, %v1476
    %v1735 = vmul.f32 %v1612, %v1477
    %v1736 = vmul.f32 %v1614, %v1478
    %v1737 = vmul.f32 %v1616, %v1479
    %v1738 = vmul.f32 %v1618, %v1480
    %v1739 = vmul.f32 %v1620, %v1481
    %v1740 = vmul.f32 %v1622, %v1482
    %v1741 = vmul.f32 %v1624, %v1483
    %v1742 = vmul.f32 %v1626, %v1484
    %v1743 = vmul.f32 %v1628, %v1485
    %v1744 = vmul.f32 %v1630, %v1486
    %v1745 = vmul.f32 %v1632, %v1487
    %v1746 = vmul.f32 %v1634, %v1488
    %v1747 = vmul.f32 %v1636, %v1489
    %v1748 = vmul.f32 %v1638, %v1490
    %v1749 = vmul.f32 %v1640, %v1491
    %v1750 = vmul.f32 %v1642, %v1492
    %v1751 = vmul.f32 %v1644, %v1493
    %v1752 = vmul.f32 %v1646, %v1494
    %v1753 = vmul.f32 %v1648, %v1495
    %v1754 = vmul.f32 %v1650, %v1496
    %v1755 = vmul.f32 %v1652, %v1497
    %v1756 = vmul.f32 %v1654, %v1498
    %v1757 = vmul.f32 %v1656, %v1499
    %v1758 = vmul.f32 %v1658, %v1500
    %v1759 = vmul.f32 %v1660, %v1501
    %v1760 = vmul.f32 %v1662, %v1502
    %v1761 = vmul.f32 %v1664, %v1503
    %v1762 = vmul.f32 %v1666, %v1504
    %v1763 = vmul.f32 %v1668, %v1505
    %v1764 = vmul.f32 %v1670, %v1506
    %v1765 = vmul.f32 %v1672, %v1507
    %v1766 = vmul.f32 %v1674, %v1508
    %v1767 = vmul.f32 %v1676, %v1509
    %v1768 = vmul.f32 %v1678, %v1510
    %v1769 = vmul.f32 %v1680, %v1511
    %v1770 = vmul.f32 %v1682, %v1512
    %v1771 = vmul.f32 %v1684, %v1513
    %v1772 = vmul.f32 %v1686, %v1514
    %v1773 = vmul.f32 %v1688, %v1515
    %v1774 = vmul.f32 %v1690, %v1516
    %v1775 = vmul.f32 %v1692, %v1517
    %v1776 = vmul.f32 %v1694, %v1518
    %v1777 = vmul.f32 %v1696, %v1519
    %v1778 = vmul.f32 %v1698, %v1520
    %v1779 = vmul.f32 %v1700, %v1521
    %v1780 = vmul.f32 %v1702, %v1522
    %v1781 = vmul.f32 %v1704, %v1523
    %v1782 = vmul.f32 %v1706, %v1524
    %v1783 = vmul.f32 %v1708, %v1525
    %v1784 = vmul.f32 %v1710, %v1526
    %v1785 = vmul.f32 %v1712, %v1527
    %v1786 = vmul.f32 %v1714, %v1528
    %v1787 = vmul.f32 %v1716, %v1529
    %v1788 = vmul.f32 %v1718, %v1530
    %v1789 = vmul.f32 %v1720, %v1531
    %v1790 = vmul.f32 %v1722, %v1532
    %v1791 = vmul.f32 %v1724, %v1533
    %v1792 = vmul.f32 %v1726, %v1534
    %v1793 = vmul.f32 %v1728, %v1535
    %v1794 = vmul.f32 %v1730, %v1536
    %v1795 = vadd.f32 %v1009, %v1731
    %v1796 = vadd.f32 %v1010, %v1732
    %v1797 = vadd.f32 %v1011, %v1733
    %v1798 = vadd.f32 %v1012, %v1734
    %v1799 = vadd.f32 %v1013, %v1735
    %v1800 = vadd.f32 %v1014, %v1736
    %v1801 = vadd.f32 %v1015, %v1737
    %v1802 = vadd.f32 %v1016, %v1738
    %v1803 = vadd.f32 %v1017, %v1739
    %v1804 = vadd.f32 %v1018, %v1740
    %v1805 = vadd.f32 %v1019, %v1741
    %v1806 = vadd.f32 %v1020, %v1742
    %v1807 = vadd.f32 %v1021, %v1743
    %v1808 = vadd.f32 %v1022, %v1744
    %v1809 = vadd.f32 %v1023, %v1745
    %v1810 = vadd.f32 %v1024, %v1746
    %v1811 = vadd.f32 %v1025, %v1747
    %v1812 = vadd.f32 %v1026, %v1748
    %v1813 = vadd.f32 %v1027, %v1749
    %v1814 = vadd.f32 %v1028, %v1750
    %v1815 = vadd.f32 %v1029, %v1751
    %v1816 = vadd.f32 %v1030, %v1752
    %v1817 = vadd.f32 %v1031, %v1753
    %v1818 = vadd.f32 %v1032, %v1754
    %v1819 = vadd.f32 %v1033, %v1755
    %v1820 = vadd.f32 %v1034, %v1756
    %v1821 = vadd.f32 %v1035, %v1757
    %v1822 = vadd.f32 %v1036, %v1758
    %v1823 = vadd.f32 %v1037, %v1759
    %v1824 = vadd.f32 %v1038, %v1760
    %v1825 = vadd.f32 %v1039, %v1761
    %v1826 = vadd.f32 %v1040, %v1762
    %v1827 = vadd.f32 %v1041, %v1763
    %v1828 = vadd.f32 %v1042, %v1764
    %v1829 = vadd.f32 %v1043, %v1765
    %v1830 = vadd.f32 %v1044, %v1766
    %v1831 = vadd.f32 %v1045, %v1767
    %v1832 = vadd.f32 %v1046, %v1768
    %v1833 = vadd.f32 %v1047, %v1769
    %v1834 = vadd.f32 %v1048, %v1770
    %v1835 = vadd.f32 %v1049, %v1771
    %v1836 = vadd.f32 %v1050, %v1772
    %v1837 = vadd.f32 %v1051, %v1773
    %v1838 = vadd.f32 %v1052, %v1774
    %v1839 = vadd.f32 %v1053, %v1775
    %v1840 = vadd.f32 %v1054, %v1776
    %v1841 = vadd.f32 %v1055, %v1777
    %v1842 = vadd.f32 %v1056, %v1778
    %v1843 = vadd.f32 %v1057, %v1779
    %v1844 = vadd.f32 %v1058, %v1780
    %v1845 = vadd.f32 %v1059, %v1781
    %v1846 = vadd.f32 %v1060, %v1782
    %v1847 = vadd.f32 %v1061, %v1783
    %v1848 = vadd.f32 %v1062, %v1784
    %v1849 = vadd.f32 %v1063, %v1785
    %v1850 = vadd.f32 %v1064, %v1786
    %v1851 = vadd.f32 %v1065, %v1787
    %v1852 = vadd.f32 %v1066, %v1788
    %v1853 = vadd.f32 %v1067, %v1789
    %v1854 = vadd.f32 %v1068, %v1790
    %v1855 = vadd.f32 %v1069, %v1791
    %v1856 = vadd.f32 %v1070, %v1792
    %v1857 = vadd.f32 %v1071, %v1793
    %v1858 = vadd.f32 %v1072, %v1794
    %1859 = vset.pattern.permute.xlu0 3
    %1860 = vperm.xlu0 %1859, %v19
    %v1861 = vpop.permute.xlu0 %1860
    %1863 = vset.pattern.permute.xlu0 3
    %1864 = vperm.xlu0 %1863, %v20
    %v1865 = vpop.permute.xlu0 %1864
    %1867 = vset.pattern.permute.xlu0 3
    %1868 = vperm.xlu0 %1867, %v21
    %v1869 = vpop.permute.xlu0 %1868
    %1871 = vset.pattern.permute.xlu0 3
    %1872 = vperm.xlu0 %1871, %v22
    %v1873 = vpop.permute.xlu0 %1872
    %1875 = vset.pattern.permute.xlu0 3
    %1876 = vperm.xlu0 %1875, %v23
    %v1877 = vpop.permute.xlu0 %1876
    %1879 = vset.pattern.permute.xlu0 3
    %1880 = vperm.xlu0 %1879, %v24
    %v1881 = vpop.permute.xlu0 %1880
    %1883 = vset.pattern.permute.xlu0 3
    %1884 = vperm.xlu0 %1883, %v25
    %v1885 = vpop.permute.xlu0 %1884
    %1887 = vset.pattern.permute.xlu0 3
    %1888 = vperm.xlu0 %1887, %v26
    %v1889 = vpop.permute.xlu0 %1888
    %1891 = vset.pattern.permute.xlu0 3
    %1892 = vperm.xlu0 %1891, %v27
    %v1893 = vpop.permute.xlu0 %1892
    %1895 = vset.pattern.permute.xlu0 3
    %1896 = vperm.xlu0 %1895, %v28
    %v1897 = vpop.permute.xlu0 %1896
    %1899 = vset.pattern.permute.xlu0 3
    %1900 = vperm.xlu0 %1899, %v29
    %v1901 = vpop.permute.xlu0 %1900
    %1903 = vset.pattern.permute.xlu0 3
    %1904 = vperm.xlu0 %1903, %v30
    %v1905 = vpop.permute.xlu0 %1904
    %1907 = vset.pattern.permute.xlu0 3
    %1908 = vperm.xlu0 %1907, %v31
    %v1909 = vpop.permute.xlu0 %1908
    %1911 = vset.pattern.permute.xlu0 3
    %1912 = vperm.xlu0 %1911, %v32
    %v1913 = vpop.permute.xlu0 %1912
    %1915 = vset.pattern.permute.xlu0 3
    %1916 = vperm.xlu0 %1915, %v33
    %v1917 = vpop.permute.xlu0 %1916
    %1919 = vset.pattern.permute.xlu0 3
    %1920 = vperm.xlu0 %1919, %v34
    %v1921 = vpop.permute.xlu0 %1920
    %1923 = vset.pattern.permute.xlu0 3
    %1924 = vperm.xlu0 %1923, %v35
    %v1925 = vpop.permute.xlu0 %1924
    %1927 = vset.pattern.permute.xlu0 3
    %1928 = vperm.xlu0 %1927, %v36
    %v1929 = vpop.permute.xlu0 %1928
    %1931 = vset.pattern.permute.xlu0 3
    %1932 = vperm.xlu0 %1931, %v37
    %v1933 = vpop.permute.xlu0 %1932
    %1935 = vset.pattern.permute.xlu0 3
    %1936 = vperm.xlu0 %1935, %v38
    %v1937 = vpop.permute.xlu0 %1936
    %1939 = vset.pattern.permute.xlu0 3
    %1940 = vperm.xlu0 %1939, %v39
    %v1941 = vpop.permute.xlu0 %1940
    %1943 = vset.pattern.permute.xlu0 3
    %1944 = vperm.xlu0 %1943, %v40
    %v1945 = vpop.permute.xlu0 %1944
    %1947 = vset.pattern.permute.xlu0 3
    %1948 = vperm.xlu0 %1947, %v41
    %v1949 = vpop.permute.xlu0 %1948
    %1951 = vset.pattern.permute.xlu0 3
    %1952 = vperm.xlu0 %1951, %v42
    %v1953 = vpop.permute.xlu0 %1952
    %1955 = vset.pattern.permute.xlu0 3
    %1956 = vperm.xlu0 %1955, %v43
    %v1957 = vpop.permute.xlu0 %1956
    %1959 = vset.pattern.permute.xlu0 3
    %1960 = vperm.xlu0 %1959, %v44
    %v1961 = vpop.permute.xlu0 %1960
    %1963 = vset.pattern.permute.xlu0 3
    %1964 = vperm.xlu0 %1963, %v45
    %v1965 = vpop.permute.xlu0 %1964
    %1967 = vset.pattern.permute.xlu0 3
    %1968 = vperm.xlu0 %1967, %v46
    %v1969 = vpop.permute.xlu0 %1968
    %1971 = vset.pattern.permute.xlu0 3
    %1972 = vperm.xlu0 %1971, %v47
    %v1973 = vpop.permute.xlu0 %1972
    %1975 = vset.pattern.permute.xlu0 3
    %1976 = vperm.xlu0 %1975, %v48
    %v1977 = vpop.permute.xlu0 %1976
    %1979 = vset.pattern.permute.xlu0 3
    %1980 = vperm.xlu0 %1979, %v49
    %v1981 = vpop.permute.xlu0 %1980
    %1983 = vset.pattern.permute.xlu0 3
    %1984 = vperm.xlu0 %1983, %v50
    %v1985 = vpop.permute.xlu0 %1984
    %v1987 = vlaneseq
    %v1988 = vshrl.u32 %v1987, 7
    %v1989 = vsub.s32 3, %v1988
    %v1990 = vrot.slane %v51, %v1989
    %v1991 = vlaneseq
    %v1992 = vshrl.u32 %v1991, 7
    %v1993 = vsub.s32 3, %v1992
    %v1994 = vrot.slane %v52, %v1993
    %v1995 = vmul.f32 %v1861, %v1990
    %v1996 = vmul.f32 %v1861, %v1994
    %v1997 = vmul.f32 %v1865, %v1990
    %v1998 = vmul.f32 %v1865, %v1994
    %v1999 = vmul.f32 %v1869, %v1990
    %v2000 = vmul.f32 %v1869, %v1994
    %v2001 = vmul.f32 %v1873, %v1990
    %v2002 = vmul.f32 %v1873, %v1994
    %v2003 = vmul.f32 %v1877, %v1990
    %v2004 = vmul.f32 %v1877, %v1994
    %v2005 = vmul.f32 %v1881, %v1990
    %v2006 = vmul.f32 %v1881, %v1994
    %v2007 = vmul.f32 %v1885, %v1990
    %v2008 = vmul.f32 %v1885, %v1994
    %v2009 = vmul.f32 %v1889, %v1990
    %v2010 = vmul.f32 %v1889, %v1994
    %v2011 = vmul.f32 %v1893, %v1990
    %v2012 = vmul.f32 %v1893, %v1994
    %v2013 = vmul.f32 %v1897, %v1990
    %v2014 = vmul.f32 %v1897, %v1994
    %v2015 = vmul.f32 %v1901, %v1990
    %v2016 = vmul.f32 %v1901, %v1994
    %v2017 = vmul.f32 %v1905, %v1990
    %v2018 = vmul.f32 %v1905, %v1994
    %v2019 = vmul.f32 %v1909, %v1990
    %v2020 = vmul.f32 %v1909, %v1994
    %v2021 = vmul.f32 %v1913, %v1990
    %v2022 = vmul.f32 %v1913, %v1994
    %v2023 = vmul.f32 %v1917, %v1990
    %v2024 = vmul.f32 %v1917, %v1994
    %v2025 = vmul.f32 %v1921, %v1990
    %v2026 = vmul.f32 %v1921, %v1994
    %v2027 = vmul.f32 %v1925, %v1990
    %v2028 = vmul.f32 %v1925, %v1994
    %v2029 = vmul.f32 %v1929, %v1990
    %v2030 = vmul.f32 %v1929, %v1994
    %v2031 = vmul.f32 %v1933, %v1990
    %v2032 = vmul.f32 %v1933, %v1994
    %v2033 = vmul.f32 %v1937, %v1990
    %v2034 = vmul.f32 %v1937, %v1994
    %v2035 = vmul.f32 %v1941, %v1990
    %v2036 = vmul.f32 %v1941, %v1994
    %v2037 = vmul.f32 %v1945, %v1990
    %v2038 = vmul.f32 %v1945, %v1994
    %v2039 = vmul.f32 %v1949, %v1990
    %v2040 = vmul.f32 %v1949, %v1994
    %v2041 = vmul.f32 %v1953, %v1990
    %v2042 = vmul.f32 %v1953, %v1994
    %v2043 = vmul.f32 %v1957, %v1990
    %v2044 = vmul.f32 %v1957, %v1994
    %v2045 = vmul.f32 %v1961, %v1990
    %v2046 = vmul.f32 %v1961, %v1994
    %v2047 = vmul.f32 %v1965, %v1990
    %v2048 = vmul.f32 %v1965, %v1994
    %v2049 = vmul.f32 %v1969, %v1990
    %v2050 = vmul.f32 %v1969, %v1994
    %v2051 = vmul.f32 %v1973, %v1990
    %v2052 = vmul.f32 %v1973, %v1994
    %v2053 = vmul.f32 %v1977, %v1990
    %v2054 = vmul.f32 %v1977, %v1994
    %v2055 = vmul.f32 %v1981, %v1990
    %v2056 = vmul.f32 %v1981, %v1994
    %v2057 = vmul.f32 %v1985, %v1990
    %v2058 = vmul.f32 %v1985, %v1994
    %2059 = vset.pattern.permute.xlu0 7
    %2060 = vperm.xlu0 %2059, %v19
    %v2061 = vpop.permute.xlu0 %2060
    %2063 = vset.pattern.permute.xlu0 7
    %2064 = vperm.xlu0 %2063, %v20
    %v2065 = vpop.permute.xlu0 %2064
    %2067 = vset.pattern.permute.xlu0 7
    %2068 = vperm.xlu0 %2067, %v21
    %v2069 = vpop.permute.xlu0 %2068
    %2071 = vset.pattern.permute.xlu0 7
    %2072 = vperm.xlu0 %2071, %v22
    %v2073 = vpop.permute.xlu0 %2072
    %2075 = vset.pattern.permute.xlu0 7
    %2076 = vperm.xlu0 %2075, %v23
    %v2077 = vpop.permute.xlu0 %2076
    %2079 = vset.pattern.permute.xlu0 7
    %2080 = vperm.xlu0 %2079, %v24
    %v2081 = vpop.permute.xlu0 %2080
    %2083 = vset.pattern.permute.xlu0 7
    %2084 = vperm.xlu0 %2083, %v25
    %v2085 = vpop.permute.xlu0 %2084
    %2087 = vset.pattern.permute.xlu0 7
    %2088 = vperm.xlu0 %2087, %v26
    %v2089 = vpop.permute.xlu0 %2088
    %2091 = vset.pattern.permute.xlu0 7
    %2092 = vperm.xlu0 %2091, %v27
    %v2093 = vpop.permute.xlu0 %2092
    %2095 = vset.pattern.permute.xlu0 7
    %2096 = vperm.xlu0 %2095, %v28
    %v2097 = vpop.permute.xlu0 %2096
    %2099 = vset.pattern.permute.xlu0 7
    %2100 = vperm.xlu0 %2099, %v29
    %v2101 = vpop.permute.xlu0 %2100
    %2103 = vset.pattern.permute.xlu0 7
    %2104 = vperm.xlu0 %2103, %v30
    %v2105 = vpop.permute.xlu0 %2104
    %2107 = vset.pattern.permute.xlu0 7
    %2108 = vperm.xlu0 %2107, %v31
    %v2109 = vpop.permute.xlu0 %2108
    %2111 = vset.pattern.permute.xlu0 7
    %2112 = vperm.xlu0 %2111, %v32
    %v2113 = vpop.permute.xlu0 %2112
    %2115 = vset.pattern.permute.xlu0 7
    %2116 = vperm.xlu0 %2115, %v33
    %v2117 = vpop.permute.xlu0 %2116
    %2119 = vset.pattern.permute.xlu0 7
    %2120 = vperm.xlu0 %2119, %v34
    %v2121 = vpop.permute.xlu0 %2120
    %2123 = vset.pattern.permute.xlu0 7
    %2124 = vperm.xlu0 %2123, %v35
    %v2125 = vpop.permute.xlu0 %2124
    %2127 = vset.pattern.permute.xlu0 7
    %2128 = vperm.xlu0 %2127, %v36
    %v2129 = vpop.permute.xlu0 %2128
    %2131 = vset.pattern.permute.xlu0 7
    %2132 = vperm.xlu0 %2131, %v37
    %v2133 = vpop.permute.xlu0 %2132
    %2135 = vset.pattern.permute.xlu0 7
    %2136 = vperm.xlu0 %2135, %v38
    %v2137 = vpop.permute.xlu0 %2136
    %2139 = vset.pattern.permute.xlu0 7
    %2140 = vperm.xlu0 %2139, %v39
    %v2141 = vpop.permute.xlu0 %2140
    %2143 = vset.pattern.permute.xlu0 7
    %2144 = vperm.xlu0 %2143, %v40
    %v2145 = vpop.permute.xlu0 %2144
    %2147 = vset.pattern.permute.xlu0 7
    %2148 = vperm.xlu0 %2147, %v41
    %v2149 = vpop.permute.xlu0 %2148
    %2151 = vset.pattern.permute.xlu0 7
    %2152 = vperm.xlu0 %2151, %v42
    %v2153 = vpop.permute.xlu0 %2152
    %2155 = vset.pattern.permute.xlu0 7
    %2156 = vperm.xlu0 %2155, %v43
    %v2157 = vpop.permute.xlu0 %2156
    %2159 = vset.pattern.permute.xlu0 7
    %2160 = vperm.xlu0 %2159, %v44
    %v2161 = vpop.permute.xlu0 %2160
    %2163 = vset.pattern.permute.xlu0 7
    %2164 = vperm.xlu0 %2163, %v45
    %v2165 = vpop.permute.xlu0 %2164
    %2167 = vset.pattern.permute.xlu0 7
    %2168 = vperm.xlu0 %2167, %v46
    %v2169 = vpop.permute.xlu0 %2168
    %2171 = vset.pattern.permute.xlu0 7
    %2172 = vperm.xlu0 %2171, %v47
    %v2173 = vpop.permute.xlu0 %2172
    %2175 = vset.pattern.permute.xlu0 7
    %2176 = vperm.xlu0 %2175, %v48
    %v2177 = vpop.permute.xlu0 %2176
    %2179 = vset.pattern.permute.xlu0 7
    %2180 = vperm.xlu0 %2179, %v49
    %v2181 = vpop.permute.xlu0 %2180
    %2183 = vset.pattern.permute.xlu0 7
    %2184 = vperm.xlu0 %2183, %v50
    %v2185 = vpop.permute.xlu0 %2184
    %v2187 = vlaneseq
    %v2188 = vshrl.u32 %v2187, 7
    %v2189 = vsub.s32 7, %v2188
    %v2190 = vrot.slane %v51, %v2189
    %v2191 = vlaneseq
    %v2192 = vshrl.u32 %v2191, 7
    %v2193 = vsub.s32 7, %v2192
    %v2194 = vrot.slane %v52, %v2193
    %v2195 = vmul.f32 %v2061, %v2190
    %v2196 = vmul.f32 %v2061, %v2194
    %v2197 = vmul.f32 %v2065, %v2190
    %v2198 = vmul.f32 %v2065, %v2194
    %v2199 = vmul.f32 %v2069, %v2190
    %v2200 = vmul.f32 %v2069, %v2194
    %v2201 = vmul.f32 %v2073, %v2190
    %v2202 = vmul.f32 %v2073, %v2194
    %v2203 = vmul.f32 %v2077, %v2190
    %v2204 = vmul.f32 %v2077, %v2194
    %v2205 = vmul.f32 %v2081, %v2190
    %v2206 = vmul.f32 %v2081, %v2194
    %v2207 = vmul.f32 %v2085, %v2190
    %v2208 = vmul.f32 %v2085, %v2194
    %v2209 = vmul.f32 %v2089, %v2190
    %v2210 = vmul.f32 %v2089, %v2194
    %v2211 = vmul.f32 %v2093, %v2190
    %v2212 = vmul.f32 %v2093, %v2194
    %v2213 = vmul.f32 %v2097, %v2190
    %v2214 = vmul.f32 %v2097, %v2194
    %v2215 = vmul.f32 %v2101, %v2190
    %v2216 = vmul.f32 %v2101, %v2194
    %v2217 = vmul.f32 %v2105, %v2190
    %v2218 = vmul.f32 %v2105, %v2194
    %v2219 = vmul.f32 %v2109, %v2190
    %v2220 = vmul.f32 %v2109, %v2194
    %v2221 = vmul.f32 %v2113, %v2190
    %v2222 = vmul.f32 %v2113, %v2194
    %v2223 = vmul.f32 %v2117, %v2190
    %v2224 = vmul.f32 %v2117, %v2194
    %v2225 = vmul.f32 %v2121, %v2190
    %v2226 = vmul.f32 %v2121, %v2194
    %v2227 = vmul.f32 %v2125, %v2190
    %v2228 = vmul.f32 %v2125, %v2194
    %v2229 = vmul.f32 %v2129, %v2190
    %v2230 = vmul.f32 %v2129, %v2194
    %v2231 = vmul.f32 %v2133, %v2190
    %v2232 = vmul.f32 %v2133, %v2194
    %v2233 = vmul.f32 %v2137, %v2190
    %v2234 = vmul.f32 %v2137, %v2194
    %v2235 = vmul.f32 %v2141, %v2190
    %v2236 = vmul.f32 %v2141, %v2194
    %v2237 = vmul.f32 %v2145, %v2190
    %v2238 = vmul.f32 %v2145, %v2194
    %v2239 = vmul.f32 %v2149, %v2190
    %v2240 = vmul.f32 %v2149, %v2194
    %v2241 = vmul.f32 %v2153, %v2190
    %v2242 = vmul.f32 %v2153, %v2194
    %v2243 = vmul.f32 %v2157, %v2190
    %v2244 = vmul.f32 %v2157, %v2194
    %v2245 = vmul.f32 %v2161, %v2190
    %v2246 = vmul.f32 %v2161, %v2194
    %v2247 = vmul.f32 %v2165, %v2190
    %v2248 = vmul.f32 %v2165, %v2194
    %v2249 = vmul.f32 %v2169, %v2190
    %v2250 = vmul.f32 %v2169, %v2194
    %v2251 = vmul.f32 %v2173, %v2190
    %v2252 = vmul.f32 %v2173, %v2194
    %v2253 = vmul.f32 %v2177, %v2190
    %v2254 = vmul.f32 %v2177, %v2194
    %v2255 = vmul.f32 %v2181, %v2190
    %v2256 = vmul.f32 %v2181, %v2194
    %v2257 = vmul.f32 %v2185, %v2190
    %v2258 = vmul.f32 %v2185, %v2194
    %v2259 = vadd.f32 %v1995, %v2195
    %v2260 = vadd.f32 %v1996, %v2196
    %v2261 = vadd.f32 %v1997, %v2197
    %v2262 = vadd.f32 %v1998, %v2198
    %v2263 = vadd.f32 %v1999, %v2199
    %v2264 = vadd.f32 %v2000, %v2200
    %v2265 = vadd.f32 %v2001, %v2201
    %v2266 = vadd.f32 %v2002, %v2202
    %v2267 = vadd.f32 %v2003, %v2203
    %v2268 = vadd.f32 %v2004, %v2204
    %v2269 = vadd.f32 %v2005, %v2205
    %v2270 = vadd.f32 %v2006, %v2206
    %v2271 = vadd.f32 %v2007, %v2207
    %v2272 = vadd.f32 %v2008, %v2208
    %v2273 = vadd.f32 %v2009, %v2209
    %v2274 = vadd.f32 %v2010, %v2210
    %v2275 = vadd.f32 %v2011, %v2211
    %v2276 = vadd.f32 %v2012, %v2212
    %v2277 = vadd.f32 %v2013, %v2213
    %v2278 = vadd.f32 %v2014, %v2214
    %v2279 = vadd.f32 %v2015, %v2215
    %v2280 = vadd.f32 %v2016, %v2216
    %v2281 = vadd.f32 %v2017, %v2217
    %v2282 = vadd.f32 %v2018, %v2218
    %v2283 = vadd.f32 %v2019, %v2219
    %v2284 = vadd.f32 %v2020, %v2220
    %v2285 = vadd.f32 %v2021, %v2221
    %v2286 = vadd.f32 %v2022, %v2222
    %v2287 = vadd.f32 %v2023, %v2223
    %v2288 = vadd.f32 %v2024, %v2224
    %v2289 = vadd.f32 %v2025, %v2225
    %v2290 = vadd.f32 %v2026, %v2226
    %v2291 = vadd.f32 %v2027, %v2227
    %v2292 = vadd.f32 %v2028, %v2228
    %v2293 = vadd.f32 %v2029, %v2229
    %v2294 = vadd.f32 %v2030, %v2230
    %v2295 = vadd.f32 %v2031, %v2231
    %v2296 = vadd.f32 %v2032, %v2232
    %v2297 = vadd.f32 %v2033, %v2233
    %v2298 = vadd.f32 %v2034, %v2234
    %v2299 = vadd.f32 %v2035, %v2235
    %v2300 = vadd.f32 %v2036, %v2236
    %v2301 = vadd.f32 %v2037, %v2237
    %v2302 = vadd.f32 %v2038, %v2238
    %v2303 = vadd.f32 %v2039, %v2239
    %v2304 = vadd.f32 %v2040, %v2240
    %v2305 = vadd.f32 %v2041, %v2241
    %v2306 = vadd.f32 %v2042, %v2242
    %v2307 = vadd.f32 %v2043, %v2243
    %v2308 = vadd.f32 %v2044, %v2244
    %v2309 = vadd.f32 %v2045, %v2245
    %v2310 = vadd.f32 %v2046, %v2246
    %v2311 = vadd.f32 %v2047, %v2247
    %v2312 = vadd.f32 %v2048, %v2248
    %v2313 = vadd.f32 %v2049, %v2249
    %v2314 = vadd.f32 %v2050, %v2250
    %v2315 = vadd.f32 %v2051, %v2251
    %v2316 = vadd.f32 %v2052, %v2252
    %v2317 = vadd.f32 %v2053, %v2253
    %v2318 = vadd.f32 %v2054, %v2254
    %v2319 = vadd.f32 %v2055, %v2255
    %v2320 = vadd.f32 %v2056, %v2256
    %v2321 = vadd.f32 %v2057, %v2257
    %v2322 = vadd.f32 %v2058, %v2258
    %s2323 = sld [smem:[#allocation3 + $0x2]]
    %v2324 = vstv %s2323
    %v2325 = vmul.f32 %v2324, %v287
    %v2326 = vmul.f32 %v2324, %v288
    %v2327 = vmul.f32 %v2324, %v289
    %v2328 = vmul.f32 %v2324, %v290
    %v2329 = vmul.f32 %v2324, %v291
    %v2330 = vmul.f32 %v2324, %v292
    %v2331 = vmul.f32 %v2324, %v293
    %v2332 = vmul.f32 %v2324, %v294
    %v2333 = vmul.f32 %v2324, %v295
    %v2334 = vmul.f32 %v2324, %v296
    %v2335 = vmul.f32 %v2324, %v297
    %v2336 = vmul.f32 %v2324, %v298
    %v2337 = vmul.f32 %v2324, %v299
    %v2338 = vmul.f32 %v2324, %v300
    %v2339 = vmul.f32 %v2324, %v301
    %v2340 = vmul.f32 %v2324, %v302
    %v2341 = vmul.f32 %v2324, %v303
    %v2342 = vmul.f32 %v2324, %v304
    %v2343 = vmul.f32 %v2324, %v305
    %v2344 = vmul.f32 %v2324, %v306
    %v2345 = vmul.f32 %v2324, %v307
    %v2346 = vmul.f32 %v2324, %v308
    %v2347 = vmul.f32 %v2324, %v309
    %v2348 = vmul.f32 %v2324, %v310
    %v2349 = vmul.f32 %v2324, %v311
    %v2350 = vmul.f32 %v2324, %v312
    %v2351 = vmul.f32 %v2324, %v313
    %v2352 = vmul.f32 %v2324, %v314
    %v2353 = vmul.f32 %v2324, %v315
    %v2354 = vmul.f32 %v2324, %v316
    %v2355 = vmul.f32 %v2324, %v317
    %v2356 = vmul.f32 %v2324, %v318
    %v2357 = vmul.f32 %v2324, %v319
    %v2358 = vmul.f32 %v2324, %v320
    %v2359 = vmul.f32 %v2324, %v321
    %v2360 = vmul.f32 %v2324, %v322
    %v2361 = vmul.f32 %v2324, %v323
    %v2362 = vmul.f32 %v2324, %v324
    %v2363 = vmul.f32 %v2324, %v325
    %v2364 = vmul.f32 %v2324, %v326
    %v2365 = vmul.f32 %v2324, %v327
    %v2366 = vmul.f32 %v2324, %v328
    %v2367 = vmul.f32 %v2324, %v329
    %v2368 = vmul.f32 %v2324, %v330
    %v2369 = vmul.f32 %v2324, %v331
    %v2370 = vmul.f32 %v2324, %v332
    %v2371 = vmul.f32 %v2324, %v333
    %v2372 = vmul.f32 %v2324, %v334
    %v2373 = vmul.f32 %v2324, %v335
    %v2374 = vmul.f32 %v2324, %v336
    %v2375 = vmul.f32 %v2324, %v337
    %v2376 = vmul.f32 %v2324, %v338
    %v2377 = vmul.f32 %v2324, %v339
    %v2378 = vmul.f32 %v2324, %v340
    %v2379 = vmul.f32 %v2324, %v341
    %v2380 = vmul.f32 %v2324, %v342
    %v2381 = vmul.f32 %v2324, %v343
    %v2382 = vmul.f32 %v2324, %v344
    %v2383 = vmul.f32 %v2324, %v345
    %v2384 = vmul.f32 %v2324, %v346
    %v2385 = vmul.f32 %v2324, %v347
    %v2386 = vmul.f32 %v2324, %v348
    %v2387 = vmul.f32 %v2324, %v349
    %v2388 = vmul.f32 %v2324, %v350
    %v2389 = vmul.f32 %v2325, 1.442695
    %v2390 = vpow.pop %v2389
    %v2391 = vmul.f32 %v2326, 1.442695
    %v2392 = vpow.pop %v2391
    %v2393 = vmul.f32 %v2327, 1.442695
    %v2394 = vpow.pop %v2393
    %v2395 = vmul.f32 %v2328, 1.442695
    %v2396 = vpow.pop %v2395
    %v2397 = vmul.f32 %v2329, 1.442695
    %v2398 = vpow.pop %v2397
    %v2399 = vmul.f32 %v2330, 1.442695
    %v2400 = vpow.pop %v2399
    %v2401 = vmul.f32 %v2331, 1.442695
    %v2402 = vpow.pop %v2401
    %v2403 = vmul.f32 %v2332, 1.442695
    %v2404 = vpow.pop %v2403
    %v2405 = vmul.f32 %v2333, 1.442695
    %v2406 = vpow.pop %v2405
    %v2407 = vmul.f32 %v2334, 1.442695
    %v2408 = vpow.pop %v2407
    %v2409 = vmul.f32 %v2335, 1.442695
    %v2410 = vpow.pop %v2409
    %v2411 = vmul.f32 %v2336, 1.442695
    %v2412 = vpow.pop %v2411
    %v2413 = vmul.f32 %v2337, 1.442695
    %v2414 = vpow.pop %v2413
    %v2415 = vmul.f32 %v2338, 1.442695
    %v2416 = vpow.pop %v2415
    %v2417 = vmul.f32 %v2339, 1.442695
    %v2418 = vpow.pop %v2417
    %v2419 = vmul.f32 %v2340, 1.442695
    %v2420 = vpow.pop %v2419
    %v2421 = vmul.f32 %v2341, 1.442695
    %v2422 = vpow.pop %v2421
    %v2423 = vmul.f32 %v2342, 1.442695
    %v2424 = vpow.pop %v2423
    %v2425 = vmul.f32 %v2343, 1.442695
    %v2426 = vpow.pop %v2425
    %v2427 = vmul.f32 %v2344, 1.442695
    %v2428 = vpow.pop %v2427
    %v2429 = vmul.f32 %v2345, 1.442695
    %v2430 = vpow.pop %v2429
    %v2431 = vmul.f32 %v2346, 1.442695
    %v2432 = vpow.pop %v2431
    %v2433 = vmul.f32 %v2347, 1.442695
    %v2434 = vpow.pop %v2433
    %v2435 = vmul.f32 %v2348, 1.442695
    %v2436 = vpow.pop %v2435
    %v2437 = vmul.f32 %v2349, 1.442695
    %v2438 = vpow.pop %v2437
    %v2439 = vmul.f32 %v2350, 1.442695
    %v2440 = vpow.pop %v2439
    %v2441 = vmul.f32 %v2351, 1.442695
    %v2442 = vpow.pop %v2441
    %v2443 = vmul.f32 %v2352, 1.442695
    %v2444 = vpow.pop %v2443
    %v2445 = vmul.f32 %v2353, 1.442695
    %v2446 = vpow.pop %v2445
    %v2447 = vmul.f32 %v2354, 1.442695
    %v2448 = vpow.pop %v2447
    %v2449 = vmul.f32 %v2355, 1.442695
    %v2450 = vpow.pop %v2449
    %v2451 = vmul.f32 %v2356, 1.442695
    %v2452 = vpow.pop %v2451
    %v2453 = vmul.f32 %v2357, 1.442695
    %v2454 = vpow.pop %v2453
    %v2455 = vmul.f32 %v2358, 1.442695
    %v2456 = vpow.pop %v2455
    %v2457 = vmul.f32 %v2359, 1.442695
    %v2458 = vpow.pop %v2457
    %v2459 = vmul.f32 %v2360, 1.442695
    %v2460 = vpow.pop %v2459
    %v2461 = vmul.f32 %v2361, 1.442695
    %v2462 = vpow.pop %v2461
    %v2463 = vmul.f32 %v2362, 1.442695
    %v2464 = vpow.pop %v2463
    %v2465 = vmul.f32 %v2363, 1.442695
    %v2466 = vpow.pop %v2465
    %v2467 = vmul.f32 %v2364, 1.442695
    %v2468 = vpow.pop %v2467
    %v2469 = vmul.f32 %v2365, 1.442695
    %v2470 = vpow.pop %v2469
    %v2471 = vmul.f32 %v2366, 1.442695
    %v2472 = vpow.pop %v2471
    %v2473 = vmul.f32 %v2367, 1.442695
    %v2474 = vpow.pop %v2473
    %v2475 = vmul.f32 %v2368, 1.442695
    %v2476 = vpow.pop %v2475
    %v2477 = vmul.f32 %v2369, 1.442695
    %v2478 = vpow.pop %v2477
    %v2479 = vmul.f32 %v2370, 1.442695
    %v2480 = vpow.pop %v2479
    %v2481 = vmul.f32 %v2371, 1.442695
    %v2482 = vpow.pop %v2481
    %v2483 = vmul.f32 %v2372, 1.442695
    %v2484 = vpow.pop %v2483
    %v2485 = vmul.f32 %v2373, 1.442695
    %v2486 = vpow.pop %v2485
    %v2487 = vmul.f32 %v2374, 1.442695
    %v2488 = vpow.pop %v2487
    %v2489 = vmul.f32 %v2375, 1.442695
    %v2490 = vpow.pop %v2489
    %v2491 = vmul.f32 %v2376, 1.442695
    %v2492 = vpow.pop %v2491
    %v2493 = vmul.f32 %v2377, 1.442695
    %v2494 = vpow.pop %v2493
    %v2495 = vmul.f32 %v2378, 1.442695
    %v2496 = vpow.pop %v2495
    %v2497 = vmul.f32 %v2379, 1.442695
    %v2498 = vpow.pop %v2497
    %v2499 = vmul.f32 %v2380, 1.442695
    %v2500 = vpow.pop %v2499
    %v2501 = vmul.f32 %v2381, 1.442695
    %v2502 = vpow.pop %v2501
    %v2503 = vmul.f32 %v2382, 1.442695
    %v2504 = vpow.pop %v2503
    %v2505 = vmul.f32 %v2383, 1.442695
    %v2506 = vpow.pop %v2505
    %v2507 = vmul.f32 %v2384, 1.442695
    %v2508 = vpow.pop %v2507
    %v2509 = vmul.f32 %v2385, 1.442695
    %v2510 = vpow.pop %v2509
    %v2511 = vmul.f32 %v2386, 1.442695
    %v2512 = vpow.pop %v2511
    %v2513 = vmul.f32 %v2387, 1.442695
    %v2514 = vpow.pop %v2513
    %v2515 = vmul.f32 %v2388, 1.442695
    %v2516 = vpow.pop %v2515
    %v2517 = vmul.f32 %v2390, %v2259
    %v2518 = vmul.f32 %v2392, %v2260
    %v2519 = vmul.f32 %v2394, %v2261
    %v2520 = vmul.f32 %v2396, %v2262
    %v2521 = vmul.f32 %v2398, %v2263
    %v2522 = vmul.f32 %v2400, %v2264
    %v2523 = vmul.f32 %v2402, %v2265
    %v2524 = vmul.f32 %v2404, %v2266
    %v2525 = vmul.f32 %v2406, %v2267
    %v2526 = vmul.f32 %v2408, %v2268
    %v2527 = vmul.f32 %v2410, %v2269
    %v2528 = vmul.f32 %v2412, %v2270
    %v2529 = vmul.f32 %v2414, %v2271
    %v2530 = vmul.f32 %v2416, %v2272
    %v2531 = vmul.f32 %v2418, %v2273
    %v2532 = vmul.f32 %v2420, %v2274
    %v2533 = vmul.f32 %v2422, %v2275
    %v2534 = vmul.f32 %v2424, %v2276
    %v2535 = vmul.f32 %v2426, %v2277
    %v2536 = vmul.f32 %v2428, %v2278
    %v2537 = vmul.f32 %v2430, %v2279
    %v2538 = vmul.f32 %v2432, %v2280
    %v2539 = vmul.f32 %v2434, %v2281
    %v2540 = vmul.f32 %v2436, %v2282
    %v2541 = vmul.f32 %v2438, %v2283
    %v2542 = vmul.f32 %v2440, %v2284
    %v2543 = vmul.f32 %v2442, %v2285
    %v2544 = vmul.f32 %v2444, %v2286
    %v2545 = vmul.f32 %v2446, %v2287
    %v2546 = vmul.f32 %v2448, %v2288
    %v2547 = vmul.f32 %v2450, %v2289
    %v2548 = vmul.f32 %v2452, %v2290
    %v2549 = vmul.f32 %v2454, %v2291
    %v2550 = vmul.f32 %v2456, %v2292
    %v2551 = vmul.f32 %v2458, %v2293
    %v2552 = vmul.f32 %v2460, %v2294
    %v2553 = vmul.f32 %v2462, %v2295
    %v2554 = vmul.f32 %v2464, %v2296
    %v2555 = vmul.f32 %v2466, %v2297
    %v2556 = vmul.f32 %v2468, %v2298
    %v2557 = vmul.f32 %v2470, %v2299
    %v2558 = vmul.f32 %v2472, %v2300
    %v2559 = vmul.f32 %v2474, %v2301
    %v2560 = vmul.f32 %v2476, %v2302
    %v2561 = vmul.f32 %v2478, %v2303
    %v2562 = vmul.f32 %v2480, %v2304
    %v2563 = vmul.f32 %v2482, %v2305
    %v2564 = vmul.f32 %v2484, %v2306
    %v2565 = vmul.f32 %v2486, %v2307
    %v2566 = vmul.f32 %v2488, %v2308
    %v2567 = vmul.f32 %v2490, %v2309
    %v2568 = vmul.f32 %v2492, %v2310
    %v2569 = vmul.f32 %v2494, %v2311
    %v2570 = vmul.f32 %v2496, %v2312
    %v2571 = vmul.f32 %v2498, %v2313
    %v2572 = vmul.f32 %v2500, %v2314
    %v2573 = vmul.f32 %v2502, %v2315
    %v2574 = vmul.f32 %v2504, %v2316
    %v2575 = vmul.f32 %v2506, %v2317
    %v2576 = vmul.f32 %v2508, %v2318
    %v2577 = vmul.f32 %v2510, %v2319
    %v2578 = vmul.f32 %v2512, %v2320
    %v2579 = vmul.f32 %v2514, %v2321
    %v2580 = vmul.f32 %v2516, %v2322
    %v2581 = vadd.f32 %v1795, %v2517
    %v2582 = vadd.f32 %v1796, %v2518
    %v2583 = vadd.f32 %v1797, %v2519
    %v2584 = vadd.f32 %v1798, %v2520
    %v2585 = vadd.f32 %v1799, %v2521
    %v2586 = vadd.f32 %v1800, %v2522
    %v2587 = vadd.f32 %v1801, %v2523
    %v2588 = vadd.f32 %v1802, %v2524
    %v2589 = vadd.f32 %v1803, %v2525
    %v2590 = vadd.f32 %v1804, %v2526
    %v2591 = vadd.f32 %v1805, %v2527
    %v2592 = vadd.f32 %v1806, %v2528
    %v2593 = vadd.f32 %v1807, %v2529
    %v2594 = vadd.f32 %v1808, %v2530
    %v2595 = vadd.f32 %v1809, %v2531
    %v2596 = vadd.f32 %v1810, %v2532
    %v2597 = vadd.f32 %v1811, %v2533
    %v2598 = vadd.f32 %v1812, %v2534
    %v2599 = vadd.f32 %v1813, %v2535
    %v2600 = vadd.f32 %v1814, %v2536
    %v2601 = vadd.f32 %v1815, %v2537
    %v2602 = vadd.f32 %v1816, %v2538
    %v2603 = vadd.f32 %v1817, %v2539
    %v2604 = vadd.f32 %v1818, %v2540
    %v2605 = vadd.f32 %v1819, %v2541
    %v2606 = vadd.f32 %v1820, %v2542
    %v2607 = vadd.f32 %v1821, %v2543
    %v2608 = vadd.f32 %v1822, %v2544
    %v2609 = vadd.f32 %v1823, %v2545
    %v2610 = vadd.f32 %v1824, %v2546
    %v2611 = vadd.f32 %v1825, %v2547
    %v2612 = vadd.f32 %v1826, %v2548
    %v2613 = vadd.f32 %v1827, %v2549
    %v2614 = vadd.f32 %v1828, %v2550
    %v2615 = vadd.f32 %v1829, %v2551
    %v2616 = vadd.f32 %v1830, %v2552
    %v2617 = vadd.f32 %v1831, %v2553
    %v2618 = vadd.f32 %v1832, %v2554
    %v2619 = vadd.f32 %v1833, %v2555
    %v2620 = vadd.f32 %v1834, %v2556
    %v2621 = vadd.f32 %v1835, %v2557
    %v2622 = vadd.f32 %v1836, %v2558
    %v2623 = vadd.f32 %v1837, %v2559
    %v2624 = vadd.f32 %v1838, %v2560
    %v2625 = vadd.f32 %v1839, %v2561
    %v2626 = vadd.f32 %v1840, %v2562
    %v2627 = vadd.f32 %v1841, %v2563
    %v2628 = vadd.f32 %v1842, %v2564
    %v2629 = vadd.f32 %v1843, %v2565
    %v2630 = vadd.f32 %v1844, %v2566
    %v2631 = vadd.f32 %v1845, %v2567
    %v2632 = vadd.f32 %v1846, %v2568
    %v2633 = vadd.f32 %v1847, %v2569
    %v2634 = vadd.f32 %v1848, %v2570
    %v2635 = vadd.f32 %v1849, %v2571
    %v2636 = vadd.f32 %v1850, %v2572
    %v2637 = vadd.f32 %v1851, %v2573
    %v2638 = vadd.f32 %v1852, %v2574
    %v2639 = vadd.f32 %v1853, %v2575
    %v2640 = vadd.f32 %v1854, %v2576
    %v2641 = vadd.f32 %v1855, %v2577
    %v2642 = vadd.f32 %v1856, %v2578
    %v2643 = vadd.f32 %v1857, %v2579
    %v2644 = vadd.f32 %v1858, %v2580
    %2645 = vset.pattern.permute.xlu0 4
    %2646 = vperm.xlu0 %2645, %v19
    %v2647 = vpop.permute.xlu0 %2646
    %2649 = vset.pattern.permute.xlu0 4
    %2650 = vperm.xlu0 %2649, %v20
    %v2651 = vpop.permute.xlu0 %2650
    %2653 = vset.pattern.permute.xlu0 4
    %2654 = vperm.xlu0 %2653, %v21
    %v2655 = vpop.permute.xlu0 %2654
    %2657 = vset.pattern.permute.xlu0 4
    %2658 = vperm.xlu0 %2657, %v22
    %v2659 = vpop.permute.xlu0 %2658
    %2661 = vset.pattern.permute.xlu0 4
    %2662 = vperm.xlu0 %2661, %v23
    %v2663 = vpop.permute.xlu0 %2662
    %2665 = vset.pattern.permute.xlu0 4
    %2666 = vperm.xlu0 %2665, %v24
    %v2667 = vpop.permute.xlu0 %2666
    %2669 = vset.pattern.permute.xlu0 4
    %2670 = vperm.xlu0 %2669, %v25
    %v2671 = vpop.permute.xlu0 %2670
    %2673 = vset.pattern.permute.xlu0 4
    %2674 = vperm.xlu0 %2673, %v26
    %v2675 = vpop.permute.xlu0 %2674
    %2677 = vset.pattern.permute.xlu0 4
    %2678 = vperm.xlu0 %2677, %v27
    %v2679 = vpop.permute.xlu0 %2678
    %2681 = vset.pattern.permute.xlu0 4
    %2682 = vperm.xlu0 %2681, %v28
    %v2683 = vpop.permute.xlu0 %2682
    %2685 = vset.pattern.permute.xlu0 4
    %2686 = vperm.xlu0 %2685, %v29
    %v2687 = vpop.permute.xlu0 %2686
    %2689 = vset.pattern.permute.xlu0 4
    %2690 = vperm.xlu0 %2689, %v30
    %v2691 = vpop.permute.xlu0 %2690
    %2693 = vset.pattern.permute.xlu0 4
    %2694 = vperm.xlu0 %2693, %v31
    %v2695 = vpop.permute.xlu0 %2694
    %2697 = vset.pattern.permute.xlu0 4
    %2698 = vperm.xlu0 %2697, %v32
    %v2699 = vpop.permute.xlu0 %2698
    %2701 = vset.pattern.permute.xlu0 4
    %2702 = vperm.xlu0 %2701, %v33
    %v2703 = vpop.permute.xlu0 %2702
    %2705 = vset.pattern.permute.xlu0 4
    %2706 = vperm.xlu0 %2705, %v34
    %v2707 = vpop.permute.xlu0 %2706
    %2709 = vset.pattern.permute.xlu0 4
    %2710 = vperm.xlu0 %2709, %v35
    %v2711 = vpop.permute.xlu0 %2710
    %2713 = vset.pattern.permute.xlu0 4
    %2714 = vperm.xlu0 %2713, %v36
    %v2715 = vpop.permute.xlu0 %2714
    %2717 = vset.pattern.permute.xlu0 4
    %2718 = vperm.xlu0 %2717, %v37
    %v2719 = vpop.permute.xlu0 %2718
    %2721 = vset.pattern.permute.xlu0 4
    %2722 = vperm.xlu0 %2721, %v38
    %v2723 = vpop.permute.xlu0 %2722
    %2725 = vset.pattern.permute.xlu0 4
    %2726 = vperm.xlu0 %2725, %v39
    %v2727 = vpop.permute.xlu0 %2726
    %2729 = vset.pattern.permute.xlu0 4
    %2730 = vperm.xlu0 %2729, %v40
    %v2731 = vpop.permute.xlu0 %2730
    %2733 = vset.pattern.permute.xlu0 4
    %2734 = vperm.xlu0 %2733, %v41
    %v2735 = vpop.permute.xlu0 %2734
    %2737 = vset.pattern.permute.xlu0 4
    %2738 = vperm.xlu0 %2737, %v42
    %v2739 = vpop.permute.xlu0 %2738
    %2741 = vset.pattern.permute.xlu0 4
    %2742 = vperm.xlu0 %2741, %v43
    %v2743 = vpop.permute.xlu0 %2742
    %2745 = vset.pattern.permute.xlu0 4
    %2746 = vperm.xlu0 %2745, %v44
    %v2747 = vpop.permute.xlu0 %2746
    %2749 = vset.pattern.permute.xlu0 4
    %2750 = vperm.xlu0 %2749, %v45
    %v2751 = vpop.permute.xlu0 %2750
    %2753 = vset.pattern.permute.xlu0 4
    %2754 = vperm.xlu0 %2753, %v46
    %v2755 = vpop.permute.xlu0 %2754
    %2757 = vset.pattern.permute.xlu0 4
    %2758 = vperm.xlu0 %2757, %v47
    %v2759 = vpop.permute.xlu0 %2758
    %2761 = vset.pattern.permute.xlu0 4
    %2762 = vperm.xlu0 %2761, %v48
    %v2763 = vpop.permute.xlu0 %2762
    %2765 = vset.pattern.permute.xlu0 4
    %2766 = vperm.xlu0 %2765, %v49
    %v2767 = vpop.permute.xlu0 %2766
    %2769 = vset.pattern.permute.xlu0 4
    %2770 = vperm.xlu0 %2769, %v50
    %v2771 = vpop.permute.xlu0 %2770
    %v2773 = vlaneseq
    %v2774 = vshrl.u32 %v2773, 7
    %v2775 = vsub.s32 4, %v2774
    %v2776 = vrot.slane %v51, %v2775
    %v2777 = vlaneseq
    %v2778 = vshrl.u32 %v2777, 7
    %v2779 = vsub.s32 4, %v2778
    %v2780 = vrot.slane %v52, %v2779
    %v2781 = vmul.f32 %v2647, %v2776
    %v2782 = vmul.f32 %v2647, %v2780
    %v2783 = vmul.f32 %v2651, %v2776
    %v2784 = vmul.f32 %v2651, %v2780
    %v2785 = vmul.f32 %v2655, %v2776
    %v2786 = vmul.f32 %v2655, %v2780
    %v2787 = vmul.f32 %v2659, %v2776
    %v2788 = vmul.f32 %v2659, %v2780
    %v2789 = vmul.f32 %v2663, %v2776
    %v2790 = vmul.f32 %v2663, %v2780
    %v2791 = vmul.f32 %v2667, %v2776
    %v2792 = vmul.f32 %v2667, %v2780
    %v2793 = vmul.f32 %v2671, %v2776
    %v2794 = vmul.f32 %v2671, %v2780
    %v2795 = vmul.f32 %v2675, %v2776
    %v2796 = vmul.f32 %v2675, %v2780
    %v2797 = vmul.f32 %v2679, %v2776
    %v2798 = vmul.f32 %v2679, %v2780
    %v2799 = vmul.f32 %v2683, %v2776
    %v2800 = vmul.f32 %v2683, %v2780
    %v2801 = vmul.f32 %v2687, %v2776
    %v2802 = vmul.f32 %v2687, %v2780
    %v2803 = vmul.f32 %v2691, %v2776
    %v2804 = vmul.f32 %v2691, %v2780
    %v2805 = vmul.f32 %v2695, %v2776
    %v2806 = vmul.f32 %v2695, %v2780
    %v2807 = vmul.f32 %v2699, %v2776
    %v2808 = vmul.f32 %v2699, %v2780
    %v2809 = vmul.f32 %v2703, %v2776
    %v2810 = vmul.f32 %v2703, %v2780
    %v2811 = vmul.f32 %v2707, %v2776
    %v2812 = vmul.f32 %v2707, %v2780
    %v2813 = vmul.f32 %v2711, %v2776
    %v2814 = vmul.f32 %v2711, %v2780
    %v2815 = vmul.f32 %v2715, %v2776
    %v2816 = vmul.f32 %v2715, %v2780
    %v2817 = vmul.f32 %v2719, %v2776
    %v2818 = vmul.f32 %v2719, %v2780
    %v2819 = vmul.f32 %v2723, %v2776
    %v2820 = vmul.f32 %v2723, %v2780
    %v2821 = vmul.f32 %v2727, %v2776
    %v2822 = vmul.f32 %v2727, %v2780
    %v2823 = vmul.f32 %v2731, %v2776
    %v2824 = vmul.f32 %v2731, %v2780
    %v2825 = vmul.f32 %v2735, %v2776
    %v2826 = vmul.f32 %v2735, %v2780
    %v2827 = vmul.f32 %v2739, %v2776
    %v2828 = vmul.f32 %v2739, %v2780
    %v2829 = vmul.f32 %v2743, %v2776
    %v2830 = vmul.f32 %v2743, %v2780
    %v2831 = vmul.f32 %v2747, %v2776
    %v2832 = vmul.f32 %v2747, %v2780
    %v2833 = vmul.f32 %v2751, %v2776
    %v2834 = vmul.f32 %v2751, %v2780
    %v2835 = vmul.f32 %v2755, %v2776
    %v2836 = vmul.f32 %v2755, %v2780
    %v2837 = vmul.f32 %v2759, %v2776
    %v2838 = vmul.f32 %v2759, %v2780
    %v2839 = vmul.f32 %v2763, %v2776
    %v2840 = vmul.f32 %v2763, %v2780
    %v2841 = vmul.f32 %v2767, %v2776
    %v2842 = vmul.f32 %v2767, %v2780
    %v2843 = vmul.f32 %v2771, %v2776
    %v2844 = vmul.f32 %v2771, %v2780
    %2845 = vset.pattern.permute.xlu0 8
    %2846 = vperm.xlu0 %2845, %v19
    %v2847 = vpop.permute.xlu0 %2846
    %2849 = vset.pattern.permute.xlu0 8
    %2850 = vperm.xlu0 %2849, %v20
    %v2851 = vpop.permute.xlu0 %2850
    %2853 = vset.pattern.permute.xlu0 8
    %2854 = vperm.xlu0 %2853, %v21
    %v2855 = vpop.permute.xlu0 %2854
    %2857 = vset.pattern.permute.xlu0 8
    %2858 = vperm.xlu0 %2857, %v22
    %v2859 = vpop.permute.xlu0 %2858
    %2861 = vset.pattern.permute.xlu0 8
    %2862 = vperm.xlu0 %2861, %v23
    %v2863 = vpop.permute.xlu0 %2862
    %2865 = vset.pattern.permute.xlu0 8
    %2866 = vperm.xlu0 %2865, %v24
    %v2867 = vpop.permute.xlu0 %2866
    %2869 = vset.pattern.permute.xlu0 8
    %2870 = vperm.xlu0 %2869, %v25
    %v2871 = vpop.permute.xlu0 %2870
    %2873 = vset.pattern.permute.xlu0 8
    %2874 = vperm.xlu0 %2873, %v26
    %v2875 = vpop.permute.xlu0 %2874
    %2877 = vset.pattern.permute.xlu0 8
    %2878 = vperm.xlu0 %2877, %v27
    %v2879 = vpop.permute.xlu0 %2878
    %2881 = vset.pattern.permute.xlu0 8
    %2882 = vperm.xlu0 %2881, %v28
    %v2883 = vpop.permute.xlu0 %2882
    %2885 = vset.pattern.permute.xlu0 8
    %2886 = vperm.xlu0 %2885, %v29
    %v2887 = vpop.permute.xlu0 %2886
    %2889 = vset.pattern.permute.xlu0 8
    %2890 = vperm.xlu0 %2889, %v30
    %v2891 = vpop.permute.xlu0 %2890
    %2893 = vset.pattern.permute.xlu0 8
    %2894 = vperm.xlu0 %2893, %v31
    %v2895 = vpop.permute.xlu0 %2894
    %2897 = vset.pattern.permute.xlu0 8
    %2898 = vperm.xlu0 %2897, %v32
    %v2899 = vpop.permute.xlu0 %2898
    %2901 = vset.pattern.permute.xlu0 8
    %2902 = vperm.xlu0 %2901, %v33
    %v2903 = vpop.permute.xlu0 %2902
    %2905 = vset.pattern.permute.xlu0 8
    %2906 = vperm.xlu0 %2905, %v34
    %v2907 = vpop.permute.xlu0 %2906
    %2909 = vset.pattern.permute.xlu0 8
    %2910 = vperm.xlu0 %2909, %v35
    %v2911 = vpop.permute.xlu0 %2910
    %2913 = vset.pattern.permute.xlu0 8
    %2914 = vperm.xlu0 %2913, %v36
    %v2915 = vpop.permute.xlu0 %2914
    %2917 = vset.pattern.permute.xlu0 8
    %2918 = vperm.xlu0 %2917, %v37
    %v2919 = vpop.permute.xlu0 %2918
    %2921 = vset.pattern.permute.xlu0 8
    %2922 = vperm.xlu0 %2921, %v38
    %v2923 = vpop.permute.xlu0 %2922
    %2925 = vset.pattern.permute.xlu0 8
    %2926 = vperm.xlu0 %2925, %v39
    %v2927 = vpop.permute.xlu0 %2926
    %2929 = vset.pattern.permute.xlu0 8
    %2930 = vperm.xlu0 %2929, %v40
    %v2931 = vpop.permute.xlu0 %2930
    %2933 = vset.pattern.permute.xlu0 8
    %2934 = vperm.xlu0 %2933, %v41
    %v2935 = vpop.permute.xlu0 %2934
    %2937 = vset.pattern.permute.xlu0 8
    %2938 = vperm.xlu0 %2937, %v42
    %v2939 = vpop.permute.xlu0 %2938
    %2941 = vset.pattern.permute.xlu0 8
    %2942 = vperm.xlu0 %2941, %v43
    %v2943 = vpop.permute.xlu0 %2942
    %2945 = vset.pattern.permute.xlu0 8
    %2946 = vperm.xlu0 %2945, %v44
    %v2947 = vpop.permute.xlu0 %2946
    %2949 = vset.pattern.permute.xlu0 8
    %2950 = vperm.xlu0 %2949, %v45
    %v2951 = vpop.permute.xlu0 %2950
    %2953 = vset.pattern.permute.xlu0 8
    %2954 = vperm.xlu0 %2953, %v46
    %v2955 = vpop.permute.xlu0 %2954
    %2957 = vset.pattern.permute.xlu0 8
    %2958 = vperm.xlu0 %2957, %v47
    %v2959 = vpop.permute.xlu0 %2958
    %2961 = vset.pattern.permute.xlu0 8
    %2962 = vperm.xlu0 %2961, %v48
    %v2963 = vpop.permute.xlu0 %2962
    %2965 = vset.pattern.permute.xlu0 8
    %2966 = vperm.xlu0 %2965, %v49
    %v2967 = vpop.permute.xlu0 %2966
    %2969 = vset.pattern.permute.xlu0 8
    %2970 = vperm.xlu0 %2969, %v50
    %v2971 = vpop.permute.xlu0 %2970
    %v2973 = vlaneseq
    %v2974 = vshrl.u32 %v2973, 7
    %v2975 = vsub.s32 0, %v2974
    %v2976 = vrot.slane %v53, %v2975
    %v2977 = vlaneseq
    %v2978 = vshrl.u32 %v2977, 7
    %v2979 = vsub.s32 0, %v2978
    %v2980 = vrot.slane %v54, %v2979
    %v2981 = vmul.f32 %v2847, %v2976
    %v2982 = vmul.f32 %v2847, %v2980
    %v2983 = vmul.f32 %v2851, %v2976
    %v2984 = vmul.f32 %v2851, %v2980
    %v2985 = vmul.f32 %v2855, %v2976
    %v2986 = vmul.f32 %v2855, %v2980
    %v2987 = vmul.f32 %v2859, %v2976
    %v2988 = vmul.f32 %v2859, %v2980
    %v2989 = vmul.f32 %v2863, %v2976
    %v2990 = vmul.f32 %v2863, %v2980
    %v2991 = vmul.f32 %v2867, %v2976
    %v2992 = vmul.f32 %v2867, %v2980
    %v2993 = vmul.f32 %v2871, %v2976
    %v2994 = vmul.f32 %v2871, %v2980
    %v2995 = vmul.f32 %v2875, %v2976
    %v2996 = vmul.f32 %v2875, %v2980
    %v2997 = vmul.f32 %v2879, %v2976
    %v2998 = vmul.f32 %v2879, %v2980
    %v2999 = vmul.f32 %v2883, %v2976
    %v3000 = vmul.f32 %v2883, %v2980
    %v3001 = vmul.f32 %v2887, %v2976
    %v3002 = vmul.f32 %v2887, %v2980
    %v3003 = vmul.f32 %v2891, %v2976
    %v3004 = vmul.f32 %v2891, %v2980
    %v3005 = vmul.f32 %v2895, %v2976
    %v3006 = vmul.f32 %v2895, %v2980
    %v3007 = vmul.f32 %v2899, %v2976
    %v3008 = vmul.f32 %v2899, %v2980
    %v3009 = vmul.f32 %v2903, %v2976
    %v3010 = vmul.f32 %v2903, %v2980
    %v3011 = vmul.f32 %v2907, %v2976
    %v3012 = vmul.f32 %v2907, %v2980
    %v3013 = vmul.f32 %v2911, %v2976
    %v3014 = vmul.f32 %v2911, %v2980
    %v3015 = vmul.f32 %v2915, %v2976
    %v3016 = vmul.f32 %v2915, %v2980
    %v3017 = vmul.f32 %v2919, %v2976
    %v3018 = vmul.f32 %v2919, %v2980
    %v3019 = vmul.f32 %v2923, %v2976
    %v3020 = vmul.f32 %v2923, %v2980
    %v3021 = vmul.f32 %v2927, %v2976
    %v3022 = vmul.f32 %v2927, %v2980
    %v3023 = vmul.f32 %v2931, %v2976
    %v3024 = vmul.f32 %v2931, %v2980
    %v3025 = vmul.f32 %v2935, %v2976
    %v3026 = vmul.f32 %v2935, %v2980
    %v3027 = vmul.f32 %v2939, %v2976
    %v3028 = vmul.f32 %v2939, %v2980
    %v3029 = vmul.f32 %v2943, %v2976
    %v3030 = vmul.f32 %v2943, %v2980
    %v3031 = vmul.f32 %v2947, %v2976
    %v3032 = vmul.f32 %v2947, %v2980
    %v3033 = vmul.f32 %v2951, %v2976
    %v3034 = vmul.f32 %v2951, %v2980
    %v3035 = vmul.f32 %v2955, %v2976
    %v3036 = vmul.f32 %v2955, %v2980
    %v3037 = vmul.f32 %v2959, %v2976
    %v3038 = vmul.f32 %v2959, %v2980
    %v3039 = vmul.f32 %v2963, %v2976
    %v3040 = vmul.f32 %v2963, %v2980
    %v3041 = vmul.f32 %v2967, %v2976
    %v3042 = vmul.f32 %v2967, %v2980
    %v3043 = vmul.f32 %v2971, %v2976
    %v3044 = vmul.f32 %v2971, %v2980
    %v3045 = vadd.f32 %v2781, %v2981
    %v3046 = vadd.f32 %v2782, %v2982
    %v3047 = vadd.f32 %v2783, %v2983
    %v3048 = vadd.f32 %v2784, %v2984
    %v3049 = vadd.f32 %v2785, %v2985
    %v3050 = vadd.f32 %v2786, %v2986
    %v3051 = vadd.f32 %v2787, %v2987
    %v3052 = vadd.f32 %v2788, %v2988
    %v3053 = vadd.f32 %v2789, %v2989
    %v3054 = vadd.f32 %v2790, %v2990
    %v3055 = vadd.f32 %v2791, %v2991
    %v3056 = vadd.f32 %v2792, %v2992
    %v3057 = vadd.f32 %v2793, %v2993
    %v3058 = vadd.f32 %v2794, %v2994
    %v3059 = vadd.f32 %v2795, %v2995
    %v3060 = vadd.f32 %v2796, %v2996
    %v3061 = vadd.f32 %v2797, %v2997
    %v3062 = vadd.f32 %v2798, %v2998
    %v3063 = vadd.f32 %v2799, %v2999
    %v3064 = vadd.f32 %v2800, %v3000
    %v3065 = vadd.f32 %v2801, %v3001
    %v3066 = vadd.f32 %v2802, %v3002
    %v3067 = vadd.f32 %v2803, %v3003
    %v3068 = vadd.f32 %v2804, %v3004
    %v3069 = vadd.f32 %v2805, %v3005
    %v3070 = vadd.f32 %v2806, %v3006
    %v3071 = vadd.f32 %v2807, %v3007
    %v3072 = vadd.f32 %v2808, %v3008
    %v3073 = vadd.f32 %v2809, %v3009
    %v3074 = vadd.f32 %v2810, %v3010
    %v3075 = vadd.f32 %v2811, %v3011
    %v3076 = vadd.f32 %v2812, %v3012
    %v3077 = vadd.f32 %v2813, %v3013
    %v3078 = vadd.f32 %v2814, %v3014
    %v3079 = vadd.f32 %v2815, %v3015
    %v3080 = vadd.f32 %v2816, %v3016
    %v3081 = vadd.f32 %v2817, %v3017
    %v3082 = vadd.f32 %v2818, %v3018
    %v3083 = vadd.f32 %v2819, %v3019
    %v3084 = vadd.f32 %v2820, %v3020
    %v3085 = vadd.f32 %v2821, %v3021
    %v3086 = vadd.f32 %v2822, %v3022
    %v3087 = vadd.f32 %v2823, %v3023
    %v3088 = vadd.f32 %v2824, %v3024
    %v3089 = vadd.f32 %v2825, %v3025
    %v3090 = vadd.f32 %v2826, %v3026
    %v3091 = vadd.f32 %v2827, %v3027
    %v3092 = vadd.f32 %v2828, %v3028
    %v3093 = vadd.f32 %v2829, %v3029
    %v3094 = vadd.f32 %v2830, %v3030
    %v3095 = vadd.f32 %v2831, %v3031
    %v3096 = vadd.f32 %v2832, %v3032
    %v3097 = vadd.f32 %v2833, %v3033
    %v3098 = vadd.f32 %v2834, %v3034
    %v3099 = vadd.f32 %v2835, %v3035
    %v3100 = vadd.f32 %v2836, %v3036
    %v3101 = vadd.f32 %v2837, %v3037
    %v3102 = vadd.f32 %v2838, %v3038
    %v3103 = vadd.f32 %v2839, %v3039
    %v3104 = vadd.f32 %v2840, %v3040
    %v3105 = vadd.f32 %v2841, %v3041
    %v3106 = vadd.f32 %v2842, %v3042
    %v3107 = vadd.f32 %v2843, %v3043
    %v3108 = vadd.f32 %v2844, %v3044
    %s3109 = sld [smem:[#allocation3 + $0x3]]
    %v3110 = vstv %s3109
    %v3111 = vmul.f32 %v3110, %v287
    %v3112 = vmul.f32 %v3110, %v288
    %v3113 = vmul.f32 %v3110, %v289
    %v3114 = vmul.f32 %v3110, %v290
    %v3115 = vmul.f32 %v3110, %v291
    %v3116 = vmul.f32 %v3110, %v292
    %v3117 = vmul.f32 %v3110, %v293
    %v3118 = vmul.f32 %v3110, %v294
    %v3119 = vmul.f32 %v3110, %v295
    %v3120 = vmul.f32 %v3110, %v296
    %v3121 = vmul.f32 %v3110, %v297
    %v3122 = vmul.f32 %v3110, %v298
    %v3123 = vmul.f32 %v3110, %v299
    %v3124 = vmul.f32 %v3110, %v300
    %v3125 = vmul.f32 %v3110, %v301
    %v3126 = vmul.f32 %v3110, %v302
    %v3127 = vmul.f32 %v3110, %v303
    %v3128 = vmul.f32 %v3110, %v304
    %v3129 = vmul.f32 %v3110, %v305
    %v3130 = vmul.f32 %v3110, %v306
    %v3131 = vmul.f32 %v3110, %v307
    %v3132 = vmul.f32 %v3110, %v308
    %v3133 = vmul.f32 %v3110, %v309
    %v3134 = vmul.f32 %v3110, %v310
    %v3135 = vmul.f32 %v3110, %v311
    %v3136 = vmul.f32 %v3110, %v312
    %v3137 = vmul.f32 %v3110, %v313
    %v3138 = vmul.f32 %v3110, %v314
    %v3139 = vmul.f32 %v3110, %v315
    %v3140 = vmul.f32 %v3110, %v316
    %v3141 = vmul.f32 %v3110, %v317
    %v3142 = vmul.f32 %v3110, %v318
    %v3143 = vmul.f32 %v3110, %v319
    %v3144 = vmul.f32 %v3110, %v320
    %v3145 = vmul.f32 %v3110, %v321
    %v3146 = vmul.f32 %v3110, %v322
    %v3147 = vmul.f32 %v3110, %v323
    %v3148 = vmul.f32 %v3110, %v324
    %v3149 = vmul.f32 %v3110, %v325
    %v3150 = vmul.f32 %v3110, %v326
    %v3151 = vmul.f32 %v3110, %v327
    %v3152 = vmul.f32 %v3110, %v328
    %v3153 = vmul.f32 %v3110, %v329
    %v3154 = vmul.f32 %v3110, %v330
    %v3155 = vmul.f32 %v3110, %v331
    %v3156 = vmul.f32 %v3110, %v332
    %v3157 = vmul.f32 %v3110, %v333
    %v3158 = vmul.f32 %v3110, %v334
    %v3159 = vmul.f32 %v3110, %v335
    %v3160 = vmul.f32 %v3110, %v336
    %v3161 = vmul.f32 %v3110, %v337
    %v3162 = vmul.f32 %v3110, %v338
    %v3163 = vmul.f32 %v3110, %v339
    %v3164 = vmul.f32 %v3110, %v340
    %v3165 = vmul.f32 %v3110, %v341
    %v3166 = vmul.f32 %v3110, %v342
    %v3167 = vmul.f32 %v3110, %v343
    %v3168 = vmul.f32 %v3110, %v344
    %v3169 = vmul.f32 %v3110, %v345
    %v3170 = vmul.f32 %v3110, %v346
    %v3171 = vmul.f32 %v3110, %v347
    %v3172 = vmul.f32 %v3110, %v348
    %v3173 = vmul.f32 %v3110, %v349
    %v3174 = vmul.f32 %v3110, %v350
    %v3175 = vmul.f32 %v3111, 1.442695
    %v3176 = vpow.pop %v3175
    %v3177 = vmul.f32 %v3112, 1.442695
    %v3178 = vpow.pop %v3177
    %v3179 = vmul.f32 %v3113, 1.442695
    %v3180 = vpow.pop %v3179
    %v3181 = vmul.f32 %v3114, 1.442695
    %v3182 = vpow.pop %v3181
    %v3183 = vmul.f32 %v3115, 1.442695
    %v3184 = vpow.pop %v3183
    %v3185 = vmul.f32 %v3116, 1.442695
    %v3186 = vpow.pop %v3185
    %v3187 = vmul.f32 %v3117, 1.442695
    %v3188 = vpow.pop %v3187
    %v3189 = vmul.f32 %v3118, 1.442695
    %v3190 = vpow.pop %v3189
    %v3191 = vmul.f32 %v3119, 1.442695
    %v3192 = vpow.pop %v3191
    %v3193 = vmul.f32 %v3120, 1.442695
    %v3194 = vpow.pop %v3193
    %v3195 = vmul.f32 %v3121, 1.442695
    %v3196 = vpow.pop %v3195
    %v3197 = vmul.f32 %v3122, 1.442695
    %v3198 = vpow.pop %v3197
    %v3199 = vmul.f32 %v3123, 1.442695
    %v3200 = vpow.pop %v3199
    %v3201 = vmul.f32 %v3124, 1.442695
    %v3202 = vpow.pop %v3201
    %v3203 = vmul.f32 %v3125, 1.442695
    %v3204 = vpow.pop %v3203
    %v3205 = vmul.f32 %v3126, 1.442695
    %v3206 = vpow.pop %v3205
    %v3207 = vmul.f32 %v3127, 1.442695
    %v3208 = vpow.pop %v3207
    %v3209 = vmul.f32 %v3128, 1.442695
    %v3210 = vpow.pop %v3209
    %v3211 = vmul.f32 %v3129, 1.442695
    %v3212 = vpow.pop %v3211
    %v3213 = vmul.f32 %v3130, 1.442695
    %v3214 = vpow.pop %v3213
    %v3215 = vmul.f32 %v3131, 1.442695
    %v3216 = vpow.pop %v3215
    %v3217 = vmul.f32 %v3132, 1.442695
    %v3218 = vpow.pop %v3217
    %v3219 = vmul.f32 %v3133, 1.442695
    %v3220 = vpow.pop %v3219
    %v3221 = vmul.f32 %v3134, 1.442695
    %v3222 = vpow.pop %v3221
    %v3223 = vmul.f32 %v3135, 1.442695
    %v3224 = vpow.pop %v3223
    %v3225 = vmul.f32 %v3136, 1.442695
    %v3226 = vpow.pop %v3225
    %v3227 = vmul.f32 %v3137, 1.442695
    %v3228 = vpow.pop %v3227
    %v3229 = vmul.f32 %v3138, 1.442695
    %v3230 = vpow.pop %v3229
    %v3231 = vmul.f32 %v3139, 1.442695
    %v3232 = vpow.pop %v3231
    %v3233 = vmul.f32 %v3140, 1.442695
    %v3234 = vpow.pop %v3233
    %v3235 = vmul.f32 %v3141, 1.442695
    %v3236 = vpow.pop %v3235
    %v3237 = vmul.f32 %v3142, 1.442695
    %v3238 = vpow.pop %v3237
    %v3239 = vmul.f32 %v3143, 1.442695
    %v3240 = vpow.pop %v3239
    %v3241 = vmul.f32 %v3144, 1.442695
    %v3242 = vpow.pop %v3241
    %v3243 = vmul.f32 %v3145, 1.442695
    %v3244 = vpow.pop %v3243
    %v3245 = vmul.f32 %v3146, 1.442695
    %v3246 = vpow.pop %v3245
    %v3247 = vmul.f32 %v3147, 1.442695
    %v3248 = vpow.pop %v3247
    %v3249 = vmul.f32 %v3148, 1.442695
    %v3250 = vpow.pop %v3249
    %v3251 = vmul.f32 %v3149, 1.442695
    %v3252 = vpow.pop %v3251
    %v3253 = vmul.f32 %v3150, 1.442695
    %v3254 = vpow.pop %v3253
    %v3255 = vmul.f32 %v3151, 1.442695
    %v3256 = vpow.pop %v3255
    %v3257 = vmul.f32 %v3152, 1.442695
    %v3258 = vpow.pop %v3257
    %v3259 = vmul.f32 %v3153, 1.442695
    %v3260 = vpow.pop %v3259
    %v3261 = vmul.f32 %v3154, 1.442695
    %v3262 = vpow.pop %v3261
    %v3263 = vmul.f32 %v3155, 1.442695
    %v3264 = vpow.pop %v3263
    %v3265 = vmul.f32 %v3156, 1.442695
    %v3266 = vpow.pop %v3265
    %v3267 = vmul.f32 %v3157, 1.442695
    %v3268 = vpow.pop %v3267
    %v3269 = vmul.f32 %v3158, 1.442695
    %v3270 = vpow.pop %v3269
    %v3271 = vmul.f32 %v3159, 1.442695
    %v3272 = vpow.pop %v3271
    %v3273 = vmul.f32 %v3160, 1.442695
    %v3274 = vpow.pop %v3273
    %v3275 = vmul.f32 %v3161, 1.442695
    %v3276 = vpow.pop %v3275
    %v3277 = vmul.f32 %v3162, 1.442695
    %v3278 = vpow.pop %v3277
    %v3279 = vmul.f32 %v3163, 1.442695
    %v3280 = vpow.pop %v3279
    %v3281 = vmul.f32 %v3164, 1.442695
    %v3282 = vpow.pop %v3281
    %v3283 = vmul.f32 %v3165, 1.442695
    %v3284 = vpow.pop %v3283
    %v3285 = vmul.f32 %v3166, 1.442695
    %v3286 = vpow.pop %v3285
    %v3287 = vmul.f32 %v3167, 1.442695
    %v3288 = vpow.pop %v3287
    %v3289 = vmul.f32 %v3168, 1.442695
    %v3290 = vpow.pop %v3289
    %v3291 = vmul.f32 %v3169, 1.442695
    %v3292 = vpow.pop %v3291
    %v3293 = vmul.f32 %v3170, 1.442695
    %v3294 = vpow.pop %v3293
    %v3295 = vmul.f32 %v3171, 1.442695
    %v3296 = vpow.pop %v3295
    %v3297 = vmul.f32 %v3172, 1.442695
    %v3298 = vpow.pop %v3297
    %v3299 = vmul.f32 %v3173, 1.442695
    %v3300 = vpow.pop %v3299
    %v3301 = vmul.f32 %v3174, 1.442695
    %v3302 = vpow.pop %v3301
    %v3303 = vmul.f32 %v3176, %v3045
    %v3304 = vmul.f32 %v3178, %v3046
    %v3305 = vmul.f32 %v3180, %v3047
    %v3306 = vmul.f32 %v3182, %v3048
    %v3307 = vmul.f32 %v3184, %v3049
    %v3308 = vmul.f32 %v3186, %v3050
    %v3309 = vmul.f32 %v3188, %v3051
    %v3310 = vmul.f32 %v3190, %v3052
    %v3311 = vmul.f32 %v3192, %v3053
    %v3312 = vmul.f32 %v3194, %v3054
    %v3313 = vmul.f32 %v3196, %v3055
    %v3314 = vmul.f32 %v3198, %v3056
    %v3315 = vmul.f32 %v3200, %v3057
    %v3316 = vmul.f32 %v3202, %v3058
    %v3317 = vmul.f32 %v3204, %v3059
    %v3318 = vmul.f32 %v3206, %v3060
    %v3319 = vmul.f32 %v3208, %v3061
    %v3320 = vmul.f32 %v3210, %v3062
    %v3321 = vmul.f32 %v3212, %v3063
    %v3322 = vmul.f32 %v3214, %v3064
    %v3323 = vmul.f32 %v3216, %v3065
    %v3324 = vmul.f32 %v3218, %v3066
    %v3325 = vmul.f32 %v3220, %v3067
    %v3326 = vmul.f32 %v3222, %v3068
    %v3327 = vmul.f32 %v3224, %v3069
    %v3328 = vmul.f32 %v3226, %v3070
    %v3329 = vmul.f32 %v3228, %v3071
    %v3330 = vmul.f32 %v3230, %v3072
    %v3331 = vmul.f32 %v3232, %v3073
    %v3332 = vmul.f32 %v3234, %v3074
    %v3333 = vmul.f32 %v3236, %v3075
    %v3334 = vmul.f32 %v3238, %v3076
    %v3335 = vmul.f32 %v3240, %v3077
    %v3336 = vmul.f32 %v3242, %v3078
    %v3337 = vmul.f32 %v3244, %v3079
    %v3338 = vmul.f32 %v3246, %v3080
    %v3339 = vmul.f32 %v3248, %v3081
    %v3340 = vmul.f32 %v3250, %v3082
    %v3341 = vmul.f32 %v3252, %v3083
    %v3342 = vmul.f32 %v3254, %v3084
    %v3343 = vmul.f32 %v3256, %v3085
    %v3344 = vmul.f32 %v3258, %v3086
    %v3345 = vmul.f32 %v3260, %v3087
    %v3346 = vmul.f32 %v3262, %v3088
    %v3347 = vmul.f32 %v3264, %v3089
    %v3348 = vmul.f32 %v3266, %v3090
    %v3349 = vmul.f32 %v3268, %v3091
    %v3350 = vmul.f32 %v3270, %v3092
    %v3351 = vmul.f32 %v3272, %v3093
    %v3352 = vmul.f32 %v3274, %v3094
    %v3353 = vmul.f32 %v3276, %v3095
    %v3354 = vmul.f32 %v3278, %v3096
    %v3355 = vmul.f32 %v3280, %v3097
    %v3356 = vmul.f32 %v3282, %v3098
    %v3357 = vmul.f32 %v3284, %v3099
    %v3358 = vmul.f32 %v3286, %v3100
    %v3359 = vmul.f32 %v3288, %v3101
    %v3360 = vmul.f32 %v3290, %v3102
    %v3361 = vmul.f32 %v3292, %v3103
    %v3362 = vmul.f32 %v3294, %v3104
    %v3363 = vmul.f32 %v3296, %v3105
    %v3364 = vmul.f32 %v3298, %v3106
    %v3365 = vmul.f32 %v3300, %v3107
    %v3366 = vmul.f32 %v3302, %v3108
    %v3367 = vadd.f32 %v2581, %v3303
    %v3368 = vadd.f32 %v2582, %v3304
    %v3369 = vadd.f32 %v2583, %v3305
    %v3370 = vadd.f32 %v2584, %v3306
    %v3371 = vadd.f32 %v2585, %v3307
    %v3372 = vadd.f32 %v2586, %v3308
    %v3373 = vadd.f32 %v2587, %v3309
    %v3374 = vadd.f32 %v2588, %v3310
    %v3375 = vadd.f32 %v2589, %v3311
    %v3376 = vadd.f32 %v2590, %v3312
    %v3377 = vadd.f32 %v2591, %v3313
    %v3378 = vadd.f32 %v2592, %v3314
    %v3379 = vadd.f32 %v2593, %v3315
    %v3380 = vadd.f32 %v2594, %v3316
    %v3381 = vadd.f32 %v2595, %v3317
    %v3382 = vadd.f32 %v2596, %v3318
    %v3383 = vadd.f32 %v2597, %v3319
    %v3384 = vadd.f32 %v2598, %v3320
    %v3385 = vadd.f32 %v2599, %v3321
    %v3386 = vadd.f32 %v2600, %v3322
    %v3387 = vadd.f32 %v2601, %v3323
    %v3388 = vadd.f32 %v2602, %v3324
    %v3389 = vadd.f32 %v2603, %v3325
    %v3390 = vadd.f32 %v2604, %v3326
    %v3391 = vadd.f32 %v2605, %v3327
    %v3392 = vadd.f32 %v2606, %v3328
    %v3393 = vadd.f32 %v2607, %v3329
    %v3394 = vadd.f32 %v2608, %v3330
    %v3395 = vadd.f32 %v2609, %v3331
    %v3396 = vadd.f32 %v2610, %v3332
    %v3397 = vadd.f32 %v2611, %v3333
    %v3398 = vadd.f32 %v2612, %v3334
    %v3399 = vadd.f32 %v2613, %v3335
    %v3400 = vadd.f32 %v2614, %v3336
    %v3401 = vadd.f32 %v2615, %v3337
    %v3402 = vadd.f32 %v2616, %v3338
    %v3403 = vadd.f32 %v2617, %v3339
    %v3404 = vadd.f32 %v2618, %v3340
    %v3405 = vadd.f32 %v2619, %v3341
    %v3406 = vadd.f32 %v2620, %v3342
    %v3407 = vadd.f32 %v2621, %v3343
    %v3408 = vadd.f32 %v2622, %v3344
    %v3409 = vadd.f32 %v2623, %v3345
    %v3410 = vadd.f32 %v2624, %v3346
    %v3411 = vadd.f32 %v2625, %v3347
    %v3412 = vadd.f32 %v2626, %v3348
    %v3413 = vadd.f32 %v2627, %v3349
    %v3414 = vadd.f32 %v2628, %v3350
    %v3415 = vadd.f32 %v2629, %v3351
    %v3416 = vadd.f32 %v2630, %v3352
    %v3417 = vadd.f32 %v2631, %v3353
    %v3418 = vadd.f32 %v2632, %v3354
    %v3419 = vadd.f32 %v2633, %v3355
    %v3420 = vadd.f32 %v2634, %v3356
    %v3421 = vadd.f32 %v2635, %v3357
    %v3422 = vadd.f32 %v2636, %v3358
    %v3423 = vadd.f32 %v2637, %v3359
    %v3424 = vadd.f32 %v2638, %v3360
    %v3425 = vadd.f32 %v2639, %v3361
    %v3426 = vadd.f32 %v2640, %v3362
    %v3427 = vadd.f32 %v2641, %v3363
    %v3428 = vadd.f32 %v2642, %v3364
    %v3429 = vadd.f32 %v2643, %v3365
    %v3430 = vadd.f32 %v2644, %v3366
    %s3431 = smul.u32 0, 256
    %v3432 = vlaneseq
    %v3433 = vshrl.u32 %v3432, 7
    %v3434 = vadd.s32 %v3433, 8
    %v3435 = vadd.s32 %v3433, 16
    %v3436 = vadd.s32 %v3433, 24
    %v3437 = vadd.s32 %v3433, 32
    %v3438 = vadd.s32 %v3433, 40
    %v3439 = vadd.s32 %v3433, 48
    %v3440 = vadd.s32 %v3433, 56
    %v3441 = vadd.s32 %v3433, 64
    %v3442 = vadd.s32 %v3433, 72
    %v3443 = vadd.s32 %v3433, 80
    %v3444 = vadd.s32 %v3433, 88
    %v3445 = vadd.s32 %v3433, 96
    %v3446 = vadd.s32 %v3433, 104
    %v3447 = vadd.s32 %v3433, 112
    %v3448 = vadd.s32 %v3433, 120
    %v3449 = vadd.s32 %v3433, 128
    %v3450 = vadd.s32 %v3433, 136
    %v3451 = vadd.s32 %v3433, 144
    %v3452 = vadd.s32 %v3433, 152
    %v3453 = vadd.s32 %v3433, 160
    %v3454 = vadd.s32 %v3433, 168
    %v3455 = vadd.s32 %v3433, 176
    %v3456 = vadd.s32 %v3433, 184
    %v3457 = vadd.s32 %v3433, 192
    %v3458 = vadd.s32 %v3433, 200
    %v3459 = vadd.s32 %v3433, 208
    %v3460 = vadd.s32 %v3433, 216
    %v3461 = vadd.s32 %v3433, 224
    %v3462 = vadd.s32 %v3433, 232
    %v3463 = vadd.s32 %v3433, 240
    %v3464 = vadd.s32 %v3433, 248
    %v3465 = vstv %s3431
    %v3466 = vadd.s32 %v3433, %v3465
    %v3467 = vadd.s32 %v3434, %v3465
    %v3468 = vadd.s32 %v3435, %v3465
    %v3469 = vadd.s32 %v3436, %v3465
    %v3470 = vadd.s32 %v3437, %v3465
    %v3471 = vadd.s32 %v3438, %v3465
    %v3472 = vadd.s32 %v3439, %v3465
    %v3473 = vadd.s32 %v3440, %v3465
    %v3474 = vadd.s32 %v3441, %v3465
    %v3475 = vadd.s32 %v3442, %v3465
    %v3476 = vadd.s32 %v3443, %v3465
    %v3477 = vadd.s32 %v3444, %v3465
    %v3478 = vadd.s32 %v3445, %v3465
    %v3479 = vadd.s32 %v3446, %v3465
    %v3480 = vadd.s32 %v3447, %v3465
    %v3481 = vadd.s32 %v3448, %v3465
    %v3482 = vadd.s32 %v3449, %v3465
    %v3483 = vadd.s32 %v3450, %v3465
    %v3484 = vadd.s32 %v3451, %v3465
    %v3485 = vadd.s32 %v3452, %v3465
    %v3486 = vadd.s32 %v3453, %v3465
    %v3487 = vadd.s32 %v3454, %v3465
    %v3488 = vadd.s32 %v3455, %v3465
    %v3489 = vadd.s32 %v3456, %v3465
    %v3490 = vadd.s32 %v3457, %v3465
    %v3491 = vadd.s32 %v3458, %v3465
    %v3492 = vadd.s32 %v3459, %v3465
    %v3493 = vadd.s32 %v3460, %v3465
    %v3494 = vadd.s32 %v3461, %v3465
    %v3495 = vadd.s32 %v3462, %v3465
    %v3496 = vadd.s32 %v3463, %v3465
    %v3497 = vadd.s32 %v3464, %v3465
    %v3498 = vlaneseq
    %v3499 = vand.u32 %v3498, 127
    %v3500 = vadd.s32 %v3499, 128
    %vm3501 = vcmp.eq.s32.totalorder %v3466, %v3499
    %vm3502 = vcmp.eq.s32.totalorder %v3466, %v3500
    %vm3503 = vcmp.eq.s32.totalorder %v3467, %v3499
    %vm3504 = vcmp.eq.s32.totalorder %v3467, %v3500
    %vm3505 = vcmp.eq.s32.totalorder %v3468, %v3499
    %vm3506 = vcmp.eq.s32.totalorder %v3468, %v3500
    %vm3507 = vcmp.eq.s32.totalorder %v3469, %v3499
    %vm3508 = vcmp.eq.s32.totalorder %v3469, %v3500
    %vm3509 = vcmp.eq.s32.totalorder %v3470, %v3499
    %vm3510 = vcmp.eq.s32.totalorder %v3470, %v3500
    %vm3511 = vcmp.eq.s32.totalorder %v3471, %v3499
    %vm3512 = vcmp.eq.s32.totalorder %v3471, %v3500
    %vm3513 = vcmp.eq.s32.totalorder %v3472, %v3499
    %vm3514 = vcmp.eq.s32.totalorder %v3472, %v3500
    %vm3515 = vcmp.eq.s32.totalorder %v3473, %v3499
    %vm3516 = vcmp.eq.s32.totalorder %v3473, %v3500
    %vm3517 = vcmp.eq.s32.totalorder %v3474, %v3499
    %vm3518 = vcmp.eq.s32.totalorder %v3474, %v3500
    %vm3519 = vcmp.eq.s32.totalorder %v3475, %v3499
    %vm3520 = vcmp.eq.s32.totalorder %v3475, %v3500
    %vm3521 = vcmp.eq.s32.totalorder %v3476, %v3499
    %vm3522 = vcmp.eq.s32.totalorder %v3476, %v3500
    %vm3523 = vcmp.eq.s32.totalorder %v3477, %v3499
    %vm3524 = vcmp.eq.s32.totalorder %v3477, %v3500
    %vm3525 = vcmp.eq.s32.totalorder %v3478, %v3499
    %vm3526 = vcmp.eq.s32.totalorder %v3478, %v3500
    %vm3527 = vcmp.eq.s32.totalorder %v3479, %v3499
    %vm3528 = vcmp.eq.s32.totalorder %v3479, %v3500
    %vm3529 = vcmp.eq.s32.totalorder %v3480, %v3499
    %vm3530 = vcmp.eq.s32.totalorder %v3480, %v3500
    %vm3531 = vcmp.eq.s32.totalorder %v3481, %v3499
    %vm3532 = vcmp.eq.s32.totalorder %v3481, %v3500
    %vm3533 = vcmp.eq.s32.totalorder %v3482, %v3499
    %vm3534 = vcmp.eq.s32.totalorder %v3482, %v3500
    %vm3535 = vcmp.eq.s32.totalorder %v3483, %v3499
    %vm3536 = vcmp.eq.s32.totalorder %v3483, %v3500
    %vm3537 = vcmp.eq.s32.totalorder %v3484, %v3499
    %vm3538 = vcmp.eq.s32.totalorder %v3484, %v3500
    %vm3539 = vcmp.eq.s32.totalorder %v3485, %v3499
    %vm3540 = vcmp.eq.s32.totalorder %v3485, %v3500
    %vm3541 = vcmp.eq.s32.totalorder %v3486, %v3499
    %vm3542 = vcmp.eq.s32.totalorder %v3486, %v3500
    %vm3543 = vcmp.eq.s32.totalorder %v3487, %v3499
    %vm3544 = vcmp.eq.s32.totalorder %v3487, %v3500
    %vm3545 = vcmp.eq.s32.totalorder %v3488, %v3499
    %vm3546 = vcmp.eq.s32.totalorder %v3488, %v3500
    %vm3547 = vcmp.eq.s32.totalorder %v3489, %v3499
    %vm3548 = vcmp.eq.s32.totalorder %v3489, %v3500
    %vm3549 = vcmp.eq.s32.totalorder %v3490, %v3499
    %vm3550 = vcmp.eq.s32.totalorder %v3490, %v3500
    %vm3551 = vcmp.eq.s32.totalorder %v3491, %v3499
    %vm3552 = vcmp.eq.s32.totalorder %v3491, %v3500
    %vm3553 = vcmp.eq.s32.totalorder %v3492, %v3499
    %vm3554 = vcmp.eq.s32.totalorder %v3492, %v3500
    %vm3555 = vcmp.eq.s32.totalorder %v3493, %v3499
    %vm3556 = vcmp.eq.s32.totalorder %v3493, %v3500
    %vm3557 = vcmp.eq.s32.totalorder %v3494, %v3499
    %vm3558 = vcmp.eq.s32.totalorder %v3494, %v3500
    %vm3559 = vcmp.eq.s32.totalorder %v3495, %v3499
    %vm3560 = vcmp.eq.s32.totalorder %v3495, %v3500
    %vm3561 = vcmp.eq.s32.totalorder %v3496, %v3499
    %vm3562 = vcmp.eq.s32.totalorder %v3496, %v3500
    %vm3563 = vcmp.eq.s32.totalorder %v3497, %v3499
    %vm3564 = vcmp.eq.s32.totalorder %v3497, %v3500
    %v3565 = vsel %vm3501, 0.001, 0.0
    %v3566 = vsel %vm3502, 0.001, 0.0
    %v3567 = vsel %vm3503, 0.001, 0.0
    %v3568 = vsel %vm3504, 0.001, 0.0
    %v3569 = vsel %vm3505, 0.001, 0.0
    %v3570 = vsel %vm3506, 0.001, 0.0
    %v3571 = vsel %vm3507, 0.001, 0.0
    %v3572 = vsel %vm3508, 0.001, 0.0
    %v3573 = vsel %vm3509, 0.001, 0.0
    %v3574 = vsel %vm3510, 0.001, 0.0
    %v3575 = vsel %vm3511, 0.001, 0.0
    %v3576 = vsel %vm3512, 0.001, 0.0
    %v3577 = vsel %vm3513, 0.001, 0.0
    %v3578 = vsel %vm3514, 0.001, 0.0
    %v3579 = vsel %vm3515, 0.001, 0.0
    %v3580 = vsel %vm3516, 0.001, 0.0
    %v3581 = vsel %vm3517, 0.001, 0.0
    %v3582 = vsel %vm3518, 0.001, 0.0
    %v3583 = vsel %vm3519, 0.001, 0.0
    %v3584 = vsel %vm3520, 0.001, 0.0
    %v3585 = vsel %vm3521, 0.001, 0.0
    %v3586 = vsel %vm3522, 0.001, 0.0
    %v3587 = vsel %vm3523, 0.001, 0.0
    %v3588 = vsel %vm3524, 0.001, 0.0
    %v3589 = vsel %vm3525, 0.001, 0.0
    %v3590 = vsel %vm3526, 0.001, 0.0
    %v3591 = vsel %vm3527, 0.001, 0.0
    %v3592 = vsel %vm3528, 0.001, 0.0
    %v3593 = vsel %vm3529, 0.001, 0.0
    %v3594 = vsel %vm3530, 0.001, 0.0
    %v3595 = vsel %vm3531, 0.001, 0.0
    %v3596 = vsel %vm3532, 0.001, 0.0
    %v3597 = vsel %vm3533, 0.001, 0.0
    %v3598 = vsel %vm3534, 0.001, 0.0
    %v3599 = vsel %vm3535, 0.001, 0.0
    %v3600 = vsel %vm3536, 0.001, 0.0
    %v3601 = vsel %vm3537, 0.001, 0.0
    %v3602 = vsel %vm3538, 0.001, 0.0
    %v3603 = vsel %vm3539, 0.001, 0.0
    %v3604 = vsel %vm3540, 0.001, 0.0
    %v3605 = vsel %vm3541, 0.001, 0.0
    %v3606 = vsel %vm3542, 0.001, 0.0
    %v3607 = vsel %vm3543, 0.001, 0.0
    %v3608 = vsel %vm3544, 0.001, 0.0
    %v3609 = vsel %vm3545, 0.001, 0.0
    %v3610 = vsel %vm3546, 0.001, 0.0
    %v3611 = vsel %vm3547, 0.001, 0.0
    %v3612 = vsel %vm3548, 0.001, 0.0
    %v3613 = vsel %vm3549, 0.001, 0.0
    %v3614 = vsel %vm3550, 0.001, 0.0
    %v3615 = vsel %vm3551, 0.001, 0.0
    %v3616 = vsel %vm3552, 0.001, 0.0
    %v3617 = vsel %vm3553, 0.001, 0.0
    %v3618 = vsel %vm3554, 0.001, 0.0
    %v3619 = vsel %vm3555, 0.001, 0.0
    %v3620 = vsel %vm3556, 0.001, 0.0
    %v3621 = vsel %vm3557, 0.001, 0.0
    %v3622 = vsel %vm3558, 0.001, 0.0
    %v3623 = vsel %vm3559, 0.001, 0.0
    %v3624 = vsel %vm3560, 0.001, 0.0
    %v3625 = vsel %vm3561, 0.001, 0.0
    %v3626 = vsel %vm3562, 0.001, 0.0
    %v3627 = vsel %vm3563, 0.001, 0.0
    %v3628 = vsel %vm3564, 0.001, 0.0
    %v3629 = vadd.f32 %v3367, %v3565
    %v3630 = vadd.f32 %v3368, %v3566
    %v3631 = vadd.f32 %v3369, %v3567
    %v3632 = vadd.f32 %v3370, %v3568
    %v3633 = vadd.f32 %v3371, %v3569
    %v3634 = vadd.f32 %v3372, %v3570
    %v3635 = vadd.f32 %v3373, %v3571
    %v3636 = vadd.f32 %v3374, %v3572
    %v3637 = vadd.f32 %v3375, %v3573
    %v3638 = vadd.f32 %v3376, %v3574
    %v3639 = vadd.f32 %v3377, %v3575
    %v3640 = vadd.f32 %v3378, %v3576
    %v3641 = vadd.f32 %v3379, %v3577
    %v3642 = vadd.f32 %v3380, %v3578
    %v3643 = vadd.f32 %v3381, %v3579
    %v3644 = vadd.f32 %v3382, %v3580
    %v3645 = vadd.f32 %v3383, %v3581
    %v3646 = vadd.f32 %v3384, %v3582
    %v3647 = vadd.f32 %v3385, %v3583
    %v3648 = vadd.f32 %v3386, %v3584
    %v3649 = vadd.f32 %v3387, %v3585
    %v3650 = vadd.f32 %v3388, %v3586
    %v3651 = vadd.f32 %v3389, %v3587
    %v3652 = vadd.f32 %v3390, %v3588
    %v3653 = vadd.f32 %v3391, %v3589
    %v3654 = vadd.f32 %v3392, %v3590
    %v3655 = vadd.f32 %v3393, %v3591
    %v3656 = vadd.f32 %v3394, %v3592
    %v3657 = vadd.f32 %v3395, %v3593
    %v3658 = vadd.f32 %v3396, %v3594
    %v3659 = vadd.f32 %v3397, %v3595
    %v3660 = vadd.f32 %v3398, %v3596
    %v3661 = vadd.f32 %v3399, %v3597
    %v3662 = vadd.f32 %v3400, %v3598
    %v3663 = vadd.f32 %v3401, %v3599
    %v3664 = vadd.f32 %v3402, %v3600
    %v3665 = vadd.f32 %v3403, %v3601
    %v3666 = vadd.f32 %v3404, %v3602
    %v3667 = vadd.f32 %v3405, %v3603
    %v3668 = vadd.f32 %v3406, %v3604
    %v3669 = vadd.f32 %v3407, %v3605
    %v3670 = vadd.f32 %v3408, %v3606
    %v3671 = vadd.f32 %v3409, %v3607
    %v3672 = vadd.f32 %v3410, %v3608
    %v3673 = vadd.f32 %v3411, %v3609
    %v3674 = vadd.f32 %v3412, %v3610
    %v3675 = vadd.f32 %v3413, %v3611
    %v3676 = vadd.f32 %v3414, %v3612
    %v3677 = vadd.f32 %v3415, %v3613
    %v3678 = vadd.f32 %v3416, %v3614
    %v3679 = vadd.f32 %v3417, %v3615
    %v3680 = vadd.f32 %v3418, %v3616
    %v3681 = vadd.f32 %v3419, %v3617
    %v3682 = vadd.f32 %v3420, %v3618
    %v3683 = vadd.f32 %v3421, %v3619
    %v3684 = vadd.f32 %v3422, %v3620
    %v3685 = vadd.f32 %v3423, %v3621
    %v3686 = vadd.f32 %v3424, %v3622
    %v3687 = vadd.f32 %v3425, %v3623
    %v3688 = vadd.f32 %v3426, %v3624
    %v3689 = vadd.f32 %v3427, %v3625
    %v3690 = vadd.f32 %v3428, %v3626
    %v3691 = vadd.f32 %v3429, %v3627
    %v3692 = vadd.f32 %v3430, %v3628
    %3693 = vst [vmem:[#allocation4] sm:$0xff] %v3629
    %3694 = vst [vmem:[#allocation4 + $0x8] sm:$0xff] %v3630
    %3695 = vst [vmem:[#allocation4 + $0x10] sm:$0xff] %v3631
    %3696 = vst [vmem:[#allocation4 + $0x18] sm:$0xff] %v3632
    %3697 = vst [vmem:[#allocation4 + $0x20] sm:$0xff] %v3633
    %3698 = vst [vmem:[#allocation4 + $0x28] sm:$0xff] %v3634
    %3699 = vst [vmem:[#allocation4 + $0x30] sm:$0xff] %v3635
    %3700 = vst [vmem:[#allocation4 + $0x38] sm:$0xff] %v3636
    %3701 = vst [vmem:[#allocation4 + $0x40] sm:$0xff] %v3637
    %3702 = vst [vmem:[#allocation4 + $0x48] sm:$0xff] %v3638
    %3703 = vst [vmem:[#allocation4 + $0x50] sm:$0xff] %v3639
    %3704 = vst [vmem:[#allocation4 + $0x58] sm:$0xff] %v3640
    %3705 = vst [vmem:[#allocation4 + $0x60] sm:$0xff] %v3641
    %3706 = vst [vmem:[#allocation4 + $0x68] sm:$0xff] %v3642
    %3707 = vst [vmem:[#allocation4 + $0x70] sm:$0xff] %v3643
    %3708 = vst [vmem:[#allocation4 + $0x78] sm:$0xff] %v3644
    %3709 = vst [vmem:[#allocation4 + $0x80] sm:$0xff] %v3645
    %3710 = vst [vmem:[#allocation4 + $0x88] sm:$0xff] %v3646
    %3711 = vst [vmem:[#allocation4 + $0x90] sm:$0xff] %v3647
    %3712 = vst [vmem:[#allocation4 + $0x98] sm:$0xff] %v3648
    %3713 = vst [vmem:[#allocation4 + $0xa0] sm:$0xff] %v3649
    %3714 = vst [vmem:[#allocation4 + $0xa8] sm:$0xff] %v3650
    %3715 = vst [vmem:[#allocation4 + $0xb0] sm:$0xff] %v3651
    %3716 = vst [vmem:[#allocation4 + $0xb8] sm:$0xff] %v3652
    %3717 = vst [vmem:[#allocation4 + $0xc0] sm:$0xff] %v3653
    %3718 = vst [vmem:[#allocation4 + $0xc8] sm:$0xff] %v3654
    %3719 = vst [vmem:[#allocation4 + $0xd0] sm:$0xff] %v3655
    %3720 = vst [vmem:[#allocation4 + $0xd8] sm:$0xff] %v3656
    %3721 = vst [vmem:[#allocation4 + $0xe0] sm:$0xff] %v3657
    %3722 = vst [vmem:[#allocation4 + $0xe8] sm:$0xff] %v3658
    %3723 = vst [vmem:[#allocation4 + $0xf0] sm:$0xff] %v3659
    %3724 = vst [vmem:[#allocation4 + $0xf8] sm:$0xff] %v3660
    %3725 = vst [vmem:[#allocation4 + $0x100] sm:$0xff] %v3661
    %3726 = vst [vmem:[#allocation4 + $0x108] sm:$0xff] %v3662
    %3727 = vst [vmem:[#allocation4 + $0x110] sm:$0xff] %v3663
    %3728 = vst [vmem:[#allocation4 + $0x118] sm:$0xff] %v3664
    %3729 = vst [vmem:[#allocation4 + $0x120] sm:$0xff] %v3665
    %3730 = vst [vmem:[#allocation4 + $0x128] sm:$0xff] %v3666
    %3731 = vst [vmem:[#allocation4 + $0x130] sm:$0xff] %v3667
    %3732 = vst [vmem:[#allocation4 + $0x138] sm:$0xff] %v3668
    %3733 = vst [vmem:[#allocation4 + $0x140] sm:$0xff] %v3669
    %3734 = vst [vmem:[#allocation4 + $0x148] sm:$0xff] %v3670
    %3735 = vst [vmem:[#allocation4 + $0x150] sm:$0xff] %v3671
    %3736 = vst [vmem:[#allocation4 + $0x158] sm:$0xff] %v3672
    %3737 = vst [vmem:[#allocation4 + $0x160] sm:$0xff] %v3673
    %3738 = vst [vmem:[#allocation4 + $0x168] sm:$0xff] %v3674
    %3739 = vst [vmem:[#allocation4 + $0x170] sm:$0xff] %v3675
    %3740 = vst [vmem:[#allocation4 + $0x178] sm:$0xff] %v3676
    %3741 = vst [vmem:[#allocation4 + $0x180] sm:$0xff] %v3677
    %3742 = vst [vmem:[#allocation4 + $0x188] sm:$0xff] %v3678
    %3743 = vst [vmem:[#allocation4 + $0x190] sm:$0xff] %v3679
    %3744 = vst [vmem:[#allocation4 + $0x198] sm:$0xff] %v3680
    %3745 = vst [vmem:[#allocation4 + $0x1a0] sm:$0xff] %v3681
    %3746 = vst [vmem:[#allocation4 + $0x1a8] sm:$0xff] %v3682
    %3747 = vst [vmem:[#allocation4 + $0x1b0] sm:$0xff] %v3683
    %3748 = vst [vmem:[#allocation4 + $0x1b8] sm:$0xff] %v3684
    %3749 = vst [vmem:[#allocation4 + $0x1c0] sm:$0xff] %v3685
    %3750 = vst [vmem:[#allocation4 + $0x1c8] sm:$0xff] %v3686
    %3751 = vst [vmem:[#allocation4 + $0x1d0] sm:$0xff] %v3687
    %3752 = vst [vmem:[#allocation4 + $0x1d8] sm:$0xff] %v3688
    %3753 = vst [vmem:[#allocation4 + $0x1e0] sm:$0xff] %v3689
    %3754 = vst [vmem:[#allocation4 + $0x1e8] sm:$0xff] %v3690
    %3755 = vst [vmem:[#allocation4 + $0x1f0] sm:$0xff] %v3691
    %3756 = vst [vmem:[#allocation4 + $0x1f8] sm:$0xff] %v3692
    // Predicated region
    $region10: #{tpu_custom_call.1} parent=1 // pred_check
      _
    $region11: #{tpu_custom_call.1} parent=1 // pred_check_branch
      %3758 = sbr.rel (0) target = $region13
    $region12: #{tpu_custom_call.1} parent=1 // pred_region
      %s3760 = ssub.s32 8192, 8192
      %3761 = vsyncadd [#allocation5], %s3760
      %s3762 = sshll.u32 [#allocation4], 4
      %s3763 = int_to_ptr.vmem [resolvable:$true] %s3762
      %3768 = dma.vmem_to_hbm [thread:$0]  %s3763, 8192, %s3, [#allocation5], 256, 256, 16
    $region13: #{tpu_custom_call.1} parent=1 // pred_fallthru
      _
    // Predicated region
    $region14: #{tpu_custom_call.1} parent=1 // pred_check
      _
    $region15: #{tpu_custom_call.1} parent=1 // pred_check_branch
      %3770 = sbr.rel (0) target = $region17
    $region16: #{tpu_custom_call.1} parent=1 // pred_region
      %3771 = dma.done [#allocation5], 8192
    $region17: #{tpu_custom_call.1} parent=1 // pred_fallthru
      _
    %3772 = vsyncpa [#allocation5], 1

</llo_original>
